<compile_context>
chip_gen: v7x
topology: tpu7x:2x2x1
jax: 0.10.0
libtpu: 0.0.40
codegen_flags: <defaults>
</compile_context>

<pallas_src>
import functools
import math

import jax
import jax.numpy as jnp
from jax.experimental import pallas as pl
from jax.experimental.pallas import tpu as pltpu


def _round_up(x, m):
    return ((x + m - 1) // m) * m


def _vmem_limit(block_bytes):
    """Scoped-VMEM limit derived from actual block bytes (+50% headroom)."""
    lo = 32 * 1024 * 1024            # >= v6e/v7x defaults, > v5e's 16 MiB default
    hi = 110 * 1024 * 1024
    return int(min(max(int(block_bytes * 1.5), lo), hi))


_INV_SQRT2 = 0.7071067811865476


def _erf_approx(x):
    """Abramowitz & Stegun 7.1.26 rational erf (max abs err ~1.5e-7).

    The rational term's divide is an EUP approximate reciprocal plus one Newton
    step (full f32 accuracy), keeping the VPU work to the polynomial itself.
    """
    p = 0.3275911
    a1, a2, a3, a4, a5 = (0.254829592, -0.284496736, 1.421413741,
                          -1.453152027, 1.061405429)
    sign = jnp.where(x < 0.0, -1.0, 1.0)
    ax = jnp.abs(x)
    d = 1.0 + p * ax
    t = pl.reciprocal(d, approx=True)          # EUP slot (otherwise idle-ish)
    t = t * (2.0 - d * t)                      # one Newton step -> ~f32 accurate
    poly = ((((a5 * t + a4) * t + a3) * t + a2) * t + a1) * t
    return sign * (1.0 - poly * jnp.exp(-ax * ax))


def _gelu_exact(x):
    return 0.5 * x * (1.0 + _erf_approx(x * _INV_SQRT2))


def _tok_reduce(v, op):
    """Reduce a (S, S, TC) value over the two token axes -> (1, 1, TC)."""
    return op(op(v, axis=0, keepdims=True), axis=1, keepdims=True)


# ----------------------------- Kernel 1: fc1 ---------------------------------
def _fc1_kernel(x_ref, w_ref, b_ref, o_ref):
    acc = jnp.dot(x_ref[...], w_ref[...], preferred_element_type=jnp.float32)
    o_ref[...] = (acc + b_ref[...].astype(jnp.float32)).astype(o_ref.dtype)


def _fc1(x2d, w, b, *, row_tile):
    """y = x2d @ w + b, row-tiled; W/bias VMEM-resident and single-buffered."""
    M, C = x2d.shape
    Co = w.shape[1]
    tm = min(_round_up(row_tile, 8), _round_up(M, 8))
    isz = x2d.dtype.itemsize
    wsz = w.dtype.itemsize
    need = 2 * tm * C * isz + C * Co * wsz + Co * wsz + 2 * tm * Co * isz
    return pl.pallas_call(
        _fc1_kernel,
        out_shape=jax.ShapeDtypeStruct((M, Co), x2d.dtype),
        grid=(pl.cdiv(M, tm),),
        in_specs=[
            pl.BlockSpec((tm, C), lambda i: (i, 0)),                      # act tile
            pl.BlockSpec((C, Co), lambda i: (0, 0),
                         pipeline_mode=pl.Buffered(1)),                   # W resident
            pl.BlockSpec((1, Co), lambda i: (0, 0),
                         pipeline_mode=pl.Buffered(1)),                   # bias resident
        ],
        out_specs=pl.BlockSpec((tm, Co), lambda i: (i, 0)),
        compiler_params=pltpu.CompilerParams(
            dimension_semantics=("parallel",),
            vmem_limit_bytes=_vmem_limit(need)),
    )(x2d, w, b.reshape(1, Co))


# --------------- Kernel 2: depthwise 3x3 conv + GELU + token median ----------
def _dwconv_gelu_median_kernel(x_ref, k_ref, b_ref, o_ref, med_ref, pad_ref):
    # x_ref  : (1, S, S, TC)   fc1 output slab for (batch, channel-tile)
    # k_ref  : (9, TC)         depthwise 3x3 taps for this channel tile
    # b_ref  : (1, TC)         conv bias
    # o_ref  : (1, S, S, TC)   GELU(dwconv(x))
    # med_ref: (1, 1, TC)      lower median over the S*S tokens (f32)
    # pad_ref: (S+2, S+2, TC)  VMEM scratch with zero 1-px halo
    s = o_ref.shape[1]
    tc = o_ref.shape[3]

    # Stage the tile with a zero halo entirely in VMEM (padding=1, no HBM pad).
    pad_ref[...] = jnp.zeros_like(pad_ref)
    pad_ref[1:s + 1, 1:s + 1, :] = x_ref[0].astype(jnp.float32)

    # 3x3 depthwise conv = 9 shifted MACs (VPU), f32 accumulation.
    acc = jnp.zeros((s, s, tc), jnp.float32)
    for dh in range(3):
        for dw in range(3):
            idx = 3 * dh + dw
            tap = k_ref[idx:idx + 1, :].astype(jnp.float32).reshape(1, 1, tc)
            acc = acc + pad_ref[dh:dh + s, dw:dw + s, :] * tap
    acc = acc + b_ref[...].astype(jnp.float32).reshape(1, 1, tc)
    act = _gelu_exact(acc)
    o_ref[0] = act.astype(o_ref.dtype)

    # Lower median (torch semantics) over the S*S tokens of every channel:
    # exact order statistic via 32-step binary search on order-preserving int32
    # keys.  No sort, and the activations never leave VMEM for this reduction.
    n = s * s
    kth = (n - 1) // 2 + 1                               # 1-indexed rank
    bits = pltpu.bitcast(act, jnp.int32)
    keys = jnp.where(bits >= 0, bits,
                     jnp.bitwise_xor(jnp.bitwise_not(bits), -(2 ** 31)))
    lo = _tok_reduce(keys, jnp.min)
    hi = _tok_reduce(keys, jnp.max)

    def body(_, carry):
        lo, hi = carry
        mid = (lo & hi) + ((lo ^ hi) >> 1)               # overflow-free floor-mid
        cnt = _tok_reduce((keys <= mid).astype(jnp.int32), jnp.sum)
        pred = cnt >= kth
        return jnp.where(pred, lo, mid + 1), jnp.where(pred, mid, hi)

    lo, hi = jax.lax.fori_loop(0, 32, body, (lo, hi))    # converges: lo == hi
    med = _tok_reduce(jnp.where(keys <= hi, act, -jnp.inf), jnp.max)
    med_ref[...] = med.astype(med_ref.dtype)


def _dwconv_gelu_median(himg, dw_kernel, dw_bias):
    B, S, _, Hf = himg.shape
    TC = 128 if Hf % 128 == 0 else Hf                    # channels on the lane axis
    nC = Hf // TC
    isz = himg.dtype.itemsize
    slab = S * S * TC
    need = (2 * slab * isz                 # input double buffer
            + 2 * slab * isz               # activation output double buffer
            + (S + 2) * (S + 2) * TC * 4   # halo scratch
            + 3 * slab * 4                 # in-kernel f32/int32 temporaries
            + 16 * TC * 4)                 # median out + taps + bias
    act_img, med = pl.pallas_call(
        _dwconv_gelu_median_kernel,
        out_shape=(jax.ShapeDtypeStruct((B, S, S, Hf), himg.dtype),
                   jax.ShapeDtypeStruct((B, 1, Hf), jnp.float32)),
        grid=(B, nC),
        in_specs=[
            pl.BlockSpec((1, S, S, TC), lambda b, c: (b, 0, 0, c)),
            pl.BlockSpec((9, TC), lambda b, c: (0, c)),
            pl.BlockSpec((1, TC), lambda b, c: (0, c)),
        ],
        out_specs=(pl.BlockSpec((1, S, S, TC), lambda b, c: (b, 0, 0, c)),
                   pl.BlockSpec((1, 1, TC), lambda b, c: (b, 0, c))),
        scratch_shapes=[pltpu.VMEM((S + 2, S + 2, TC), jnp.float32)],
        compiler_params=pltpu.CompilerParams(
            dimension_semantics=("parallel", "parallel"),
            vmem_limit_bytes=_vmem_limit(need)),
    )(himg, dw_kernel.reshape(9, Hf), dw_bias.reshape(1, Hf))
    return act_img, med


# --------------------- Kernel 3: residual (scaled median) + fc2 ---------------
def _residual_fc2_kernel(x_ref, med_ref, s_ref, w_ref, b_ref, o_ref):
    x = x_ref[0].astype(jnp.float32)                     # (tn, Hf)
    x = x + s_ref[...].astype(jnp.float32) * med_ref[0].astype(jnp.float32)
    acc = jnp.dot(x.astype(w_ref.dtype), w_ref[...],
                  preferred_element_type=jnp.float32)
    o_ref[0] = (acc + b_ref[...].astype(jnp.float32)).astype(o_ref.dtype)


def _residual_fc2(act, med, scaling, w2, b2, *, row_tile):
    B, N, Hf = act.shape
    O = w2.shape[1]
    Op = _round_up(O, 128)                               # lane-dense output stores
    if Op != O:
        w2 = jnp.pad(w2, ((0, 0), (0, Op - O)))
        b2 = jnp.pad(b2, ((0, Op - O),))
    tn = min(_round_up(row_tile, 8), _round_up(N, 8))
    isz = act.dtype.itemsize
    need = (2 * tn * Hf * isz + Hf * Op * w2.dtype.itemsize
            + 2 * tn * Op * isz + 4 * Hf * 4 + Op * 4 + tn * Hf * 4)
    out = pl.pallas_call(
        _residual_fc2_kernel,
        out_shape=jax.ShapeDtypeStruct((B, N, Op), act.dtype),
        grid=(B, pl.cdiv(N, tn)),
        in_specs=[
            pl.BlockSpec((1, tn, Hf), lambda b, j: (b, j, 0)),            # act tile
            pl.BlockSpec((1, 1, Hf), lambda b, j: (b, 0, 0)),             # batch median
            pl.BlockSpec((1, Hf), lambda b, j: (0, 0),
                         pipeline_mode=pl.Buffered(1)),                   # scaling
            pl.BlockSpec((Hf, Op), lambda b, j: (0, 0),
                         pipeline_mode=pl.Buffered(1)),                   # W2 resident
            pl.BlockSpec((1, Op), lambda b, j: (0, 0),
                         pipeline_mode=pl.Buffered(1)),                   # b2 resident
        ],
        out_specs=pl.BlockSpec((1, tn, Op), lambda b, j: (b, j, 0)),
        compiler_params=pltpu.CompilerParams(
            dimension_semantics=("parallel", "parallel"),
            vmem_limit_bytes=_vmem_limit(need)),
    )(act, med, scaling.reshape(1, Hf), w2, b2.reshape(1, Op))
    return out[..., :O] if Op != O else out


# --------------------------------- wrapper ------------------------------------
def mlp_forward(x, w1, b1, dw_kernel, dw_bias, scaling, w2, b2, *, row_tile=256):
    """Forward pass of the PyTorch `Mlp` module (inference, drop=0.0).

    x: (B, N, C) with N = H*W a perfect square.
    w1: (C, Hf), b1: (Hf,), dw_kernel: (3, 3, Hf), dw_bias: (Hf,),
    scaling: (Hf,), w2: (Hf, O), b2: (O,).
    """
    B, N, C = x.shape
    side = math.isqrt(N)
    assert side * side == N, "token count must be a perfect square (H == W)"
    Hf = w1.shape[1]

    # K1: fc1 over M = B*N tokens.
    h2d = _fc1(x.reshape(B * N, C), w1, b1, row_tile=row_tile)

    # K2: depthwise 3x3 conv + GELU + per-(batch, channel) token median,
    # channels-last (free leading-dim reshapes only).
    act_img, med = _dwconv_gelu_median(h2d.reshape(B, side, side, Hf),
                                       dw_kernel, dw_bias)
    act = act_img.reshape(B, N, Hf)

    # K3: (x + scaling * median) fused into fc2.
    return _residual_fc2(act, med, scaling, w2, b2, row_tile=row_tile)


# ------------------------------ pure-JAX reference ----------------------------
def _reference(x, w1, b1, dw_kernel, dw_bias, scaling, w2, b2):
    B, N, _ = x.shape
    side = math.isqrt(N)
    Hf = w1.shape[1]
    h = x @ w1 + b1
    himg = h.reshape(B, side, side, Hf)
    conv = jax.lax.conv_general_dilated(
        himg, dw_kernel.reshape(3, 3, 1, Hf),
        window_strides=(1, 1), padding=((1, 1), (1, 1)),
        dimension_numbers=("NHWC", "HWIO", "NHWC"),
        feature_group_count=Hf) + dw_bias
    a = jax.nn.gelu(conv.reshape(B, N, Hf), approximate=False)
    k = (N - 1) // 2
    med = jnp.sort(a, axis=1)[:, k:k + 1, :]             # torch lower median
    a = a + scaling * med
    return a @ w2 + b2


if __name__ == "__main__":
    B, side, C, Hf = 2, 16, 64, 256
    O = C                                   # out_features defaults to in_features
    N = side * side

    key = jax.random.PRNGKey(0)
    kx, kw1, kb1, kdw, kdb, ksc, kw2, kb2 = jax.random.split(key, 8)
    x = jax.random.normal(kx, (B, N, C), jnp.float32)
    w1 = jax.random.normal(kw1, (C, Hf), jnp.float32) * 0.1
    b1 = jax.random.normal(kb1, (Hf,), jnp.float32) * 0.1
    dw_kernel = jax.random.normal(kdw, (3, 3, Hf), jnp.float32) * 0.2
    dw_bias = jax.random.normal(kdb, (Hf,), jnp.float32) * 0.1
    scaling = 1.0 + 0.1 * jax.random.normal(ksc, (Hf,), jnp.float32)
    w2 = jax.random.normal(kw2, (Hf, O), jnp.float32) * 0.1
    b2 = jax.random.normal(kb2, (O,), jnp.float32) * 0.1

    # Small demo: a small row tile so every grid has several pipelined steps.
    fwd = jax.jit(functools.partial(mlp_forward, row_tile=128))
    out = jax.block_until_ready(fwd(x, w1, b1, dw_kernel, dw_bias, scaling, w2, b2))

    ref = _reference(x, w1, b1, dw_kernel, dw_bias, scaling, w2, b2)
    assert out.shape == (B, N, O)
    err = float(jnp.max(jnp.abs(out - ref)))
    assert jnp.allclose(out, ref, atol=1e-3, rtol=1e-3), f"max abs err {err}"
    print("KERNEL_OK")
</pallas_src>

<mosaic_0001>
module attributes {stable_mosaic.version = 11 : i64} {
  func.func @_fc1_kernel(%arg0: i32, %arg1: memref<128x64xf32, #tpu.memory_space<vmem>>, %arg2: memref<64x256xf32, #tpu.memory_space<vmem>>, %arg3: memref<1x256xf32, #tpu.memory_space<vmem>>, %arg4: memref<128x256xf32, #tpu.memory_space<vmem>>) attributes {dimension_semantics = [#tpu.dimension_semantics<parallel>], iteration_bounds = array<i64: 4>, scalar_prefetch = 0 : i64, scratch_operands = 0 : i64, tpu.core_type = #tpu.core_type<tc>, window_params = [{transform_indices = @transform_0, window_bounds = array<i64: 128, 64>}, {pipeline_mode = #tpu.pipeline_mode<synchronous>, transform_indices = @transform_1, window_bounds = array<i64: 64, 256>}, {pipeline_mode = #tpu.pipeline_mode<synchronous>, transform_indices = @transform_2, window_bounds = array<i64: 1, 256>}, {transform_indices = @transform_3, window_bounds = array<i64: 128, 256>}]} {
    %c0 = arith.constant 0 : index
    %c0_0 = arith.constant 0 : index
    %0 = vector.load %arg1[%c0, %c0_0] : memref<128x64xf32, #tpu.memory_space<vmem>>, vector<128x64xf32>
    %c0_1 = arith.constant 0 : index
    %c0_2 = arith.constant 0 : index
    %1 = vector.load %arg2[%c0_1, %c0_2] : memref<64x256xf32, #tpu.memory_space<vmem>>, vector<64x256xf32>
    %cst = arith.constant dense<0.000000e+00> : vector<128x256xf32>
    %2 = tpu.matmul %0, %1, %cst {dimension_numbers = #tpu.dot_dimension_numbers<[1], [0], [0], [1], [0, 0, 1, 1], [], []>} : vector<128x64xf32>, vector<64x256xf32>, vector<128x256xf32> -> vector<128x256xf32>
    %c0_3 = arith.constant 0 : index
    %c0_4 = arith.constant 0 : index
    %3 = vector.load %arg3[%c0_3, %c0_4] : memref<1x256xf32, #tpu.memory_space<vmem>>, vector<1x256xf32>
    %4 = vector.broadcast %3 : vector<1x256xf32> to vector<128x256xf32>
    %5 = arith.addf %2, %4 : vector<128x256xf32>
    %c0_5 = arith.constant 0 : index
    %c0_6 = arith.constant 0 : index
    %6 = vector.load %arg4[%c0_5, %c0_6] : memref<128x256xf32, #tpu.memory_space<vmem>>, vector<128x256xf32>
    tpu.vector_store %arg4[%c0_5, %c0_6], %5 {strides = array<i32>} : memref<128x256xf32, #tpu.memory_space<vmem>>, vector<128x256xf32>,
    return
  }
  func.func @transform_0(%arg0: i32) -> (i32, i32) {
    %c0_i32 = arith.constant 0 : i32
    %c0_i32_0 = arith.constant 0 : i32
    return %arg0, %c0_i32 : i32, i32
  }
  func.func @transform_1(%arg0: i32) -> (i32, i32) {
    %c0_i32 = arith.constant 0 : i32
    %c0_i32_0 = arith.constant 0 : i32
    %c0_i32_1 = arith.constant 0 : i32
    return %c0_i32, %c0_i32_0 : i32, i32
  }
  func.func @transform_2(%arg0: i32) -> (i32, i32) {
    %c0_i32 = arith.constant 0 : i32
    %c0_i32_0 = arith.constant 0 : i32
    %c0_i32_1 = arith.constant 0 : i32
    return %c0_i32, %c0_i32_0 : i32, i32
  }
  func.func @transform_3(%arg0: i32) -> (i32, i32) {
    %c0_i32 = arith.constant 0 : i32
    %c0_i32_0 = arith.constant 0 : i32
    return %arg0, %c0_i32 : i32, i32
  }
}

module attributes {stable_mosaic.version = 11 : i64} {
  func.func @_dwconv_gelu_median_kernel(%arg0: i32, %arg1: i32, %arg2: memref<1x16x16x128xf32, #tpu.memory_space<vmem>>, %arg3: memref<9x128xf32, #tpu.memory_space<vmem>>, %arg4: memref<1x128xf32, #tpu.memory_space<vmem>>, %arg5: memref<1x16x16x128xf32, #tpu.memory_space<vmem>>, %arg6: memref<1x1x128xf32, #tpu.memory_space<vmem>>, %arg7: memref<18x18x128xf32, #tpu.memory_space<vmem>>) attributes {dimension_semantics = [#tpu.dimension_semantics<parallel>, #tpu.dimension_semantics<parallel>], iteration_bounds = array<i64: 2, 2>, scalar_prefetch = 0 : i64, scratch_operands = 1 : i64, tpu.core_type = #tpu.core_type<tc>, window_params = [{transform_indices = @transform_0, window_bounds = array<i64: 1, 16, 16, 128>}, {transform_indices = @transform_1, window_bounds = array<i64: 9, 128>}, {transform_indices = @transform_2, window_bounds = array<i64: 1, 128>}, {transform_indices = @transform_3, window_bounds = array<i64: 1, 16, 16, 128>}, {transform_indices = @transform_4, window_bounds = array<i64: 1, 1, 128>}]} {
    %cst = arith.constant 0.000000e+00 : f32
    %0 = vector.broadcast %cst : f32 to vector<18x18x128xf32>
    %c0 = arith.constant 0 : index
    %c0_0 = arith.constant 0 : index
    %c0_1 = arith.constant 0 : index
    %1 = vector.load %arg7[%c0, %c0_0, %c0_1] : memref<18x18x128xf32, #tpu.memory_space<vmem>>, vector<18x18x128xf32>
    tpu.vector_store %arg7[%c0, %c0_0, %c0_1], %0 {strides = array<i32>} : memref<18x18x128xf32, #tpu.memory_space<vmem>>, vector<18x18x128xf32>,
    %c0_2 = arith.constant 0 : index
    %c0_3 = arith.constant 0 : index
    %c0_4 = arith.constant 0 : index
    %c0_5 = arith.constant 0 : index
    %2 = vector.load %arg2[%c0_2, %c0_3, %c0_4, %c0_5] : memref<1x16x16x128xf32, #tpu.memory_space<vmem>>, vector<1x16x16x128xf32>
    %3 = vector.shape_cast %2 : vector<1x16x16x128xf32> to vector<16x16x128xf32>
    %c1 = arith.constant 1 : index
    %c1_6 = arith.constant 1 : index
    %c0_7 = arith.constant 0 : index
    %4 = vector.load %arg7[%c1, %c1_6, %c0_7] : memref<18x18x128xf32, #tpu.memory_space<vmem>>, vector<16x16x128xf32>
    tpu.vector_store %arg7[%c1, %c1_6, %c0_7], %3 {strides = array<i32>} : memref<18x18x128xf32, #tpu.memory_space<vmem>>, vector<16x16x128xf32>,
    %cst_8 = arith.constant 0.000000e+00 : f32
    %5 = vector.broadcast %cst_8 : f32 to vector<16x16x128xf32>
    %c0_9 = arith.constant 0 : index
    %c0_10 = arith.constant 0 : index
    %6 = vector.load %arg3[%c0_9, %c0_10] : memref<9x128xf32, #tpu.memory_space<vmem>>, vector<1x128xf32>
    %7 = vector.shape_cast %6 : vector<1x128xf32> to vector<1x1x128xf32>
    %c0_11 = arith.constant 0 : index
    %c0_12 = arith.constant 0 : index
    %c0_13 = arith.constant 0 : index
    %8 = vector.load %arg7[%c0_11, %c0_12, %c0_13] : memref<18x18x128xf32, #tpu.memory_space<vmem>>, vector<16x16x128xf32>
    %9 = vector.broadcast %7 : vector<1x1x128xf32> to vector<16x16x128xf32>
    %10 = arith.mulf %8, %9 : vector<16x16x128xf32>
    %11 = arith.addf %5, %10 : vector<16x16x128xf32>
    %c1_14 = arith.constant 1 : index
    %c0_15 = arith.constant 0 : index
    %12 = vector.load %arg3[%c1_14, %c0_15] : memref<9x128xf32, #tpu.memory_space<vmem>>, vector<1x128xf32>
    %13 = vector.shape_cast %12 : vector<1x128xf32> to vector<1x1x128xf32>
    %c0_16 = arith.constant 0 : index
    %c1_17 = arith.constant 1 : index
    %c0_18 = arith.constant 0 : index
    %14 = vector.load %arg7[%c0_16, %c1_17, %c0_18] : memref<18x18x128xf32, #tpu.memory_space<vmem>>, vector<16x16x128xf32>
    %15 = vector.broadcast %13 : vector<1x1x128xf32> to vector<16x16x128xf32>
    %16 = arith.mulf %14, %15 : vector<16x16x128xf32>
    %17 = arith.addf %11, %16 : vector<16x16x128xf32>
    %c2 = arith.constant 2 : index
    %c0_19 = arith.constant 0 : index
    %18 = vector.load %arg3[%c2, %c0_19] : memref<9x128xf32, #tpu.memory_space<vmem>>, vector<1x128xf32>
    %19 = vector.shape_cast %18 : vector<1x128xf32> to vector<1x1x128xf32>
    %c0_20 = arith.constant 0 : index
    %c2_21 = arith.constant 2 : index
    %c0_22 = arith.constant 0 : index
    %20 = vector.load %arg7[%c0_20, %c2_21, %c0_22] : memref<18x18x128xf32, #tpu.memory_space<vmem>>, vector<16x16x128xf32>
    %21 = vector.broadcast %19 : vector<1x1x128xf32> to vector<16x16x128xf32>
    %22 = arith.mulf %20, %21 : vector<16x16x128xf32>
    %23 = arith.addf %17, %22 : vector<16x16x128xf32>
    %c3 = arith.constant 3 : index
    %c0_23 = arith.constant 0 : index
    %24 = vector.load %arg3[%c3, %c0_23] : memref<9x128xf32, #tpu.memory_space<vmem>>, vector<1x128xf32>
    %25 = vector.shape_cast %24 : vector<1x128xf32> to vector<1x1x128xf32>
    %c1_24 = arith.constant 1 : index
    %c0_25 = arith.constant 0 : index
    %c0_26 = arith.constant 0 : index
    %26 = vector.load %arg7[%c1_24, %c0_25, %c0_26] : memref<18x18x128xf32, #tpu.memory_space<vmem>>, vector<16x16x128xf32>
    %27 = vector.broadcast %25 : vector<1x1x128xf32> to vector<16x16x128xf32>
    %28 = arith.mulf %26, %27 : vector<16x16x128xf32>
    %29 = arith.addf %23, %28 : vector<16x16x128xf32>
    %c4 = arith.constant 4 : index
    %c0_27 = arith.constant 0 : index
    %30 = vector.load %arg3[%c4, %c0_27] : memref<9x128xf32, #tpu.memory_space<vmem>>, vector<1x128xf32>
    %31 = vector.shape_cast %30 : vector<1x128xf32> to vector<1x1x128xf32>
    %c1_28 = arith.constant 1 : index
    %c1_29 = arith.constant 1 : index
    %c0_30 = arith.constant 0 : index
    %32 = vector.load %arg7[%c1_28, %c1_29, %c0_30] : memref<18x18x128xf32, #tpu.memory_space<vmem>>, vector<16x16x128xf32>
    %33 = vector.broadcast %31 : vector<1x1x128xf32> to vector<16x16x128xf32>
    %34 = arith.mulf %32, %33 : vector<16x16x128xf32>
    %35 = arith.addf %29, %34 : vector<16x16x128xf32>
    %c5 = arith.constant 5 : index
    %c0_31 = arith.constant 0 : index
    %36 = vector.load %arg3[%c5, %c0_31] : memref<9x128xf32, #tpu.memory_space<vmem>>, vector<1x128xf32>
    %37 = vector.shape_cast %36 : vector<1x128xf32> to vector<1x1x128xf32>
    %c1_32 = arith.constant 1 : index
    %c2_33 = arith.constant 2 : index
    %c0_34 = arith.constant 0 : index
    %38 = vector.load %arg7[%c1_32, %c2_33, %c0_34] : memref<18x18x128xf32, #tpu.memory_space<vmem>>, vector<16x16x128xf32>
    %39 = vector.broadcast %37 : vector<1x1x128xf32> to vector<16x16x128xf32>
    %40 = arith.mulf %38, %39 : vector<16x16x128xf32>
    %41 = arith.addf %35, %40 : vector<16x16x128xf32>
    %c6 = arith.constant 6 : index
    %c0_35 = arith.constant 0 : index
    %42 = vector.load %arg3[%c6, %c0_35] : memref<9x128xf32, #tpu.memory_space<vmem>>, vector<1x128xf32>
    %43 = vector.shape_cast %42 : vector<1x128xf32> to vector<1x1x128xf32>
    %c2_36 = arith.constant 2 : index
    %c0_37 = arith.constant 0 : index
    %c0_38 = arith.constant 0 : index
    %44 = vector.load %arg7[%c2_36, %c0_37, %c0_38] : memref<18x18x128xf32, #tpu.memory_space<vmem>>, vector<16x16x128xf32>
    %45 = vector.broadcast %43 : vector<1x1x128xf32> to vector<16x16x128xf32>
    %46 = arith.mulf %44, %45 : vector<16x16x128xf32>
    %47 = arith.addf %41, %46 : vector<16x16x128xf32>
    %c7 = arith.constant 7 : index
    %c0_39 = arith.constant 0 : index
    %48 = vector.load %arg3[%c7, %c0_39] : memref<9x128xf32, #tpu.memory_space<vmem>>, vector<1x128xf32>
    %49 = vector.shape_cast %48 : vector<1x128xf32> to vector<1x1x128xf32>
    %c2_40 = arith.constant 2 : index
    %c1_41 = arith.constant 1 : index
    %c0_42 = arith.constant 0 : index
    %50 = vector.load %arg7[%c2_40, %c1_41, %c0_42] : memref<18x18x128xf32, #tpu.memory_space<vmem>>, vector<16x16x128xf32>
    %51 = vector.broadcast %49 : vector<1x1x128xf32> to vector<16x16x128xf32>
    %52 = arith.mulf %50, %51 : vector<16x16x128xf32>
    %53 = arith.addf %47, %52 : vector<16x16x128xf32>
    %c8 = arith.constant 8 : index
    %c0_43 = arith.constant 0 : index
    %54 = vector.load %arg3[%c8, %c0_43] : memref<9x128xf32, #tpu.memory_space<vmem>>, vector<1x128xf32>
    %55 = vector.shape_cast %54 : vector<1x128xf32> to vector<1x1x128xf32>
    %c2_44 = arith.constant 2 : index
    %c2_45 = arith.constant 2 : index
    %c0_46 = arith.constant 0 : index
    %56 = vector.load %arg7[%c2_44, %c2_45, %c0_46] : memref<18x18x128xf32, #tpu.memory_space<vmem>>, vector<16x16x128xf32>
    %57 = vector.broadcast %55 : vector<1x1x128xf32> to vector<16x16x128xf32>
    %58 = arith.mulf %56, %57 : vector<16x16x128xf32>
    %59 = arith.addf %53, %58 : vector<16x16x128xf32>
    %c0_47 = arith.constant 0 : index
    %c0_48 = arith.constant 0 : index
    %60 = vector.load %arg4[%c0_47, %c0_48] : memref<1x128xf32, #tpu.memory_space<vmem>>, vector<1x128xf32>
    %61 = vector.shape_cast %60 : vector<1x128xf32> to vector<1x1x128xf32>
    %62 = vector.broadcast %61 : vector<1x1x128xf32> to vector<16x16x128xf32>
    %63 = arith.addf %59, %62 : vector<16x16x128xf32>
    %cst_49 = arith.constant 5.000000e-01 : f32
    %64 = vector.broadcast %cst_49 : f32 to vector<16x16x128xf32>
    %65 = arith.mulf %64, %63 : vector<16x16x128xf32>
    %cst_50 = arith.constant 0.707106769 : f32
    %66 = vector.broadcast %cst_50 : f32 to vector<16x16x128xf32>
    %67 = arith.mulf %63, %66 : vector<16x16x128xf32>
    %cst_51 = arith.constant 0.000000e+00 : f32
    %68 = vector.broadcast %cst_51 : f32 to vector<16x16x128xf32>
    %69 = arith.cmpf olt, %67, %68 : vector<16x16x128xf32>
    %cst_52 = arith.constant -1.000000e+00 : f32
    %cst_53 = arith.constant 1.000000e+00 : f32
    %70 = vector.broadcast %cst_52 : f32 to vector<16x16x128xf32>
    %71 = vector.broadcast %cst_53 : f32 to vector<16x16x128xf32>
    %72 = arith.select %69, %70, %71 : vector<16x16x128xi1>, vector<16x16x128xf32>
    %73 = math.absf %67 : vector<16x16x128xf32>
    %cst_54 = arith.constant 0.327591091 : f32
    %74 = vector.broadcast %cst_54 : f32 to vector<16x16x128xf32>
    %75 = arith.mulf %74, %73 : vector<16x16x128xf32>
    %cst_55 = arith.constant 1.000000e+00 : f32
    %76 = vector.broadcast %cst_55 : f32 to vector<16x16x128xf32>
    %77 = arith.addf %76, %75 : vector<16x16x128xf32>
    %78 = tpu.reciprocal %77 {approx = true} : vector<16x16x128xf32> -> vector<16x16x128xf32>
    %79 = arith.mulf %77, %78 : vector<16x16x128xf32>
    %cst_56 = arith.constant 2.000000e+00 : f32
    %80 = vector.broadcast %cst_56 : f32 to vector<16x16x128xf32>
    %81 = arith.subf %80, %79 : vector<16x16x128xf32>
    %82 = arith.mulf %78, %81 : vector<16x16x128xf32>
    %cst_57 = arith.constant 1.06140542 : f32
    %83 = vector.broadcast %cst_57 : f32 to vector<16x16x128xf32>
    %84 = arith.mulf %83, %82 : vector<16x16x128xf32>
    %cst_58 = arith.constant -1.45315206 : f32
    %85 = vector.broadcast %cst_58 : f32 to vector<16x16x128xf32>
    %86 = arith.addf %84, %85 : vector<16x16x128xf32>
    %87 = arith.mulf %86, %82 : vector<16x16x128xf32>
    %cst_59 = arith.constant 1.42141378 : f32
    %88 = vector.broadcast %cst_59 : f32 to vector<16x16x128xf32>
    %89 = arith.addf %87, %88 : vector<16x16x128xf32>
    %90 = arith.mulf %89, %82 : vector<16x16x128xf32>
    %cst_60 = arith.constant -0.284496725 : f32
    %91 = vector.broadcast %cst_60 : f32 to vector<16x16x128xf32>
    %92 = arith.addf %90, %91 : vector<16x16x128xf32>
    %93 = arith.mulf %92, %82 : vector<16x16x128xf32>
    %cst_61 = arith.constant 0.254829586 : f32
    %94 = vector.broadcast %cst_61 : f32 to vector<16x16x128xf32>
    %95 = arith.addf %93, %94 : vector<16x16x128xf32>
    %96 = arith.mulf %95, %82 : vector<16x16x128xf32>
    %cst_62 = arith.constant 0.000000e+00 : f32
    %97 = vector.broadcast %cst_62 : f32 to vector<16x16x128xf32>
    %98 = arith.subf %97, %73 : vector<16x16x128xf32>
    %99 = arith.mulf %98, %73 : vector<16x16x128xf32>
    %100 = math.exp %99 : vector<16x16x128xf32>
    %101 = arith.mulf %96, %100 : vector<16x16x128xf32>
    %cst_63 = arith.constant 1.000000e+00 : f32
    %102 = vector.broadcast %cst_63 : f32 to vector<16x16x128xf32>
    %103 = arith.subf %102, %101 : vector<16x16x128xf32>
    %104 = arith.mulf %72, %103 : vector<16x16x128xf32>
    %cst_64 = arith.constant 1.000000e+00 : f32
    %105 = vector.broadcast %cst_64 : f32 to vector<16x16x128xf32>
    %106 = arith.addf %105, %104 : vector<16x16x128xf32>
    %107 = arith.mulf %65, %106 : vector<16x16x128xf32>
    %c0_65 = arith.constant 0 : index
    %c0_66 = arith.constant 0 : index
    %c0_67 = arith.constant 0 : index
    %c0_68 = arith.constant 0 : index
    %108 = vector.load %arg5[%c0_65, %c0_66, %c0_67, %c0_68] : memref<1x16x16x128xf32, #tpu.memory_space<vmem>>, vector<1x16x16x128xf32>
    %109 = vector.shape_cast %108 : vector<1x16x16x128xf32> to vector<16x16x128xf32>
    %110 = vector.shape_cast %107 : vector<16x16x128xf32> to vector<1x16x16x128xf32>
    tpu.vector_store %arg5[%c0_65, %c0_66, %c0_67, %c0_68], %110 {strides = array<i32>} : memref<1x16x16x128xf32, #tpu.memory_space<vmem>>, vector<1x16x16x128xf32>,
    %111 = tpu.bitcast %107 : vector<16x16x128xf32> -> vector<16x16x128xi32>
    %c0_i32 = arith.constant 0 : i32
    %112 = vector.broadcast %c0_i32 : i32 to vector<16x16x128xi32>
    %113 = arith.cmpi sge, %111, %112 : vector<16x16x128xi32>
    %cst_69 = arith.constant dense<-1> : vector<16x16x128xi32>
    %114 = arith.xori %111, %cst_69 : vector<16x16x128xi32>
    %c-2147483648_i32 = arith.constant -2147483648 : i32
    %115 = vector.broadcast %c-2147483648_i32 : i32 to vector<16x16x128xi32>
    %116 = arith.xori %114, %115 : vector<16x16x128xi32>
    %117 = arith.select %113, %111, %116 : vector<16x16x128xi1>, vector<16x16x128xi32>
    %cst_70 = arith.constant dense<2147483647> : vector<16x128xi32>
    %118 = vector.multi_reduction <minsi>, %117, %cst_70 [0] : vector<16x16x128xi32> to vector<16x128xi32>
    %119 = vector.shape_cast %118 : vector<16x128xi32> to vector<1x16x128xi32>
    %cst_71 = arith.constant dense<2147483647> : vector<1x128xi32>
    %120 = vector.multi_reduction <minsi>, %119, %cst_71 [1] : vector<1x16x128xi32> to vector<1x128xi32>
    %121 = vector.shape_cast %120 : vector<1x128xi32> to vector<1x1x128xi32>
    %cst_72 = arith.constant dense<-2147483648> : vector<16x128xi32>
    %122 = vector.multi_reduction <maxsi>, %117, %cst_72 [0] : vector<16x16x128xi32> to vector<16x128xi32>
    %123 = vector.shape_cast %122 : vector<16x128xi32> to vector<1x16x128xi32>
    %cst_73 = arith.constant dense<-2147483648> : vector<1x128xi32>
    %124 = vector.multi_reduction <maxsi>, %123, %cst_73 [1] : vector<1x16x128xi32> to vector<1x128xi32>
    %125 = vector.shape_cast %124 : vector<1x128xi32> to vector<1x1x128xi32>
    %c0_i32_74 = arith.constant 0 : i32
    %c32_i32 = arith.constant 32 : i32
    %126 = arith.addi %c0_i32_74, %c32_i32 : i32
    %c1_i32 = arith.constant 1 : i32
    %127:2 = scf.for %arg8 = %c0_i32_74 to %126 step %c1_i32 iter_args(%arg9 = %121, %arg10 = %125) -> (vector<1x1x128xi32>, vector<1x1x128xi32>)  : i32 {
      %137 = arith.andi %arg9, %arg10 : vector<1x1x128xi32>
      %138 = arith.xori %arg9, %arg10 : vector<1x1x128xi32>
      %c1_i32_81 = arith.constant 1 : i32
      %139 = vector.broadcast %c1_i32_81 : i32 to vector<1x1x128xi32>
      %140 = arith.shrsi %138, %139 : vector<1x1x128xi32>
      %141 = arith.addi %137, %140 : vector<1x1x128xi32>
      %142 = vector.broadcast %141 : vector<1x1x128xi32> to vector<16x16x128xi32>
      %143 = arith.cmpi sle, %117, %142 : vector<16x16x128xi32>
      %144 = arith.extui %143 : vector<16x16x128xi1> to vector<16x16x128xi32>
      %cst_82 = arith.constant dense<0> : vector<16x128xi32>
      %145 = vector.multi_reduction <add>, %144, %cst_82 [0] : vector<16x16x128xi32> to vector<16x128xi32>
      %146 = vector.shape_cast %145 : vector<16x128xi32> to vector<1x16x128xi32>
      %cst_83 = arith.constant dense<0> : vector<1x128xi32>
      %147 = vector.multi_reduction <add>, %146, %cst_83 [1] : vector<1x16x128xi32> to vector<1x128xi32>
      %148 = vector.shape_cast %147 : vector<1x128xi32> to vector<1x1x128xi32>
      %c128_i32 = arith.constant 128 : i32
      %149 = vector.broadcast %c128_i32 : i32 to vector<1x1x128xi32>
      %150 = arith.cmpi sge, %148, %149 : vector<1x1x128xi32>
      %c1_i32_84 = arith.constant 1 : i32
      %151 = vector.broadcast %c1_i32_84 : i32 to vector<1x1x128xi32>
      %152 = arith.addi %141, %151 : vector<1x1x128xi32>
      %153 = arith.select %150, %arg9, %152 : vector<1x1x128xi1>, vector<1x1x128xi32>
      %154 = arith.select %150, %141, %arg10 : vector<1x1x128xi1>, vector<1x1x128xi32>
      scf.yield %153, %154 : vector<1x1x128xi32>, vector<1x1x128xi32>
    }
    %128 = vector.broadcast %127#1 : vector<1x1x128xi32> to vector<16x16x128xi32>
    %129 = arith.cmpi sle, %117, %128 : vector<16x16x128xi32>
    %cst_75 = arith.constant 0xFF800000 : f32
    %130 = vector.broadcast %cst_75 : f32 to vector<16x16x128xf32>
    %131 = arith.select %129, %107, %130 : vector<16x16x128xi1>, vector<16x16x128xf32>
    %cst_76 = arith.constant dense<0xFF800000> : vector<16x128xf32>
    %132 = vector.multi_reduction <maximumf>, %131, %cst_76 [0] : vector<16x16x128xf32> to vector<16x128xf32>
    %133 = vector.shape_cast %132 : vector<16x128xf32> to vector<1x16x128xf32>
    %cst_77 = arith.constant dense<0xFF800000> : vector<1x128xf32>
    %134 = vector.multi_reduction <maximumf>, %133, %cst_77 [1] : vector<1x16x128xf32> to vector<1x128xf32>
    %135 = vector.shape_cast %134 : vector<1x128xf32> to vector<1x1x128xf32>
    %c0_78 = arith.constant 0 : index
    %c0_79 = arith.constant 0 : index
    %c0_80 = arith.constant 0 : index
    %136 = vector.load %arg6[%c0_78, %c0_79, %c0_80] : memref<1x1x128xf32, #tpu.memory_space<vmem>>, vector<1x1x128xf32>
    tpu.vector_store %arg6[%c0_78, %c0_79, %c0_80], %135 {strides = array<i32>} : memref<1x1x128xf32, #tpu.memory_space<vmem>>, vector<1x1x128xf32>,
    return
  }
  func.func @transform_0(%arg0: i32, %arg1: i32) -> (i32, i32, i32, i32) {
    %c0_i32 = arith.constant 0 : i32
    %c0_i32_0 = arith.constant 0 : i32
    %c0_i32_1 = arith.constant 0 : i32
    return %arg0, %c0_i32, %c0_i32_0, %arg1 : i32, i32, i32, i32
  }
  func.func @transform_1(%arg0: i32, %arg1: i32) -> (i32, i32) {
    %c0_i32 = arith.constant 0 : i32
    %c0_i32_0 = arith.constant 0 : i32
    return %c0_i32, %arg1 : i32, i32
  }
  func.func @transform_2(%arg0: i32, %arg1: i32) -> (i32, i32) {
    %c0_i32 = arith.constant 0 : i32
    %c0_i32_0 = arith.constant 0 : i32
    return %c0_i32, %arg1 : i32, i32
  }
  func.func @transform_3(%arg0: i32, %arg1: i32) -> (i32, i32, i32, i32) {
    %c0_i32 = arith.constant 0 : i32
    %c0_i32_0 = arith.constant 0 : i32
    %c0_i32_1 = arith.constant 0 : i32
    return %arg0, %c0_i32, %c0_i32_0, %arg1 : i32, i32, i32, i32
  }
  func.func @transform_4(%arg0: i32, %arg1: i32) -> (i32, i32, i32) {
    %c0_i32 = arith.constant 0 : i32
    %c0_i32_0 = arith.constant 0 : i32
    return %arg0, %c0_i32, %arg1 : i32, i32, i32
  }
}

module attributes {stable_mosaic.version = 11 : i64} {
  func.func @_residual_fc2_kernel(%arg0: i32, %arg1: i32, %arg2: memref<1x128x256xf32, #tpu.memory_space<vmem>>, %arg3: memref<1x1x256xf32, #tpu.memory_space<vmem>>, %arg4: memref<1x256xf32, #tpu.memory_space<vmem>>, %arg5: memref<256x128xf32, #tpu.memory_space<vmem>>, %arg6: memref<1x128xf32, #tpu.memory_space<vmem>>, %arg7: memref<1x128x128xf32, #tpu.memory_space<vmem>>) attributes {dimension_semantics = [#tpu.dimension_semantics<parallel>, #tpu.dimension_semantics<parallel>], iteration_bounds = array<i64: 2, 2>, scalar_prefetch = 0 : i64, scratch_operands = 0 : i64, tpu.core_type = #tpu.core_type<tc>, window_params = [{transform_indices = @transform_0, window_bounds = array<i64: 1, 128, 256>}, {transform_indices = @transform_1, window_bounds = array<i64: 1, 1, 256>}, {pipeline_mode = #tpu.pipeline_mode<synchronous>, transform_indices = @transform_2, window_bounds = array<i64: 1, 256>}, {pipeline_mode = #tpu.pipeline_mode<synchronous>, transform_indices = @transform_3, window_bounds = array<i64: 256, 128>}, {pipeline_mode = #tpu.pipeline_mode<synchronous>, transform_indices = @transform_4, window_bounds = array<i64: 1, 128>}, {transform_indices = @transform_5, window_bounds = array<i64: 1, 128, 128>}]} {
    %c0 = arith.constant 0 : index
    %c0_0 = arith.constant 0 : index
    %c0_1 = arith.constant 0 : index
    %0 = vector.load %arg2[%c0, %c0_0, %c0_1] : memref<1x128x256xf32, #tpu.memory_space<vmem>>, vector<1x128x256xf32>
    %1 = vector.shape_cast %0 : vector<1x128x256xf32> to vector<128x256xf32>
    %c0_2 = arith.constant 0 : index
    %c0_3 = arith.constant 0 : index
    %2 = vector.load %arg4[%c0_2, %c0_3] : memref<1x256xf32, #tpu.memory_space<vmem>>, vector<1x256xf32>
    %c0_4 = arith.constant 0 : index
    %c0_5 = arith.constant 0 : index
    %c0_6 = arith.constant 0 : index
    %3 = vector.load %arg3[%c0_4, %c0_5, %c0_6] : memref<1x1x256xf32, #tpu.memory_space<vmem>>, vector<1x1x256xf32>
    %4 = vector.shape_cast %3 : vector<1x1x256xf32> to vector<1x256xf32>
    %5 = arith.mulf %2, %4 : vector<1x256xf32>
    %6 = vector.broadcast %5 : vector<1x256xf32> to vector<128x256xf32>
    %7 = arith.addf %1, %6 : vector<128x256xf32>
    %c0_7 = arith.constant 0 : index
    %c0_8 = arith.constant 0 : index
    %8 = vector.load %arg5[%c0_7, %c0_8] : memref<256x128xf32, #tpu.memory_space<vmem>>, vector<256x128xf32>
    %cst = arith.constant dense<0.000000e+00> : vector<128x128xf32>
    %9 = tpu.matmul %7, %8, %cst {dimension_numbers = #tpu.dot_dimension_numbers<[1], [0], [0], [1], [0, 0, 1, 1], [], []>} : vector<128x256xf32>, vector<256x128xf32>, vector<128x128xf32> -> vector<128x128xf32>
    %c0_9 = arith.constant 0 : index
    %c0_10 = arith.constant 0 : index
    %10 = vector.load %arg6[%c0_9, %c0_10] : memref<1x128xf32, #tpu.memory_space<vmem>>, vector<1x128xf32>
    %11 = vector.broadcast %10 : vector<1x128xf32> to vector<128x128xf32>
    %12 = arith.addf %9, %11 : vector<128x128xf32>
    %c0_11 = arith.constant 0 : index
    %c0_12 = arith.constant 0 : index
    %c0_13 = arith.constant 0 : index
    %13 = vector.load %arg7[%c0_11, %c0_12, %c0_13] : memref<1x128x128xf32, #tpu.memory_space<vmem>>, vector<1x128x128xf32>
    %14 = vector.shape_cast %13 : vector<1x128x128xf32> to vector<128x128xf32>
    %15 = vector.shape_cast %12 : vector<128x128xf32> to vector<1x128x128xf32>
    tpu.vector_store %arg7[%c0_11, %c0_12, %c0_13], %15 {strides = array<i32>} : memref<1x128x128xf32, #tpu.memory_space<vmem>>, vector<1x128x128xf32>,
    return
  }
  func.func @transform_0(%arg0: i32, %arg1: i32) -> (i32, i32, i32) {
    %c0_i32 = arith.constant 0 : i32
    %c0_i32_0 = arith.constant 0 : i32
    return %arg0, %arg1, %c0_i32 : i32, i32, i32
  }
  func.func @transform_1(%arg0: i32, %arg1: i32) -> (i32, i32, i32) {
    %c0_i32 = arith.constant 0 : i32
    %c0_i32_0 = arith.constant 0 : i32
    %c0_i32_1 = arith.constant 0 : i32
    return %arg0, %c0_i32, %c0_i32_0 : i32, i32, i32
  }
  func.func @transform_2(%arg0: i32, %arg1: i32) -> (i32, i32) {
    %c0_i32 = arith.constant 0 : i32
    %c0_i32_0 = arith.constant 0 : i32
    %c0_i32_1 = arith.constant 0 : i32
    return %c0_i32, %c0_i32_0 : i32, i32
  }
  func.func @transform_3(%arg0: i32, %arg1: i32) -> (i32, i32) {
    %c0_i32 = arith.constant 0 : i32
    %c0_i32_0 = arith.constant 0 : i32
    %c0_i32_1 = arith.constant 0 : i32
    return %c0_i32, %c0_i32_0 : i32, i32
  }
  func.func @transform_4(%arg0: i32, %arg1: i32) -> (i32, i32) {
    %c0_i32 = arith.constant 0 : i32
    %c0_i32_0 = arith.constant 0 : i32
    %c0_i32_1 = arith.constant 0 : i32
    return %c0_i32, %c0_i32_0 : i32, i32
  }
  func.func @transform_5(%arg0: i32, %arg1: i32) -> (i32, i32, i32) {
    %c0_i32 = arith.constant 0 : i32
    %c0_i32_0 = arith.constant 0 : i32
    return %arg0, %arg1, %c0_i32 : i32, i32, i32
  }
}

</mosaic_0001>

<llo_original>
// kernel: mlp_forward.3
$region0: #{mlp_forward.3}
  #allocation0 [shape = 'u32[]', space=smem, size = 0x4, offset = 0x4, fixed_abs, tag = 'smem constant byte address 0x4 - core index']
  #allocation1 [shape = 'u32[144,128]{1,0:T(1,128)}', space=vmem, size = 0x12000, scoped, tag = 'internal scratch']
  %s0 = inlined_call_operand.vmem [shape: f32[512,64], index: 0, kind: input, shape index: {}]
  %s1 = inlined_call_operand.vmem [shape: f32[64,256], index: 1, kind: input, shape index: {}]
  %s2 = inlined_call_operand.vmem [shape: f32[1,256], index: 2, kind: input, shape index: {}]
  %s3 = inlined_call_operand.vmem [shape: f32[512,256], index: 3, kind: output, shape index: {}]
  %s4 = sld [smem:[#allocation0]]
  $region45: #{mlp_forward.3} parent=0
    _
  %s6 = ssub.s32 1, %s4
  %s7 = scalar_select 0, %s6, %s4
  loop: start=0, step=1, limit=6
  $region2: #{mlp_forward.3} parent=0 // loop_pre_header
    _
  $region3: #{mlp_forward.3} parent=0 // loop_header
    %s9 = sphi 0, %s13
    %p10 = scmp.ge.s32.totalorder %s9, 6
    %s19 = sphi 0, %s21
    %s22 = sphi 0, %s19
    %s23 = sphi 0, %s22
    %s39 = sphi 0, %s23
    %s43 = sphi 0, %s43
    %s45 = sphi 0, %s43
    %s46 = sphi 0, %s45
    %s60 = sphi 0, %s46
    %s64 = sphi 0, %s64
    %s66 = sphi 0, %s64
    %s67 = sphi 0, %s66
    %s81 = sphi 0, %s67
    %s87 = sphi 0, %s89
    %s90 = sphi 0, %s87
    %s91 = sphi 0, %s90
    %s107 = sphi 0, %s91
  $region4: #{mlp_forward.3} parent=0 // loop_header_branch
    %12 = sbr.rel (%p10) target = $region8
  $region5: #{mlp_forward.3} parent=0 // loop_body
    %s14 = ssub.s32 %s9, 1
    %s15 = ssub.s32 %s9, 2
    %s16 = sadd.s32 %s9, 1
    %s17 = ssub.s32 %s9, %s16
    %p18 = scmp.eq.s32.totalorder %s17, 0
    %s20 = sadd.s32 %s19, 1
    %s21 = scalar_select %p18, %s19, %s20
    %p24 = pneg %p18
    %p25 = scmp.eq.s32.totalorder %s9, 3
    %p26 = por %p24, %p25
    %p27 = scmp.ne.s32.totalorder %s19, %s22
    %p28 = scmp.eq.s32.totalorder %s9, 0
    %p29 = por %p27, %p28
    %p30 = scmp.ne.s32.totalorder %s19, %s22
    %p31 = scmp.eq.s32.totalorder %s14, 3
    %p32 = por %p30, %p31
    %p33 = scmp.ne.s32.totalorder %s22, %s23
    %p34 = scmp.eq.s32.totalorder %s14, 0
    %p35 = por %p33, %p34
    %p36 = scmp.ne.s32.totalorder %s22, %s23
    %p37 = scmp.eq.s32.totalorder %s15, 3
    %p38 = por %p36, %p37
    %p40 = scmp.ne.s32.totalorder %s23, %s39
    %p41 = scmp.eq.s32.totalorder %s15, 0
    %p42 = por %p40, %p41
    %s44 = sadd.s32 %s43, 1
    %p47 = scmp.eq.s32.totalorder %s9, 3
    %p48 = scmp.ne.s32.totalorder %s43, %s45
    %p49 = scmp.eq.s32.totalorder %s9, 0
    %p50 = por %p48, %p49
    %p51 = scmp.ne.s32.totalorder %s43, %s45
    %p52 = scmp.eq.s32.totalorder %s14, 3
    %p53 = por %p51, %p52
    %p54 = scmp.ne.s32.totalorder %s45, %s46
    %p55 = scmp.eq.s32.totalorder %s14, 0
    %p56 = por %p54, %p55
    %p57 = scmp.ne.s32.totalorder %s45, %s46
    %p58 = scmp.eq.s32.totalorder %s15, 3
    %p59 = por %p57, %p58
    %p61 = scmp.ne.s32.totalorder %s46, %s60
    %p62 = scmp.eq.s32.totalorder %s15, 0
    %p63 = por %p61, %p62
    %s65 = sadd.s32 %s64, 1
    %p68 = scmp.eq.s32.totalorder %s9, 3
    %p69 = scmp.ne.s32.totalorder %s64, %s66
    %p70 = scmp.eq.s32.totalorder %s9, 0
    %p71 = por %p69, %p70
    %p72 = scmp.ne.s32.totalorder %s64, %s66
    %p73 = scmp.eq.s32.totalorder %s14, 3
    %p74 = por %p72, %p73
    %p75 = scmp.ne.s32.totalorder %s66, %s67
    %p76 = scmp.eq.s32.totalorder %s14, 0
    %p77 = por %p75, %p76
    %p78 = scmp.ne.s32.totalorder %s66, %s67
    %p79 = scmp.eq.s32.totalorder %s15, 3
    %p80 = por %p78, %p79
    %p82 = scmp.ne.s32.totalorder %s67, %s81
    %p83 = scmp.eq.s32.totalorder %s15, 0
    %p84 = por %p82, %p83
    %s85 = ssub.s32 %s9, %s16
    %p86 = scmp.eq.s32.totalorder %s85, 0
    %s88 = sadd.s32 %s87, 1
    %s89 = scalar_select %p86, %s87, %s88
    %p92 = pneg %p86
    %p93 = scmp.eq.s32.totalorder %s9, 3
    %p94 = por %p92, %p93
    %p95 = scmp.ne.s32.totalorder %s87, %s90
    %p96 = scmp.eq.s32.totalorder %s9, 0
    %p97 = por %p95, %p96
    %p98 = scmp.ne.s32.totalorder %s87, %s90
    %p99 = scmp.eq.s32.totalorder %s14, 3
    %p100 = por %p98, %p99
    %p101 = scmp.ne.s32.totalorder %s90, %s91
    %p102 = scmp.eq.s32.totalorder %s14, 0
    %p103 = por %p101, %p102
    %p104 = scmp.ne.s32.totalorder %s90, %s91
    %p105 = scmp.eq.s32.totalorder %s15, 3
    %p106 = por %p104, %p105
    %p108 = scmp.ne.s32.totalorder %s91, %s107
    %p109 = scmp.eq.s32.totalorder %s15, 0
    %p110 = por %p108, %p109
    %p111 = scmp.le.s32.totalorder 1, %s9
    %p112 = scmp.lt.s32.totalorder %s9, 5
    %p113 = pnand %p111, %p112
    %p114 = pneg %p113
    // Predicated region
    $region9: #{mlp_forward.3} parent=5 // pred_check
      _
    $region10: #{mlp_forward.3} parent=5 // pred_check_branch
      %116 = sbr.rel (%p113) target = $region12
    $region11: #{mlp_forward.3} parent=5 // pred_region
      %s117 = ssub.s32 %s9, 1
      // Predicated region
      $region13: #{mlp_forward.3} parent=11 // pred_check
        %p118 = pneg %p56
      $region14: #{mlp_forward.3} parent=11 // pred_check_branch
        %120 = sbr.rel (%p118) target = $region16
      $region15: #{mlp_forward.3} parent=11 // pred_region
        _
      $region16: #{mlp_forward.3} parent=11 // pred_fallthru
        _
      // Predicated region
      $region17: #{mlp_forward.3} parent=11 // pred_check
        %p121 = pneg %p77
      $region18: #{mlp_forward.3} parent=11 // pred_check_branch
        %123 = sbr.rel (%p121) target = $region20
      $region19: #{mlp_forward.3} parent=11 // pred_region
        _
      $region20: #{mlp_forward.3} parent=11 // pred_fallthru
        _
    $region12: #{mlp_forward.3} parent=5 // pred_fallthru
      _
    %p124 = scmp.lt.s32.totalorder %s9, 4
    // Predicated region
    $region21: #{mlp_forward.3} parent=5 // pred_check
      %p125 = pneg %p124
    $region22: #{mlp_forward.3} parent=5 // pred_check_branch
      %127 = sbr.rel (%p125) target = $region24
    $region23: #{mlp_forward.3} parent=5 // pred_region
      // Predicated region
      $region25: #{mlp_forward.3} parent=23 // pred_check
        %p128 = pneg %p29
      $region26: #{mlp_forward.3} parent=23 // pred_check_branch
        %130 = sbr.rel (%p128) target = $region28
      $region27: #{mlp_forward.3} parent=23 // pred_region
        %s131 = smul.u32 16, %s9
        %p132 = scmp.lt.s32.totalorder %s131, 63
        %s133 = scalar_select %p132, %s131, 63
        %s134 = smul.addr %s133, 8
        %s135 = scalar_lea.vmem %s0, %s134
        %s136 = smul.u32 16, %s9
      $region28: #{mlp_forward.3} parent=23 // pred_fallthru
        _
    $region24: #{mlp_forward.3} parent=5 // pred_fallthru
      _
    %p137 = scmp.le.s32.totalorder 1, %s9
    %p138 = scmp.lt.s32.totalorder %s9, 5
    %p139 = pnand %p137, %p138
    %p140 = pneg %p139
    // Predicated region
    $region29: #{mlp_forward.3} parent=5 // pred_check
      _
    $region30: #{mlp_forward.3} parent=5 // pred_check_branch
      %142 = sbr.rel (%p139) target = $region32
    $region31: #{mlp_forward.3} parent=5 // pred_region
      %s143 = ssub.s32 %s9, 1
      %s144 = smul.u32 16, %s14
      %p145 = scmp.lt.s32.totalorder %s144, 63
      %s146 = scalar_select %p145, %s144, 63
      %s147 = smul.addr %s146, 8
      %s148 = scalar_lea.vmem %s0, %s147
      %p149 = pneg %p35
      %p150 = pneg %p32
      %p151 = pneg %p56
      %p152 = pneg %p53
      %p153 = pneg %p77
      %p154 = pneg %p74
      %p155 = pneg %p103
      %p156 = pneg %p100
      %s157 = smul.u32 16, %s14
      %p158 = scmp.lt.s32.totalorder %s157, 63
      %s159 = scalar_select %p158, %s157, 63
      %s160 = smul.addr %s159, 2
      %s161 = smul.addr %s160, 8
      %s162 = scalar_lea.vmem %s3, %s161
      %s163 = smul.u32 16, %s14
      %p164 = scmp.lt.s32.totalorder %s163, 63
      %s165 = scalar_select %p164, %s163, 63
      %s166 = smul.addr %s165, 8
      %s167 = scalar_lea.vmem %s0, %s166
      %s168 = smul.u32 16, %s14
      %s169 = smul.u32 16, %s14
      %p170 = scmp.lt.s32.totalorder %s169, 63
      %s171 = scalar_select %p170, %s169, 63
      %s172 = smul.addr %s171, 2
      %s173 = smul.addr %s172, 8
      %s174 = scalar_lea.vmem %s3, %s173
      %s175 = smul.u32 16, %s14
      %v176 = vld [vmem:[%s167] sm:$0xff]
      %v177 = vld [vmem:[%s167 + $0x8] sm:$0xff]
      %v178 = vld [vmem:[%s167 + $0x10] sm:$0xff]
      %v179 = vld [vmem:[%s167 + $0x18] sm:$0xff]
      %v180 = vld [vmem:[%s167 + $0x20] sm:$0xff]
      %v181 = vld [vmem:[%s167 + $0x28] sm:$0xff]
      %v182 = vld [vmem:[%s167 + $0x30] sm:$0xff]
      %v183 = vld [vmem:[%s167 + $0x38] sm:$0xff]
      %v184 = vld [vmem:[%s167 + $0x40] sm:$0xff]
      %v185 = vld [vmem:[%s167 + $0x48] sm:$0xff]
      %v186 = vld [vmem:[%s167 + $0x50] sm:$0xff]
      %v187 = vld [vmem:[%s167 + $0x58] sm:$0xff]
      %v188 = vld [vmem:[%s167 + $0x60] sm:$0xff]
      %v189 = vld [vmem:[%s167 + $0x68] sm:$0xff]
      %v190 = vld [vmem:[%s167 + $0x70] sm:$0xff]
      %v191 = vld [vmem:[%s167 + $0x78] sm:$0xff]
      %v192 = vld [vmem:[%s1] sm:$0xff]
      %v193 = vld [vmem:[%s1 + $0x8] sm:$0xff]
      %v194 = vld [vmem:[%s1 + $0x10] sm:$0xff]
      %v195 = vld [vmem:[%s1 + $0x18] sm:$0xff]
      %v196 = vld [vmem:[%s1 + $0x20] sm:$0xff]
      %v197 = vld [vmem:[%s1 + $0x28] sm:$0xff]
      %v198 = vld [vmem:[%s1 + $0x30] sm:$0xff]
      %v199 = vld [vmem:[%s1 + $0x38] sm:$0xff]
      %v200 = vld [vmem:[%s1 + $0x40] sm:$0xff]
      %v201 = vld [vmem:[%s1 + $0x48] sm:$0xff]
      %v202 = vld [vmem:[%s1 + $0x50] sm:$0xff]
      %v203 = vld [vmem:[%s1 + $0x58] sm:$0xff]
      %v204 = vld [vmem:[%s1 + $0x60] sm:$0xff]
      %v205 = vld [vmem:[%s1 + $0x68] sm:$0xff]
      %v206 = vld [vmem:[%s1 + $0x70] sm:$0xff]
      %v207 = vld [vmem:[%s1 + $0x78] sm:$0xff]
      %v208 = vld [vmem:[%s2] sm:$0x3]
      %v210 = vlaneseq
      %v211 = vshrl.u32 %v210, 7
      %v212 = vsub.s32 0, %v211
      %v213 = vrot.slane %v208, %v212
      %v214 = vlaneseq
      %v215 = vshrl.u32 %v214, 7
      %v216 = vsub.s32 1, %v215
      %v217 = vrot.slane %v208, %v216
      %vm220 = vcmask 523264
      %v222 = vsel %vm220, %v176, 0
      %v225 = vsel %vm220, %v177, 0
      %v228 = vsel %vm220, %v178, 0
      %v231 = vsel %vm220, %v179, 0
      %v234 = vsel %vm220, %v180, 0
      %v237 = vsel %vm220, %v181, 0
      %v240 = vsel %vm220, %v182, 0
      %v243 = vsel %vm220, %v183, 0
      %v246 = vsel %vm220, %v184, 0
      %v249 = vsel %vm220, %v185, 0
      %v252 = vsel %vm220, %v186, 0
      %v255 = vsel %vm220, %v187, 0
      %v258 = vsel %vm220, %v188, 0
      %v261 = vsel %vm220, %v189, 0
      %v264 = vsel %vm220, %v190, 0
      %v267 = vsel %vm220, %v191, 0
      %269 = vmatprep.subr.mxu0 %v193
      %270 = vmatpush1.msra.mxu0 %v192
      %271 = vmatprep.subr.mxu0 %v195
      %272 = vmatpush1.msra.mxu0 %v194
      %273 = vmatprep.subr.mxu0 %v197
      %274 = vmatpush1.msra.mxu0 %v196
      %275 = vmatprep.subr.mxu0 %v199
      %276 = vmatpush1.msra.mxu0 %v198
      %277 = vmatprep.subr.mxu0 %v201
      %278 = vmatpush1.msra.mxu0 %v200
      %279 = vmatprep.subr.mxu0 %v203
      %280 = vmatpush1.msra.mxu0 %v202
      %281 = vmatprep.subr.mxu0 %v205
      %282 = vmatpush1.msra.mxu0 %v204
      %283 = vmatprep.subr.mxu0 %v207
      %284 = vmatpush1.msra.mxu0 %v206
      %285 = vmatprep.subr.mxu0 0.0
      %286 = vmatpush1.msra.mxu0 0.0
      %287 = vmatprep.subr.mxu0 0.0
      %288 = vmatpush1.msra.mxu0 0.0
      %289 = vmatprep.subr.mxu0 0.0
      %290 = vmatpush1.msra.mxu0 0.0
      %291 = vmatprep.subr.mxu0 0.0
      %292 = vmatpush1.msra.mxu0 0.0
      %293 = vmatprep.subr.mxu0 0.0
      %294 = vmatpush1.msra.mxu0 0.0
      %295 = vmatprep.subr.mxu0 0.0
      %296 = vmatpush1.msra.mxu0 0.0
      %297 = vmatprep.subr.mxu0 0.0
      %298 = vmatpush1.msra.mxu0 0.0
      %299 = vmatprep.subr.mxu0 0.0
      %300 = vmatpush1.msra.mxu0 0.0
      %301 = vmatprep.subr.mxu0 0.0
      %302 = vmatpush1.msra.mxu0 0.0
      %303 = vmatprep.subr.mxu0 0.0
      %304 = vmatpush1.msra.mxu0 0.0
      %305 = vmatprep.subr.mxu0 0.0
      %306 = vmatpush1.msra.mxu0 0.0
      %307 = vmatprep.subr.mxu0 0.0
      %308 = vmatpush1.msra.mxu0 0.0
      %309 = vmatprep.subr.mxu0 0.0
      %310 = vmatpush1.msra.mxu0 0.0
      %311 = vmatprep.subr.mxu0 0.0
      %312 = vmatpush1.msra.mxu0 0.0
      %313 = vmatprep.subr.mxu0 0.0
      %314 = vmatpush1.msra.mxu0 0.0
      %315 = vmatprep.subr.mxu0 0.0
      %316 = vmatpush1.msra.mxu0 0.0
      %317 = vmatprep.subr.mxu0 0.0
      %318 = vmatpush1.msra.mxu0 0.0
      %319 = vmatprep.subr.mxu0 0.0
      %320 = vmatpush1.msra.mxu0 0.0
      %321 = vmatprep.subr.mxu0 0.0
      %322 = vmatpush1.msra.mxu0 0.0
      %323 = vmatprep.subr.mxu0 0.0
      %324 = vmatpush1.msra.mxu0 0.0
      %325 = vmatprep.subr.mxu0 0.0
      %326 = vmatpush1.msra.mxu0 0.0
      %327 = vmatprep.subr.mxu0 0.0
      %328 = vmatpush1.msra.mxu0 0.0
      %329 = vmatprep.subr.mxu0 0.0
      %330 = vmatpush1.msra.mxu0 0.0
      %331 = vmatprep.subr.mxu0 0.0
      %332 = vmatpush1.msra.mxu0 0.0
      %333 = vmatprep.mubr.f32.mxu0 0.0
      %334 = vmatmul.mubr.f32.gmra.mrb[0].mxu0 %v222
      %v335 = vpop.f32.mrb[0].mxu0
      %v336 = vadd.f32 %v213, %v335
      %v337 = vpop.f32.mrb[0].mxu0
      %v338 = vadd.f32 %v217, %v337
      %339 = vmatprep.mubr.f32.mxu0 0.0
      %340 = vmatmul.mubr.f32.gmra.mrb[0].mxu0 %v225
      %v341 = vpop.f32.mrb[0].mxu0
      %v342 = vadd.f32 %v213, %v341
      %v343 = vpop.f32.mrb[0].mxu0
      %v344 = vadd.f32 %v217, %v343
      %345 = vmatprep.mubr.f32.mxu0 0.0
      %346 = vmatmul.mubr.f32.gmra.mrb[0].mxu0 %v228
      %v347 = vpop.f32.mrb[0].mxu0
      %v348 = vadd.f32 %v213, %v347
      %v349 = vpop.f32.mrb[0].mxu0
      %v350 = vadd.f32 %v217, %v349
      %351 = vmatprep.mubr.f32.mxu0 0.0
      %352 = vmatmul.mubr.f32.gmra.mrb[0].mxu0 %v231
      %v353 = vpop.f32.mrb[0].mxu0
      %v354 = vadd.f32 %v213, %v353
      %v355 = vpop.f32.mrb[0].mxu0
      %v356 = vadd.f32 %v217, %v355
      %357 = vmatprep.mubr.f32.mxu0 0.0
      %358 = vmatmul.mubr.f32.gmra.mrb[0].mxu0 %v234
      %v359 = vpop.f32.mrb[0].mxu0
      %v360 = vadd.f32 %v213, %v359
      %v361 = vpop.f32.mrb[0].mxu0
      %v362 = vadd.f32 %v217, %v361
      %363 = vmatprep.mubr.f32.mxu0 0.0
      %364 = vmatmul.mubr.f32.gmra.mrb[0].mxu0 %v237
      %v365 = vpop.f32.mrb[0].mxu0
      %v366 = vadd.f32 %v213, %v365
      %v367 = vpop.f32.mrb[0].mxu0
      %v368 = vadd.f32 %v217, %v367
      %369 = vmatprep.mubr.f32.mxu0 0.0
      %370 = vmatmul.mubr.f32.gmra.mrb[0].mxu0 %v240
      %v371 = vpop.f32.mrb[0].mxu0
      %v372 = vadd.f32 %v213, %v371
      %v373 = vpop.f32.mrb[0].mxu0
      %v374 = vadd.f32 %v217, %v373
      %375 = vmatprep.mubr.f32.mxu0 0.0
      %376 = vmatmul.mubr.f32.gmra.mrb[0].mxu0 %v243
      %v377 = vpop.f32.mrb[0].mxu0
      %v378 = vadd.f32 %v213, %v377
      %v379 = vpop.f32.mrb[0].mxu0
      %v380 = vadd.f32 %v217, %v379
      %381 = vmatprep.mubr.f32.mxu0 0.0
      %382 = vmatmul.mubr.f32.gmra.mrb[0].mxu0 %v246
      %v383 = vpop.f32.mrb[0].mxu0
      %v384 = vadd.f32 %v213, %v383
      %v385 = vpop.f32.mrb[0].mxu0
      %v386 = vadd.f32 %v217, %v385
      %387 = vmatprep.mubr.f32.mxu0 0.0
      %388 = vmatmul.mubr.f32.gmra.mrb[0].mxu0 %v249
      %v389 = vpop.f32.mrb[0].mxu0
      %v390 = vadd.f32 %v213, %v389
      %v391 = vpop.f32.mrb[0].mxu0
      %v392 = vadd.f32 %v217, %v391
      %393 = vmatprep.mubr.f32.mxu0 0.0
      %394 = vmatmul.mubr.f32.gmra.mrb[0].mxu0 %v252
      %v395 = vpop.f32.mrb[0].mxu0
      %v396 = vadd.f32 %v213, %v395
      %v397 = vpop.f32.mrb[0].mxu0
      %v398 = vadd.f32 %v217, %v397
      %399 = vmatprep.mubr.f32.mxu0 0.0
      %400 = vmatmul.mubr.f32.gmra.mrb[0].mxu0 %v255
      %v401 = vpop.f32.mrb[0].mxu0
      %v402 = vadd.f32 %v213, %v401
      %v403 = vpop.f32.mrb[0].mxu0
      %v404 = vadd.f32 %v217, %v403
      %405 = vmatprep.mubr.f32.mxu0 0.0
      %406 = vmatmul.mubr.f32.gmra.mrb[0].mxu0 %v258
      %v407 = vpop.f32.mrb[0].mxu0
      %v408 = vadd.f32 %v213, %v407
      %v409 = vpop.f32.mrb[0].mxu0
      %v410 = vadd.f32 %v217, %v409
      %411 = vmatprep.mubr.f32.mxu0 0.0
      %412 = vmatmul.mubr.f32.gmra.mrb[0].mxu0 %v261
      %v413 = vpop.f32.mrb[0].mxu0
      %v414 = vadd.f32 %v213, %v413
      %v415 = vpop.f32.mrb[0].mxu0
      %v416 = vadd.f32 %v217, %v415
      %417 = vmatprep.mubr.f32.mxu0 0.0
      %418 = vmatmul.mubr.f32.gmra.mrb[0].mxu0 %v264
      %v419 = vpop.f32.mrb[0].mxu0
      %v420 = vadd.f32 %v213, %v419
      %v421 = vpop.f32.mrb[0].mxu0
      %v422 = vadd.f32 %v217, %v421
      %423 = vmatprep.mubr.f32.mxu0 0.0
      %424 = vmatmul.mubr.f32.gmra.mrb[0].mxu0 %v267
      %v425 = vpop.f32.mrb[0].mxu0
      %v426 = vadd.f32 %v213, %v425
      %v427 = vpop.f32.mrb[0].mxu0
      %v428 = vadd.f32 %v217, %v427
      %429 = vdwg.mxu0
      %430 = vst [vmem:[%s174] sm:$0xff] %v336
      %431 = vst [vmem:[%s174 + $0x8] sm:$0xff] %v338
      %432 = vst [vmem:[%s174 + $0x10] sm:$0xff] %v342
      %433 = vst [vmem:[%s174 + $0x18] sm:$0xff] %v344
      %434 = vst [vmem:[%s174 + $0x20] sm:$0xff] %v348
      %435 = vst [vmem:[%s174 + $0x28] sm:$0xff] %v350
      %436 = vst [vmem:[%s174 + $0x30] sm:$0xff] %v354
      %437 = vst [vmem:[%s174 + $0x38] sm:$0xff] %v356
      %438 = vst [vmem:[%s174 + $0x40] sm:$0xff] %v360
      %439 = vst [vmem:[%s174 + $0x48] sm:$0xff] %v362
      %440 = vst [vmem:[%s174 + $0x50] sm:$0xff] %v366
      %441 = vst [vmem:[%s174 + $0x58] sm:$0xff] %v368
      %442 = vst [vmem:[%s174 + $0x60] sm:$0xff] %v372
      %443 = vst [vmem:[%s174 + $0x68] sm:$0xff] %v374
      %444 = vst [vmem:[%s174 + $0x70] sm:$0xff] %v378
      %445 = vst [vmem:[%s174 + $0x78] sm:$0xff] %v380
      %446 = vst [vmem:[%s174 + $0x80] sm:$0xff] %v384
      %447 = vst [vmem:[%s174 + $0x88] sm:$0xff] %v386
      %448 = vst [vmem:[%s174 + $0x90] sm:$0xff] %v390
      %449 = vst [vmem:[%s174 + $0x98] sm:$0xff] %v392
      %450 = vst [vmem:[%s174 + $0xa0] sm:$0xff] %v396
      %451 = vst [vmem:[%s174 + $0xa8] sm:$0xff] %v398
      %452 = vst [vmem:[%s174 + $0xb0] sm:$0xff] %v402
      %453 = vst [vmem:[%s174 + $0xb8] sm:$0xff] %v404
      %454 = vst [vmem:[%s174 + $0xc0] sm:$0xff] %v408
      %455 = vst [vmem:[%s174 + $0xc8] sm:$0xff] %v410
      %456 = vst [vmem:[%s174 + $0xd0] sm:$0xff] %v414
      %457 = vst [vmem:[%s174 + $0xd8] sm:$0xff] %v416
      %458 = vst [vmem:[%s174 + $0xe0] sm:$0xff] %v420
      %459 = vst [vmem:[%s174 + $0xe8] sm:$0xff] %v422
      %460 = vst [vmem:[%s174 + $0xf0] sm:$0xff] %v426
      %461 = vst [vmem:[%s174 + $0xf8] sm:$0xff] %v428
      %s462 = smul.u32 16, %s14
      %p463 = scmp.lt.s32.totalorder %s462, 63
      %s464 = scalar_select %p463, %s462, 63
      %s465 = smul.addr %s464, 2
      %s466 = smul.addr %s465, 8
      %s467 = scalar_lea.vmem %s3, %s466
      // Predicated region
      $region33: #{mlp_forward.3} parent=31 // pred_check
        %p468 = pneg %p100
      $region34: #{mlp_forward.3} parent=31 // pred_check_branch
        %470 = sbr.rel (%p468) target = $region36
      $region35: #{mlp_forward.3} parent=31 // pred_region
        %s471 = smul.u32 16, %s14
      $region36: #{mlp_forward.3} parent=31 // pred_fallthru
        _
    $region32: #{mlp_forward.3} parent=5 // pred_fallthru
      _
    %p472 = scmp.le.s32.totalorder 2, %s9
    // Predicated region
    $region37: #{mlp_forward.3} parent=5 // pred_check
      %p473 = pneg %p472
    $region38: #{mlp_forward.3} parent=5 // pred_check_branch
      %475 = sbr.rel (%p473) target = $region40
    $region39: #{mlp_forward.3} parent=5 // pred_region
      %s476 = ssub.s32 %s9, 2
      // Predicated region
      $region41: #{mlp_forward.3} parent=39 // pred_check
        %p477 = pneg %p106
      $region42: #{mlp_forward.3} parent=39 // pred_check_branch
        %479 = sbr.rel (%p477) target = $region44
      $region43: #{mlp_forward.3} parent=39 // pred_region
        %s480 = smul.u32 16, %s15
        %p481 = scmp.lt.s32.totalorder %s480, 63
        %s482 = scalar_select %p481, %s480, 63
        %s483 = smul.addr %s482, 2
        %s484 = smul.addr %s483, 8
        %s485 = scalar_lea.vmem %s3, %s484
      $region44: #{mlp_forward.3} parent=39 // pred_fallthru
        _
    $region40: #{mlp_forward.3} parent=5 // pred_fallthru
      _
  $region6: #{mlp_forward.3} parent=0 // loop_footer
    %s13 = sadd.s32 1, %s9
  $region7: #{mlp_forward.3} parent=0 // loop_footer_branch
    %8 = sbr.rel target = $region3
  $region8: #{mlp_forward.3} parent=0 // loop_exit
    _

// kernel: mlp_forward.5
$region0: #{mlp_forward.5}
  #allocation0 [shape = 'u32[]', space=smem, size = 0x4, offset = 0x4, fixed_abs, tag = 'smem constant byte address 0x4 - core index']
  #allocation1 [shape = 'u32[144,128]{1,0:T(1,128)}', space=vmem, size = 0x12000, scoped, tag = 'internal scratch']
  %s0 = inlined_call_operand.vmem [shape: f32[2,256,256], index: 0, kind: input, shape index: {}]
  %s1 = inlined_call_operand.vmem [shape: f32[2,1,256], index: 1, kind: input, shape index: {}]
  %s2 = inlined_call_operand.vmem [shape: f32[1,256], index: 2, kind: input, shape index: {}]
  %s3 = inlined_call_operand.vmem [shape: f32[256,128], index: 3, kind: input, shape index: {}]
  %s4 = inlined_call_operand.vmem [shape: f32[1,128], index: 4, kind: input, shape index: {}]
  %s5 = inlined_call_operand.vmem [shape: f32[2,256,128], index: 5, kind: output, shape index: {}]
  %s6 = sld [smem:[#allocation0]]
  $region53: #{mlp_forward.5} parent=0
    _
  %s8 = ssub.s32 1, %s6
  %s9 = scalar_select 0, %s8, %s6
  loop: start=0, step=1, limit=6
  $region2: #{mlp_forward.5} parent=0 // loop_pre_header
    _
  $region3: #{mlp_forward.5} parent=0 // loop_header
    %s11 = sphi 0, %s15
    %p12 = scmp.ge.s32.totalorder %s11, 6
    %s18 = sphi 0, %s30
    %s19 = sphi 0, %s26
    %s20 = sphi 0, %s18
    %s21 = sphi 0, %s19
    %s22 = sphi 0, %s20
    %s23 = sphi 0, %s21
    %s35 = sphi 0, %s37
    %s38 = sphi 0, %s35
    %s39 = sphi 0, %s38
    %s55 = sphi 0, %s39
    %s61 = sphi 0, %s63
    %s64 = sphi 0, %s61
    %s65 = sphi 0, %s64
    %s81 = sphi 0, %s65
    %s85 = sphi 0, %s85
    %s87 = sphi 0, %s85
    %s88 = sphi 0, %s87
    %s102 = sphi 0, %s88
    %s106 = sphi 0, %s106
    %s108 = sphi 0, %s106
    %s109 = sphi 0, %s108
    %s123 = sphi 0, %s109
    %s127 = sphi 0, %s127
    %s129 = sphi 0, %s127
    %s130 = sphi 0, %s129
    %s144 = sphi 0, %s130
    %s152 = sphi 0, %s154
    %s155 = sphi 0, %s152
    %s156 = sphi 0, %s155
    %s172 = sphi 0, %s156
  $region4: #{mlp_forward.5} parent=0 // loop_header_branch
    %14 = sbr.rel (%p12) target = $region8
  $region5: #{mlp_forward.5} parent=0 // loop_body
    %s16 = ssub.s32 %s11, 1
    %s17 = ssub.s32 %s11, 2
    %s24 = sadd.s32 1, %s19
    %p25 = scmp.ge.s32.totalorder %s24, 2
    %s26 = scalar_select %p25, 0, %s24
    %s27 = sadd.s32 1, %s18
    %s28 = scalar_select %p25, %s27, %s18
    %p29 = scmp.ge.s32.totalorder %s28, 2
    %s30 = scalar_select %p29, 0, %s28
    %s31 = ssub.s32 %s18, %s30
    %s32 = ssub.s32 %s19, %s26
    %s33 = sor.u32 %s31, %s32
    %p34 = scmp.eq.s32.totalorder %s33, 0
    %s36 = sadd.s32 %s35, 1
    %s37 = scalar_select %p34, %s35, %s36
    %p40 = pneg %p34
    %p41 = scmp.eq.s32.totalorder %s11, 3
    %p42 = por %p40, %p41
    %p43 = scmp.ne.s32.totalorder %s35, %s38
    %p44 = scmp.eq.s32.totalorder %s11, 0
    %p45 = por %p43, %p44
    %p46 = scmp.ne.s32.totalorder %s35, %s38
    %p47 = scmp.eq.s32.totalorder %s16, 3
    %p48 = por %p46, %p47
    %p49 = scmp.ne.s32.totalorder %s38, %s39
    %p50 = scmp.eq.s32.totalorder %s16, 0
    %p51 = por %p49, %p50
    %p52 = scmp.ne.s32.totalorder %s38, %s39
    %p53 = scmp.eq.s32.totalorder %s17, 3
    %p54 = por %p52, %p53
    %p56 = scmp.ne.s32.totalorder %s39, %s55
    %p57 = scmp.eq.s32.totalorder %s17, 0
    %p58 = por %p56, %p57
    %s59 = ssub.s32 %s18, %s30
    %p60 = scmp.eq.s32.totalorder %s59, 0
    %s62 = sadd.s32 %s61, 1
    %s63 = scalar_select %p60, %s61, %s62
    %p66 = pneg %p60
    %p67 = scmp.eq.s32.totalorder %s11, 3
    %p68 = por %p66, %p67
    %p69 = scmp.ne.s32.totalorder %s61, %s64
    %p70 = scmp.eq.s32.totalorder %s11, 0
    %p71 = por %p69, %p70
    %p72 = scmp.ne.s32.totalorder %s61, %s64
    %p73 = scmp.eq.s32.totalorder %s16, 3
    %p74 = por %p72, %p73
    %p75 = scmp.ne.s32.totalorder %s64, %s65
    %p76 = scmp.eq.s32.totalorder %s16, 0
    %p77 = por %p75, %p76
    %p78 = scmp.ne.s32.totalorder %s64, %s65
    %p79 = scmp.eq.s32.totalorder %s17, 3
    %p80 = por %p78, %p79
    %p82 = scmp.ne.s32.totalorder %s65, %s81
    %p83 = scmp.eq.s32.totalorder %s17, 0
    %p84 = por %p82, %p83
    %s86 = sadd.s32 %s85, 1
    %p89 = scmp.eq.s32.totalorder %s11, 3
    %p90 = scmp.ne.s32.totalorder %s85, %s87
    %p91 = scmp.eq.s32.totalorder %s11, 0
    %p92 = por %p90, %p91
    %p93 = scmp.ne.s32.totalorder %s85, %s87
    %p94 = scmp.eq.s32.totalorder %s16, 3
    %p95 = por %p93, %p94
    %p96 = scmp.ne.s32.totalorder %s87, %s88
    %p97 = scmp.eq.s32.totalorder %s16, 0
    %p98 = por %p96, %p97
    %p99 = scmp.ne.s32.totalorder %s87, %s88
    %p100 = scmp.eq.s32.totalorder %s17, 3
    %p101 = por %p99, %p100
    %p103 = scmp.ne.s32.totalorder %s88, %s102
    %p104 = scmp.eq.s32.totalorder %s17, 0
    %p105 = por %p103, %p104
    %s107 = sadd.s32 %s106, 1
    %p110 = scmp.eq.s32.totalorder %s11, 3
    %p111 = scmp.ne.s32.totalorder %s106, %s108
    %p112 = scmp.eq.s32.totalorder %s11, 0
    %p113 = por %p111, %p112
    %p114 = scmp.ne.s32.totalorder %s106, %s108
    %p115 = scmp.eq.s32.totalorder %s16, 3
    %p116 = por %p114, %p115
    %p117 = scmp.ne.s32.totalorder %s108, %s109
    %p118 = scmp.eq.s32.totalorder %s16, 0
    %p119 = por %p117, %p118
    %p120 = scmp.ne.s32.totalorder %s108, %s109
    %p121 = scmp.eq.s32.totalorder %s17, 3
    %p122 = por %p120, %p121
    %p124 = scmp.ne.s32.totalorder %s109, %s123
    %p125 = scmp.eq.s32.totalorder %s17, 0
    %p126 = por %p124, %p125
    %s128 = sadd.s32 %s127, 1
    %p131 = scmp.eq.s32.totalorder %s11, 3
    %p132 = scmp.ne.s32.totalorder %s127, %s129
    %p133 = scmp.eq.s32.totalorder %s11, 0
    %p134 = por %p132, %p133
    %p135 = scmp.ne.s32.totalorder %s127, %s129
    %p136 = scmp.eq.s32.totalorder %s16, 3
    %p137 = por %p135, %p136
    %p138 = scmp.ne.s32.totalorder %s129, %s130
    %p139 = scmp.eq.s32.totalorder %s16, 0
    %p140 = por %p138, %p139
    %p141 = scmp.ne.s32.totalorder %s129, %s130
    %p142 = scmp.eq.s32.totalorder %s17, 3
    %p143 = por %p141, %p142
    %p145 = scmp.ne.s32.totalorder %s130, %s144
    %p146 = scmp.eq.s32.totalorder %s17, 0
    %p147 = por %p145, %p146
    %s148 = ssub.s32 %s18, %s30
    %s149 = ssub.s32 %s19, %s26
    %s150 = sor.u32 %s148, %s149
    %p151 = scmp.eq.s32.totalorder %s150, 0
    %s153 = sadd.s32 %s152, 1
    %s154 = scalar_select %p151, %s152, %s153
    %p157 = pneg %p151
    %p158 = scmp.eq.s32.totalorder %s11, 3
    %p159 = por %p157, %p158
    %p160 = scmp.ne.s32.totalorder %s152, %s155
    %p161 = scmp.eq.s32.totalorder %s11, 0
    %p162 = por %p160, %p161
    %p163 = scmp.ne.s32.totalorder %s152, %s155
    %p164 = scmp.eq.s32.totalorder %s16, 3
    %p165 = por %p163, %p164
    %p166 = scmp.ne.s32.totalorder %s155, %s156
    %p167 = scmp.eq.s32.totalorder %s16, 0
    %p168 = por %p166, %p167
    %p169 = scmp.ne.s32.totalorder %s155, %s156
    %p170 = scmp.eq.s32.totalorder %s17, 3
    %p171 = por %p169, %p170
    %p173 = scmp.ne.s32.totalorder %s156, %s172
    %p174 = scmp.eq.s32.totalorder %s17, 0
    %p175 = por %p173, %p174
    %p176 = scmp.le.s32.totalorder 1, %s11
    %p177 = scmp.lt.s32.totalorder %s11, 5
    %p178 = pnand %p176, %p177
    %p179 = pneg %p178
    // Predicated region
    $region9: #{mlp_forward.5} parent=5 // pred_check
      _
    $region10: #{mlp_forward.5} parent=5 // pred_check_branch
      %181 = sbr.rel (%p178) target = $region12
    $region11: #{mlp_forward.5} parent=5 // pred_region
      %s182 = ssub.s32 %s11, 1
      // Predicated region
      $region13: #{mlp_forward.5} parent=11 // pred_check
        %p183 = pneg %p98
      $region14: #{mlp_forward.5} parent=11 // pred_check_branch
        %185 = sbr.rel (%p183) target = $region16
      $region15: #{mlp_forward.5} parent=11 // pred_region
        _
      $region16: #{mlp_forward.5} parent=11 // pred_fallthru
        _
      // Predicated region
      $region17: #{mlp_forward.5} parent=11 // pred_check
        %p186 = pneg %p119
      $region18: #{mlp_forward.5} parent=11 // pred_check_branch
        %188 = sbr.rel (%p186) target = $region20
      $region19: #{mlp_forward.5} parent=11 // pred_region
        _
      $region20: #{mlp_forward.5} parent=11 // pred_fallthru
        _
      // Predicated region
      $region21: #{mlp_forward.5} parent=11 // pred_check
        %p189 = pneg %p140
      $region22: #{mlp_forward.5} parent=11 // pred_check_branch
        %191 = sbr.rel (%p189) target = $region24
      $region23: #{mlp_forward.5} parent=11 // pred_region
        _
      $region24: #{mlp_forward.5} parent=11 // pred_fallthru
        _
    $region12: #{mlp_forward.5} parent=5 // pred_fallthru
      _
    %p192 = scmp.lt.s32.totalorder %s11, 4
    // Predicated region
    $region25: #{mlp_forward.5} parent=5 // pred_check
      %p193 = pneg %p192
    $region26: #{mlp_forward.5} parent=5 // pred_check_branch
      %195 = sbr.rel (%p193) target = $region28
    $region27: #{mlp_forward.5} parent=5 // pred_region
      // Predicated region
      $region29: #{mlp_forward.5} parent=27 // pred_check
        %p196 = pneg %p45
      $region30: #{mlp_forward.5} parent=27 // pred_check_branch
        %198 = sbr.rel (%p196) target = $region32
      $region31: #{mlp_forward.5} parent=27 // pred_region
        %s199 = smul.u32 16, %s19
        %p200 = scmp.lt.s32.totalorder %s18, 1
        %s201 = scalar_select %p200, %s18, 1
        %p202 = scmp.lt.s32.totalorder %s199, 31
        %s203 = scalar_select %p202, %s199, 31
        %s204 = smul.addr %s203, 2
        %s205 = smul.addr %s201, 64
        %s206 = sadd.s32 %s204, %s205
        %s207 = smul.addr %s206, 8
        %s208 = scalar_lea.vmem %s0, %s207
        %s209 = smul.u32 16, %s19
      $region32: #{mlp_forward.5} parent=27 // pred_fallthru
        _
      // Predicated region
      $region33: #{mlp_forward.5} parent=27 // pred_check
        %p210 = pneg %p71
      $region34: #{mlp_forward.5} parent=27 // pred_check_branch
        %212 = sbr.rel (%p210) target = $region36
      $region35: #{mlp_forward.5} parent=27 // pred_region
        %p213 = scmp.lt.s32.totalorder %s18, 1
        %s214 = scalar_select %p213, %s18, 1
        %s215 = smul.addr %s214, 2
        %s216 = scalar_lea.vmem %s1, %s215
      $region36: #{mlp_forward.5} parent=27 // pred_fallthru
        _
    $region28: #{mlp_forward.5} parent=5 // pred_fallthru
      _
    %p217 = scmp.le.s32.totalorder 1, %s11
    %p218 = scmp.lt.s32.totalorder %s11, 5
    %p219 = pnand %p217, %p218
    %p220 = pneg %p219
    // Predicated region
    $region37: #{mlp_forward.5} parent=5 // pred_check
      _
    $region38: #{mlp_forward.5} parent=5 // pred_check_branch
      %222 = sbr.rel (%p219) target = $region40
    $region39: #{mlp_forward.5} parent=5 // pred_region
      %s223 = ssub.s32 %s11, 1
      %s224 = smul.u32 16, %s21
      %p225 = scmp.lt.s32.totalorder %s20, 1
      %s226 = scalar_select %p225, %s20, 1
      %p227 = scmp.lt.s32.totalorder %s224, 31
      %s228 = scalar_select %p227, %s224, 31
      %s229 = smul.addr %s228, 2
      %s230 = smul.addr %s226, 64
      %s231 = sadd.s32 %s229, %s230
      %s232 = smul.addr %s231, 8
      %s233 = scalar_lea.vmem %s0, %s232
      %p234 = pneg %p51
      %p235 = pneg %p48
      %p236 = scmp.lt.s32.totalorder %s20, 1
      %s237 = scalar_select %p236, %s20, 1
      %s238 = smul.addr %s237, 2
      %s239 = scalar_lea.vmem %s1, %s238
      %p240 = pneg %p77
      %p241 = pneg %p74
      %p242 = pneg %p98
      %p243 = pneg %p95
      %p244 = pneg %p119
      %p245 = pneg %p116
      %p246 = pneg %p140
      %p247 = pneg %p137
      %p248 = pneg %p168
      %p249 = pneg %p165
      %s250 = smul.u32 16, %s21
      %p251 = scmp.lt.s32.totalorder %s20, 1
      %s252 = scalar_select %p251, %s20, 1
      %p253 = scmp.lt.s32.totalorder %s250, 31
      %s254 = scalar_select %p253, %s250, 31
      %s255 = smul.addr %s252, 32
      %s256 = sadd.s32 %s254, %s255
      %s257 = smul.addr %s256, 8
      %s258 = scalar_lea.vmem %s5, %s257
      %s259 = smul.u32 16, %s21
      %p260 = scmp.lt.s32.totalorder %s20, 1
      %s261 = scalar_select %p260, %s20, 1
      %p262 = scmp.lt.s32.totalorder %s259, 31
      %s263 = scalar_select %p262, %s259, 31
      %s264 = smul.addr %s263, 2
      %s265 = smul.addr %s261, 64
      %s266 = sadd.s32 %s264, %s265
      %s267 = smul.addr %s266, 8
      %s268 = scalar_lea.vmem %s0, %s267
      %s269 = smul.u32 16, %s21
      %p270 = scmp.lt.s32.totalorder %s20, 1
      %s271 = scalar_select %p270, %s20, 1
      %s272 = smul.addr %s271, 2
      %s273 = scalar_lea.vmem %s1, %s272
      %s274 = smul.u32 16, %s21
      %p275 = scmp.lt.s32.totalorder %s20, 1
      %s276 = scalar_select %p275, %s20, 1
      %p277 = scmp.lt.s32.totalorder %s274, 31
      %s278 = scalar_select %p277, %s274, 31
      %s279 = smul.addr %s276, 32
      %s280 = sadd.s32 %s278, %s279
      %s281 = smul.addr %s280, 8
      %s282 = scalar_lea.vmem %s5, %s281
      %s283 = smul.u32 16, %s21
      %v284 = vld [vmem:[%s268] sm:$0xff]
      %v285 = vld [vmem:[%s268 + $0x8] sm:$0xff]
      %v286 = vld [vmem:[%s268 + $0x10] sm:$0xff]
      %v287 = vld [vmem:[%s268 + $0x18] sm:$0xff]
      %v288 = vld [vmem:[%s268 + $0x20] sm:$0xff]
      %v289 = vld [vmem:[%s268 + $0x28] sm:$0xff]
      %v290 = vld [vmem:[%s268 + $0x30] sm:$0xff]
      %v291 = vld [vmem:[%s268 + $0x38] sm:$0xff]
      %v292 = vld [vmem:[%s268 + $0x40] sm:$0xff]
      %v293 = vld [vmem:[%s268 + $0x48] sm:$0xff]
      %v294 = vld [vmem:[%s268 + $0x50] sm:$0xff]
      %v295 = vld [vmem:[%s268 + $0x58] sm:$0xff]
      %v296 = vld [vmem:[%s268 + $0x60] sm:$0xff]
      %v297 = vld [vmem:[%s268 + $0x68] sm:$0xff]
      %v298 = vld [vmem:[%s268 + $0x70] sm:$0xff]
      %v299 = vld [vmem:[%s268 + $0x78] sm:$0xff]
      %v300 = vld [vmem:[%s268 + $0x80] sm:$0xff]
      %v301 = vld [vmem:[%s268 + $0x88] sm:$0xff]
      %v302 = vld [vmem:[%s268 + $0x90] sm:$0xff]
      %v303 = vld [vmem:[%s268 + $0x98] sm:$0xff]
      %v304 = vld [vmem:[%s268 + $0xa0] sm:$0xff]
      %v305 = vld [vmem:[%s268 + $0xa8] sm:$0xff]
      %v306 = vld [vmem:[%s268 + $0xb0] sm:$0xff]
      %v307 = vld [vmem:[%s268 + $0xb8] sm:$0xff]
      %v308 = vld [vmem:[%s268 + $0xc0] sm:$0xff]
      %v309 = vld [vmem:[%s268 + $0xc8] sm:$0xff]
      %v310 = vld [vmem:[%s268 + $0xd0] sm:$0xff]
      %v311 = vld [vmem:[%s268 + $0xd8] sm:$0xff]
      %v312 = vld [vmem:[%s268 + $0xe0] sm:$0xff]
      %v313 = vld [vmem:[%s268 + $0xe8] sm:$0xff]
      %v314 = vld [vmem:[%s268 + $0xf0] sm:$0xff]
      %v315 = vld [vmem:[%s268 + $0xf8] sm:$0xff]
      %v316 = vld [vmem:[%s2] sm:$0x3]
      %v317 = vld [vmem:[%s273] sm:$0x3]
      %v318 = vmul.f32 %v316, %v317
      %v320 = vlaneseq
      %v321 = vshrl.u32 %v320, 7
      %v322 = vsub.s32 0, %v321
      %v323 = vrot.slane %v318, %v322
      %v324 = vlaneseq
      %v325 = vshrl.u32 %v324, 7
      %v326 = vsub.s32 1, %v325
      %v327 = vrot.slane %v318, %v326
      %v330 = vadd.f32 %v284, %v323
      %v331 = vadd.f32 %v285, %v327
      %v332 = vadd.f32 %v286, %v323
      %v333 = vadd.f32 %v287, %v327
      %v334 = vadd.f32 %v288, %v323
      %v335 = vadd.f32 %v289, %v327
      %v336 = vadd.f32 %v290, %v323
      %v337 = vadd.f32 %v291, %v327
      %v338 = vadd.f32 %v292, %v323
      %v339 = vadd.f32 %v293, %v327
      %v340 = vadd.f32 %v294, %v323
      %v341 = vadd.f32 %v295, %v327
      %v342 = vadd.f32 %v296, %v323
      %v343 = vadd.f32 %v297, %v327
      %v344 = vadd.f32 %v298, %v323
      %v345 = vadd.f32 %v299, %v327
      %v346 = vadd.f32 %v300, %v323
      %v347 = vadd.f32 %v301, %v327
      %v348 = vadd.f32 %v302, %v323
      %v349 = vadd.f32 %v303, %v327
      %v350 = vadd.f32 %v304, %v323
      %v351 = vadd.f32 %v305, %v327
      %v352 = vadd.f32 %v306, %v323
      %v353 = vadd.f32 %v307, %v327
      %v354 = vadd.f32 %v308, %v323
      %v355 = vadd.f32 %v309, %v327
      %v356 = vadd.f32 %v310, %v323
      %v357 = vadd.f32 %v311, %v327
      %v358 = vadd.f32 %v312, %v323
      %v359 = vadd.f32 %v313, %v327
      %v360 = vadd.f32 %v314, %v323
      %v361 = vadd.f32 %v315, %v327
      %v362 = vld [vmem:[%s3] sm:$0xff]
      %v363 = vld [vmem:[%s3 + $0x8] sm:$0xff]
      %v364 = vld [vmem:[%s3 + $0x10] sm:$0xff]
      %v365 = vld [vmem:[%s3 + $0x18] sm:$0xff]
      %v366 = vld [vmem:[%s3 + $0x20] sm:$0xff]
      %v367 = vld [vmem:[%s3 + $0x28] sm:$0xff]
      %v368 = vld [vmem:[%s3 + $0x30] sm:$0xff]
      %v369 = vld [vmem:[%s3 + $0x38] sm:$0xff]
      %v370 = vld [vmem:[%s3 + $0x40] sm:$0xff]
      %v371 = vld [vmem:[%s3 + $0x48] sm:$0xff]
      %v372 = vld [vmem:[%s3 + $0x50] sm:$0xff]
      %v373 = vld [vmem:[%s3 + $0x58] sm:$0xff]
      %v374 = vld [vmem:[%s3 + $0x60] sm:$0xff]
      %v375 = vld [vmem:[%s3 + $0x68] sm:$0xff]
      %v376 = vld [vmem:[%s3 + $0x70] sm:$0xff]
      %v377 = vld [vmem:[%s3 + $0x78] sm:$0xff]
      %v378 = vld [vmem:[%s3 + $0x80] sm:$0xff]
      %v379 = vld [vmem:[%s3 + $0x88] sm:$0xff]
      %v380 = vld [vmem:[%s3 + $0x90] sm:$0xff]
      %v381 = vld [vmem:[%s3 + $0x98] sm:$0xff]
      %v382 = vld [vmem:[%s3 + $0xa0] sm:$0xff]
      %v383 = vld [vmem:[%s3 + $0xa8] sm:$0xff]
      %v384 = vld [vmem:[%s3 + $0xb0] sm:$0xff]
      %v385 = vld [vmem:[%s3 + $0xb8] sm:$0xff]
      %v386 = vld [vmem:[%s3 + $0xc0] sm:$0xff]
      %v387 = vld [vmem:[%s3 + $0xc8] sm:$0xff]
      %v388 = vld [vmem:[%s3 + $0xd0] sm:$0xff]
      %v389 = vld [vmem:[%s3 + $0xd8] sm:$0xff]
      %v390 = vld [vmem:[%s3 + $0xe0] sm:$0xff]
      %v391 = vld [vmem:[%s3 + $0xe8] sm:$0xff]
      %v392 = vld [vmem:[%s3 + $0xf0] sm:$0xff]
      %v393 = vld [vmem:[%s3 + $0xf8] sm:$0xff]
      %v394 = vld [vmem:[%s4] sm:$0x1]
      %v396 = vlaneseq
      %v397 = vshrl.u32 %v396, 7
      %v398 = vsub.s32 0, %v397
      %v399 = vrot.slane %v394, %v398
      %401 = vmatprep.subr.mxu0 0.0
      %402 = vmatpush1.msra.mxu0 %v362
      %403 = vmatprep.subr.mxu0 0.0
      %404 = vmatpush1.msra.mxu0 %v363
      %405 = vmatprep.subr.mxu0 0.0
      %406 = vmatpush1.msra.mxu0 %v364
      %407 = vmatprep.subr.mxu0 0.0
      %408 = vmatpush1.msra.mxu0 %v365
      %409 = vmatprep.subr.mxu0 0.0
      %410 = vmatpush1.msra.mxu0 %v366
      %411 = vmatprep.subr.mxu0 0.0
      %412 = vmatpush1.msra.mxu0 %v367
      %413 = vmatprep.subr.mxu0 0.0
      %414 = vmatpush1.msra.mxu0 %v368
      %415 = vmatprep.subr.mxu0 0.0
      %416 = vmatpush1.msra.mxu0 %v369
      %417 = vmatprep.subr.mxu0 0.0
      %418 = vmatpush1.msra.mxu0 %v370
      %419 = vmatprep.subr.mxu0 0.0
      %420 = vmatpush1.msra.mxu0 %v371
      %421 = vmatprep.subr.mxu0 0.0
      %422 = vmatpush1.msra.mxu0 %v372
      %423 = vmatprep.subr.mxu0 0.0
      %424 = vmatpush1.msra.mxu0 %v373
      %425 = vmatprep.subr.mxu0 0.0
      %426 = vmatpush1.msra.mxu0 %v374
      %427 = vmatprep.subr.mxu0 0.0
      %428 = vmatpush1.msra.mxu0 %v375
      %429 = vmatprep.subr.mxu0 0.0
      %430 = vmatpush1.msra.mxu0 %v376
      %431 = vmatprep.subr.mxu0 0.0
      %432 = vmatpush1.msra.mxu0 %v377
      %433 = vmatprep.subr.mxu0 0.0
      %434 = vmatpush1.msra.mxu0 %v378
      %435 = vmatprep.subr.mxu0 0.0
      %436 = vmatpush1.msra.mxu0 %v379
      %437 = vmatprep.subr.mxu0 0.0
      %438 = vmatpush1.msra.mxu0 %v380
      %439 = vmatprep.subr.mxu0 0.0
      %440 = vmatpush1.msra.mxu0 %v381
      %441 = vmatprep.subr.mxu0 0.0
      %442 = vmatpush1.msra.mxu0 %v382
      %443 = vmatprep.subr.mxu0 0.0
      %444 = vmatpush1.msra.mxu0 %v383
      %445 = vmatprep.subr.mxu0 0.0
      %446 = vmatpush1.msra.mxu0 %v384
      %447 = vmatprep.subr.mxu0 0.0
      %448 = vmatpush1.msra.mxu0 %v385
      %449 = vmatprep.subr.mxu0 0.0
      %450 = vmatpush1.msra.mxu0 %v386
      %451 = vmatprep.subr.mxu0 0.0
      %452 = vmatpush1.msra.mxu0 %v387
      %453 = vmatprep.subr.mxu0 0.0
      %454 = vmatpush1.msra.mxu0 %v388
      %455 = vmatprep.subr.mxu0 0.0
      %456 = vmatpush1.msra.mxu0 %v389
      %457 = vmatprep.subr.mxu0 0.0
      %458 = vmatpush1.msra.mxu0 %v390
      %459 = vmatprep.subr.mxu0 0.0
      %460 = vmatpush1.msra.mxu0 %v391
      %461 = vmatprep.subr.mxu0 0.0
      %462 = vmatpush1.msra.mxu0 %v392
      %463 = vmatprep.subr.mxu0 0.0
      %464 = vmatpush1.msra.mxu0 %v393
      %465 = vmatprep.mubr.f32.mxu0 %v331
      %466 = vmatmul.mubr.f32.gmra.mrb[0].mxu0 %v330
      %v467 = vpop.f32.mrb[0].mxu0
      %v468 = vadd.f32 %v399, %v467
      %v469 = vpop.f32.mrb[0].mxu0
      %470 = vmatprep.mubr.f32.mxu0 %v333
      %471 = vmatmul.mubr.f32.gmra.mrb[0].mxu0 %v332
      %v472 = vpop.f32.mrb[0].mxu0
      %v473 = vadd.f32 %v399, %v472
      %v474 = vpop.f32.mrb[0].mxu0
      %475 = vmatprep.mubr.f32.mxu0 %v335
      %476 = vmatmul.mubr.f32.gmra.mrb[0].mxu0 %v334
      %v477 = vpop.f32.mrb[0].mxu0
      %v478 = vadd.f32 %v399, %v477
      %v479 = vpop.f32.mrb[0].mxu0
      %480 = vmatprep.mubr.f32.mxu0 %v337
      %481 = vmatmul.mubr.f32.gmra.mrb[0].mxu0 %v336
      %v482 = vpop.f32.mrb[0].mxu0
      %v483 = vadd.f32 %v399, %v482
      %v484 = vpop.f32.mrb[0].mxu0
      %485 = vmatprep.mubr.f32.mxu0 %v339
      %486 = vmatmul.mubr.f32.gmra.mrb[0].mxu0 %v338
      %v487 = vpop.f32.mrb[0].mxu0
      %v488 = vadd.f32 %v399, %v487
      %v489 = vpop.f32.mrb[0].mxu0
      %490 = vmatprep.mubr.f32.mxu0 %v341
      %491 = vmatmul.mubr.f32.gmra.mrb[0].mxu0 %v340
      %v492 = vpop.f32.mrb[0].mxu0
      %v493 = vadd.f32 %v399, %v492
      %v494 = vpop.f32.mrb[0].mxu0
      %495 = vmatprep.mubr.f32.mxu0 %v343
      %496 = vmatmul.mubr.f32.gmra.mrb[0].mxu0 %v342
      %v497 = vpop.f32.mrb[0].mxu0
      %v498 = vadd.f32 %v399, %v497
      %v499 = vpop.f32.mrb[0].mxu0
      %500 = vmatprep.mubr.f32.mxu0 %v345
      %501 = vmatmul.mubr.f32.gmra.mrb[0].mxu0 %v344
      %v502 = vpop.f32.mrb[0].mxu0
      %v503 = vadd.f32 %v399, %v502
      %v504 = vpop.f32.mrb[0].mxu0
      %505 = vmatprep.mubr.f32.mxu0 %v347
      %506 = vmatmul.mubr.f32.gmra.mrb[0].mxu0 %v346
      %v507 = vpop.f32.mrb[0].mxu0
      %v508 = vadd.f32 %v399, %v507
      %v509 = vpop.f32.mrb[0].mxu0
      %510 = vmatprep.mubr.f32.mxu0 %v349
      %511 = vmatmul.mubr.f32.gmra.mrb[0].mxu0 %v348
      %v512 = vpop.f32.mrb[0].mxu0
      %v513 = vadd.f32 %v399, %v512
      %v514 = vpop.f32.mrb[0].mxu0
      %515 = vmatprep.mubr.f32.mxu0 %v351
      %516 = vmatmul.mubr.f32.gmra.mrb[0].mxu0 %v350
      %v517 = vpop.f32.mrb[0].mxu0
      %v518 = vadd.f32 %v399, %v517
      %v519 = vpop.f32.mrb[0].mxu0
      %520 = vmatprep.mubr.f32.mxu0 %v353
      %521 = vmatmul.mubr.f32.gmra.mrb[0].mxu0 %v352
      %v522 = vpop.f32.mrb[0].mxu0
      %v523 = vadd.f32 %v399, %v522
      %v524 = vpop.f32.mrb[0].mxu0
      %525 = vmatprep.mubr.f32.mxu0 %v355
      %526 = vmatmul.mubr.f32.gmra.mrb[0].mxu0 %v354
      %v527 = vpop.f32.mrb[0].mxu0
      %v528 = vadd.f32 %v399, %v527
      %v529 = vpop.f32.mrb[0].mxu0
      %530 = vmatprep.mubr.f32.mxu0 %v357
      %531 = vmatmul.mubr.f32.gmra.mrb[0].mxu0 %v356
      %v532 = vpop.f32.mrb[0].mxu0
      %v533 = vadd.f32 %v399, %v532
      %v534 = vpop.f32.mrb[0].mxu0
      %535 = vmatprep.mubr.f32.mxu0 %v359
      %536 = vmatmul.mubr.f32.gmra.mrb[0].mxu0 %v358
      %v537 = vpop.f32.mrb[0].mxu0
      %v538 = vadd.f32 %v399, %v537
      %v539 = vpop.f32.mrb[0].mxu0
      %540 = vmatprep.mubr.f32.mxu0 %v361
      %541 = vmatmul.mubr.f32.gmra.mrb[0].mxu0 %v360
      %v542 = vpop.f32.mrb[0].mxu0
      %v543 = vadd.f32 %v399, %v542
      %v544 = vpop.f32.mrb[0].mxu0
      %545 = vdwg.mxu0
      %546 = vst [vmem:[%s282] sm:$0xff] %v468
      %547 = vst [vmem:[%s282 + $0x8] sm:$0xff] %v473
      %548 = vst [vmem:[%s282 + $0x10] sm:$0xff] %v478
      %549 = vst [vmem:[%s282 + $0x18] sm:$0xff] %v483
      %550 = vst [vmem:[%s282 + $0x20] sm:$0xff] %v488
      %551 = vst [vmem:[%s282 + $0x28] sm:$0xff] %v493
      %552 = vst [vmem:[%s282 + $0x30] sm:$0xff] %v498
      %553 = vst [vmem:[%s282 + $0x38] sm:$0xff] %v503
      %554 = vst [vmem:[%s282 + $0x40] sm:$0xff] %v508
      %555 = vst [vmem:[%s282 + $0x48] sm:$0xff] %v513
      %556 = vst [vmem:[%s282 + $0x50] sm:$0xff] %v518
      %557 = vst [vmem:[%s282 + $0x58] sm:$0xff] %v523
      %558 = vst [vmem:[%s282 + $0x60] sm:$0xff] %v528
      %559 = vst [vmem:[%s282 + $0x68] sm:$0xff] %v533
      %560 = vst [vmem:[%s282 + $0x70] sm:$0xff] %v538
      %561 = vst [vmem:[%s282 + $0x78] sm:$0xff] %v543
      %s562 = smul.u32 16, %s21
      %p563 = scmp.lt.s32.totalorder %s20, 1
      %s564 = scalar_select %p563, %s20, 1
      %p565 = scmp.lt.s32.totalorder %s562, 31
      %s566 = scalar_select %p565, %s562, 31
      %s567 = smul.addr %s564, 32
      %s568 = sadd.s32 %s566, %s567
      %s569 = smul.addr %s568, 8
      %s570 = scalar_lea.vmem %s5, %s569
      // Predicated region
      $region41: #{mlp_forward.5} parent=39 // pred_check
        %p571 = pneg %p165
      $region42: #{mlp_forward.5} parent=39 // pred_check_branch
        %573 = sbr.rel (%p571) target = $region44
      $region43: #{mlp_forward.5} parent=39 // pred_region
        %s574 = smul.u32 16, %s21
      $region44: #{mlp_forward.5} parent=39 // pred_fallthru
        _
    $region40: #{mlp_forward.5} parent=5 // pred_fallthru
      _
    %p575 = scmp.le.s32.totalorder 2, %s11
    // Predicated region
    $region45: #{mlp_forward.5} parent=5 // pred_check
      %p576 = pneg %p575
    $region46: #{mlp_forward.5} parent=5 // pred_check_branch
      %578 = sbr.rel (%p576) target = $region48
    $region47: #{mlp_forward.5} parent=5 // pred_region
      %s579 = ssub.s32 %s11, 2
      // Predicated region
      $region49: #{mlp_forward.5} parent=47 // pred_check
        %p580 = pneg %p171
      $region50: #{mlp_forward.5} parent=47 // pred_check_branch
        %582 = sbr.rel (%p580) target = $region52
      $region51: #{mlp_forward.5} parent=47 // pred_region
        %s583 = smul.u32 16, %s23
        %p584 = scmp.lt.s32.totalorder %s22, 1
        %s585 = scalar_select %p584, %s22, 1
        %p586 = scmp.lt.s32.totalorder %s583, 31
        %s587 = scalar_select %p586, %s583, 31
        %s588 = smul.addr %s585, 32
        %s589 = sadd.s32 %s587, %s588
        %s590 = smul.addr %s589, 8
        %s591 = scalar_lea.vmem %s5, %s590
      $region52: #{mlp_forward.5} parent=47 // pred_fallthru
        _
    $region48: #{mlp_forward.5} parent=5 // pred_fallthru
      _
  $region6: #{mlp_forward.5} parent=0 // loop_footer
    %s15 = sadd.s32 1, %s11
  $region7: #{mlp_forward.5} parent=0 // loop_footer_branch
    %10 = sbr.rel target = $region3
  $region8: #{mlp_forward.5} parent=0 // loop_exit
    _

// kernel: mlp_forward.4
$region0: #{mlp_forward.4}
  #allocation0 [shape = 'u32[]', space=smem, size = 0x4, offset = 0x4, fixed_abs, tag = 'smem constant byte address 0x4 - core index']
  #allocation1 [shape = 'u32[144,128]{1,0:T(1,128)}', space=vmem, size = 0x12000, scoped, tag = 'internal scratch']
  #allocation2 [shape = 'f32[18,18,128]{2,1,0:T(8,128)}', space=vmem, size = 0x36000, scoped, tag = 'scratch operand']
  %s0 = inlined_call_operand.vmem [shape: f32[2,16,16,256], index: 0, kind: input, shape index: {}]
  %s1 = inlined_call_operand.vmem [shape: f32[9,256], index: 1, kind: input, shape index: {}]
  %s2 = inlined_call_operand.vmem [shape: f32[1,256], index: 2, kind: input, shape index: {}]
  %s3 = inlined_call_operand.vmem [shape: f32[2,16,16,256], index: 3, kind: output, shape index: {0}]
  %s4 = inlined_call_operand.vmem [shape: f32[2,1,256], index: 4, kind: output, shape index: {1}]
  %5 = xla_tuple %s3, %s4
  %s6 = sld [smem:[#allocation0]]
  $region170: #{mlp_forward.4} parent=0
    _
  %s8 = ssub.s32 1, %s6
  %s9 = scalar_select 0, %s8, %s6
  $region1: #{mlp_forward.4} parent=0
    #allocation3 [shape = 'u8[262144]{0}', space=vmem, size = 0x40000, scoped, tag = 'input window, operand 0']
    #allocation4 [shape = 'u8[16384]{0}', space=vmem, size = 0x4000, scoped, tag = 'input window, operand 1']
    #allocation5 [shape = 'u8[262144]{0}', space=vmem, size = 0x40000, scoped, tag = 'output window, operand 0']
    loop: start=0, step=1, limit=6
    $region2: #{mlp_forward.4} parent=1 // loop_pre_header
      _
    $region3: #{mlp_forward.4} parent=1 // loop_header
      %s11 = sphi 0, %s15
      %p12 = scmp.ge.s32.totalorder %s11, 6
      %s18 = sphi 0, %s30
      %s19 = sphi 0, %s26
      %s20 = sphi 0, %s18
      %s21 = sphi 0, %s19
      %s22 = sphi 0, %s20
      %s23 = sphi 0, %s21
      %s35 = sphi 0, %s37
      %s38 = sphi 0, %s35
      %s39 = sphi 0, %s38
      %s55 = sphi 0, %s39
      %s61 = sphi 0, %s63
      %s64 = sphi 0, %s61
      %s65 = sphi 0, %s64
      %s81 = sphi 0, %s65
      %s87 = sphi 0, %s89
      %s90 = sphi 0, %s87
      %s91 = sphi 0, %s90
      %s107 = sphi 0, %s91
      %s115 = sphi 0, %s117
      %s118 = sphi 0, %s115
      %s119 = sphi 0, %s118
      %s135 = sphi 0, %s119
      %s143 = sphi 0, %s145
      %s146 = sphi 0, %s143
      %s147 = sphi 0, %s146
      %s163 = sphi 0, %s147
    $region4: #{mlp_forward.4} parent=1 // loop_header_branch
      %14 = sbr.rel (%p12) target = $region8
    $region5: #{mlp_forward.4} parent=1 // loop_body
      %s16 = ssub.s32 %s11, 1
      %s17 = ssub.s32 %s11, 2
      %s24 = sadd.s32 1, %s19
      %p25 = scmp.ge.s32.totalorder %s24, 2
      %s26 = scalar_select %p25, 0, %s24
      %s27 = sadd.s32 1, %s18
      %s28 = scalar_select %p25, %s27, %s18
      %p29 = scmp.ge.s32.totalorder %s28, 2
      %s30 = scalar_select %p29, 0, %s28
      %s31 = ssub.s32 %s18, %s30
      %s32 = ssub.s32 %s19, %s26
      %s33 = sor.u32 %s31, %s32
      %p34 = scmp.eq.s32.totalorder %s33, 0
      %s36 = sadd.s32 %s35, 1
      %s37 = scalar_select %p34, %s35, %s36
      %p40 = pneg %p34
      %p41 = scmp.eq.s32.totalorder %s11, 3
      %p42 = por %p40, %p41
      %p43 = scmp.ne.s32.totalorder %s35, %s38
      %p44 = scmp.eq.s32.totalorder %s11, 0
      %p45 = por %p43, %p44
      %p46 = scmp.ne.s32.totalorder %s35, %s38
      %p47 = scmp.eq.s32.totalorder %s16, 3
      %p48 = por %p46, %p47
      %p49 = scmp.ne.s32.totalorder %s38, %s39
      %p50 = scmp.eq.s32.totalorder %s16, 0
      %p51 = por %p49, %p50
      %p52 = scmp.ne.s32.totalorder %s38, %s39
      %p53 = scmp.eq.s32.totalorder %s17, 3
      %p54 = por %p52, %p53
      %p56 = scmp.ne.s32.totalorder %s39, %s55
      %p57 = scmp.eq.s32.totalorder %s17, 0
      %p58 = por %p56, %p57
      %s59 = ssub.s32 %s19, %s26
      %p60 = scmp.eq.s32.totalorder %s59, 0
      %s62 = sadd.s32 %s61, 1
      %s63 = scalar_select %p60, %s61, %s62
      %p66 = pneg %p60
      %p67 = scmp.eq.s32.totalorder %s11, 3
      %p68 = por %p66, %p67
      %p69 = scmp.ne.s32.totalorder %s61, %s64
      %p70 = scmp.eq.s32.totalorder %s11, 0
      %p71 = por %p69, %p70
      %p72 = scmp.ne.s32.totalorder %s61, %s64
      %p73 = scmp.eq.s32.totalorder %s16, 3
      %p74 = por %p72, %p73
      %p75 = scmp.ne.s32.totalorder %s64, %s65
      %p76 = scmp.eq.s32.totalorder %s16, 0
      %p77 = por %p75, %p76
      %p78 = scmp.ne.s32.totalorder %s64, %s65
      %p79 = scmp.eq.s32.totalorder %s17, 3
      %p80 = por %p78, %p79
      %p82 = scmp.ne.s32.totalorder %s65, %s81
      %p83 = scmp.eq.s32.totalorder %s17, 0
      %p84 = por %p82, %p83
      %s85 = ssub.s32 %s19, %s26
      %p86 = scmp.eq.s32.totalorder %s85, 0
      %s88 = sadd.s32 %s87, 1
      %s89 = scalar_select %p86, %s87, %s88
      %p92 = pneg %p86
      %p93 = scmp.eq.s32.totalorder %s11, 3
      %p94 = por %p92, %p93
      %p95 = scmp.ne.s32.totalorder %s87, %s90
      %p96 = scmp.eq.s32.totalorder %s11, 0
      %p97 = por %p95, %p96
      %p98 = scmp.ne.s32.totalorder %s87, %s90
      %p99 = scmp.eq.s32.totalorder %s16, 3
      %p100 = por %p98, %p99
      %p101 = scmp.ne.s32.totalorder %s90, %s91
      %p102 = scmp.eq.s32.totalorder %s16, 0
      %p103 = por %p101, %p102
      %p104 = scmp.ne.s32.totalorder %s90, %s91
      %p105 = scmp.eq.s32.totalorder %s17, 3
      %p106 = por %p104, %p105
      %p108 = scmp.ne.s32.totalorder %s91, %s107
      %p109 = scmp.eq.s32.totalorder %s17, 0
      %p110 = por %p108, %p109
      %s111 = ssub.s32 %s18, %s30
      %s112 = ssub.s32 %s19, %s26
      %s113 = sor.u32 %s111, %s112
      %p114 = scmp.eq.s32.totalorder %s113, 0
      %s116 = sadd.s32 %s115, 1
      %s117 = scalar_select %p114, %s115, %s116
      %p120 = pneg %p114
      %p121 = scmp.eq.s32.totalorder %s11, 3
      %p122 = por %p120, %p121
      %p123 = scmp.ne.s32.totalorder %s115, %s118
      %p124 = scmp.eq.s32.totalorder %s11, 0
      %p125 = por %p123, %p124
      %p126 = scmp.ne.s32.totalorder %s115, %s118
      %p127 = scmp.eq.s32.totalorder %s16, 3
      %p128 = por %p126, %p127
      %p129 = scmp.ne.s32.totalorder %s118, %s119
      %p130 = scmp.eq.s32.totalorder %s16, 0
      %p131 = por %p129, %p130
      %p132 = scmp.ne.s32.totalorder %s118, %s119
      %p133 = scmp.eq.s32.totalorder %s17, 3
      %p134 = por %p132, %p133
      %p136 = scmp.ne.s32.totalorder %s119, %s135
      %p137 = scmp.eq.s32.totalorder %s17, 0
      %p138 = por %p136, %p137
      %s139 = ssub.s32 %s18, %s30
      %s140 = ssub.s32 %s19, %s26
      %s141 = sor.u32 %s139, %s140
      %p142 = scmp.eq.s32.totalorder %s141, 0
      %s144 = sadd.s32 %s143, 1
      %s145 = scalar_select %p142, %s143, %s144
      %p148 = pneg %p142
      %p149 = scmp.eq.s32.totalorder %s11, 3
      %p150 = por %p148, %p149
      %p151 = scmp.ne.s32.totalorder %s143, %s146
      %p152 = scmp.eq.s32.totalorder %s11, 0
      %p153 = por %p151, %p152
      %p154 = scmp.ne.s32.totalorder %s143, %s146
      %p155 = scmp.eq.s32.totalorder %s16, 3
      %p156 = por %p154, %p155
      %p157 = scmp.ne.s32.totalorder %s146, %s147
      %p158 = scmp.eq.s32.totalorder %s16, 0
      %p159 = por %p157, %p158
      %p160 = scmp.ne.s32.totalorder %s146, %s147
      %p161 = scmp.eq.s32.totalorder %s17, 3
      %p162 = por %p160, %p161
      %p164 = scmp.ne.s32.totalorder %s147, %s163
      %p165 = scmp.eq.s32.totalorder %s17, 0
      %p166 = por %p164, %p165
      %p167 = scmp.le.s32.totalorder 1, %s11
      %p168 = scmp.lt.s32.totalorder %s11, 5
      %p169 = pnand %p167, %p168
      %p170 = pneg %p169
      // Predicated region
      $region9: #{mlp_forward.4} parent=5 // pred_check
        _
      $region10: #{mlp_forward.4} parent=5 // pred_check_branch
        %172 = sbr.rel (%p169) target = $region12
      $region11: #{mlp_forward.4} parent=5 // pred_region
        %s173 = ssub.s32 %s11, 1
      $region12: #{mlp_forward.4} parent=5 // pred_fallthru
        _
      %p174 = scmp.lt.s32.totalorder %s11, 4
      // Predicated region
      $region13: #{mlp_forward.4} parent=5 // pred_check
        %p175 = pneg %p174
      $region14: #{mlp_forward.4} parent=5 // pred_check_branch
        %177 = sbr.rel (%p175) target = $region16
      $region15: #{mlp_forward.4} parent=5 // pred_region
        // Predicated region
        $region17: #{mlp_forward.4} parent=15 // pred_check
          %p178 = pneg %p45
        $region18: #{mlp_forward.4} parent=15 // pred_check_branch
          %180 = sbr.rel (%p178) target = $region20
        $region19: #{mlp_forward.4} parent=15 // pred_region
          %s181 = sand.u32 %s35, 1
          %s182 = sand.u32 %s35, 1
          %s183 = smul.addr %s182, 256
          %s184 = scalar_lea.vmem [#allocation3], %s183
          %s185 = smul.addr %s18, 64
          %s186 = sadd.s32 %s19, %s185
          %s187 = smul.addr %s186, 8
          %s188 = scalar_lea.vmem %s0, %s187
          // Predicated region
          $region21: #{mlp_forward.4} parent=19 // pred_check
            _
          $region22: #{mlp_forward.4} parent=19 // pred_check_branch
            %190 = sbr.rel (0) target = $region24
          $region23: #{mlp_forward.4} parent=19 // pred_region
            // Predicated region
            $region25: #{mlp_forward.4} parent=23 // pred_check
              _
            $region26: #{mlp_forward.4} parent=23 // pred_check_branch
              %192 = sbr.rel (0) target = $region28
            $region27: #{mlp_forward.4} parent=23 // pred_region
              // Predicated region
              $region40: #{mlp_forward.4} parent=27 // pred_check
                _
              $region41: #{mlp_forward.4} parent=27 // pred_check_branch
                %269 = sbr.rel (0) target = $region43
              $region42: #{mlp_forward.4} parent=27 // pred_region
                loop: start=0, step=1, limit=1
                $region44: #{mlp_forward.4} parent=42 // loop_pre_header
                  _
                $region45: #{mlp_forward.4} parent=42 // loop_header
                  %s271 = sphi 0, %s275
                  %p272 = scmp.ge.s32.totalorder %s271, 1
                  %s276 = sphi %s188, %s188
                  %s277 = sphi %s184, %s184
                $region46: #{mlp_forward.4} parent=42 // loop_header_branch
                  %274 = sbr.rel (%p272) target = $region50
                $region47: #{mlp_forward.4} parent=42 // loop_body
                  %v278 = vld [vmem:[%s276] sm:$0xff]
                  %279 = vst [vmem:[%s277] sm:$0xff] %v278
                  %v280 = vld [vmem:[%s276 + $0x10] sm:$0xff]
                  %281 = vst [vmem:[%s277 + $0x8] sm:$0xff] %v280
                  %v282 = vld [vmem:[%s276 + $0x20] sm:$0xff]
                  %283 = vst [vmem:[%s277 + $0x10] sm:$0xff] %v282
                  %v284 = vld [vmem:[%s276 + $0x30] sm:$0xff]
                  %285 = vst [vmem:[%s277 + $0x18] sm:$0xff] %v284
                  %v286 = vld [vmem:[%s276 + $0x40] sm:$0xff]
                  %287 = vst [vmem:[%s277 + $0x20] sm:$0xff] %v286
                  %v288 = vld [vmem:[%s276 + $0x50] sm:$0xff]
                  %289 = vst [vmem:[%s277 + $0x28] sm:$0xff] %v288
                  %v290 = vld [vmem:[%s276 + $0x60] sm:$0xff]
                  %291 = vst [vmem:[%s277 + $0x30] sm:$0xff] %v290
                  %v292 = vld [vmem:[%s276 + $0x70] sm:$0xff]
                  %293 = vst [vmem:[%s277 + $0x38] sm:$0xff] %v292
                  %v294 = vld [vmem:[%s276 + $0x80] sm:$0xff]
                  %295 = vst [vmem:[%s277 + $0x40] sm:$0xff] %v294
                  %v296 = vld [vmem:[%s276 + $0x90] sm:$0xff]
                  %297 = vst [vmem:[%s277 + $0x48] sm:$0xff] %v296
                  %v298 = vld [vmem:[%s276 + $0xa0] sm:$0xff]
                  %299 = vst [vmem:[%s277 + $0x50] sm:$0xff] %v298
                  %v300 = vld [vmem:[%s276 + $0xb0] sm:$0xff]
                  %301 = vst [vmem:[%s277 + $0x58] sm:$0xff] %v300
                  %v302 = vld [vmem:[%s276 + $0xc0] sm:$0xff]
                  %303 = vst [vmem:[%s277 + $0x60] sm:$0xff] %v302
                  %v304 = vld [vmem:[%s276 + $0xd0] sm:$0xff]
                  %305 = vst [vmem:[%s277 + $0x68] sm:$0xff] %v304
                  %v306 = vld [vmem:[%s276 + $0xe0] sm:$0xff]
                  %307 = vst [vmem:[%s277 + $0x70] sm:$0xff] %v306
                  %v308 = vld [vmem:[%s276 + $0xf0] sm:$0xff]
                  %309 = vst [vmem:[%s277 + $0x78] sm:$0xff] %v308
                  %v310 = vld [vmem:[%s276 + $0x100] sm:$0xff]
                  %311 = vst [vmem:[%s277 + $0x80] sm:$0xff] %v310
                  %v312 = vld [vmem:[%s276 + $0x110] sm:$0xff]
                  %313 = vst [vmem:[%s277 + $0x88] sm:$0xff] %v312
                  %v314 = vld [vmem:[%s276 + $0x120] sm:$0xff]
                  %315 = vst [vmem:[%s277 + $0x90] sm:$0xff] %v314
                  %v316 = vld [vmem:[%s276 + $0x130] sm:$0xff]
                  %317 = vst [vmem:[%s277 + $0x98] sm:$0xff] %v316
                  %v318 = vld [vmem:[%s276 + $0x140] sm:$0xff]
                  %319 = vst [vmem:[%s277 + $0xa0] sm:$0xff] %v318
                  %v320 = vld [vmem:[%s276 + $0x150] sm:$0xff]
                  %321 = vst [vmem:[%s277 + $0xa8] sm:$0xff] %v320
                  %v322 = vld [vmem:[%s276 + $0x160] sm:$0xff]
                  %323 = vst [vmem:[%s277 + $0xb0] sm:$0xff] %v322
                  %v324 = vld [vmem:[%s276 + $0x170] sm:$0xff]
                  %325 = vst [vmem:[%s277 + $0xb8] sm:$0xff] %v324
                  %v326 = vld [vmem:[%s276 + $0x180] sm:$0xff]
                  %327 = vst [vmem:[%s277 + $0xc0] sm:$0xff] %v326
                  %v328 = vld [vmem:[%s276 + $0x190] sm:$0xff]
                  %329 = vst [vmem:[%s277 + $0xc8] sm:$0xff] %v328
                  %v330 = vld [vmem:[%s276 + $0x1a0] sm:$0xff]
                  %331 = vst [vmem:[%s277 + $0xd0] sm:$0xff] %v330
                  %v332 = vld [vmem:[%s276 + $0x1b0] sm:$0xff]
                  %333 = vst [vmem:[%s277 + $0xd8] sm:$0xff] %v332
                  %v334 = vld [vmem:[%s276 + $0x1c0] sm:$0xff]
                  %335 = vst [vmem:[%s277 + $0xe0] sm:$0xff] %v334
                  %v336 = vld [vmem:[%s276 + $0x1d0] sm:$0xff]
                  %337 = vst [vmem:[%s277 + $0xe8] sm:$0xff] %v336
                  %v338 = vld [vmem:[%s276 + $0x1e0] sm:$0xff]
                  %339 = vst [vmem:[%s277 + $0xf0] sm:$0xff] %v338
                  %v340 = vld [vmem:[%s276 + $0x1f0] sm:$0xff]
                  %341 = vst [vmem:[%s277 + $0xf8] sm:$0xff] %v340
                $region48: #{mlp_forward.4} parent=42 // loop_footer
                  %s275 = sadd.s32 1, %s271
                $region49: #{mlp_forward.4} parent=42 // loop_footer_branch
                  %270 = sbr.rel target = $region45
                $region50: #{mlp_forward.4} parent=42 // loop_exit
                  _
              $region43: #{mlp_forward.4} parent=27 // pred_fallthru
                _
              // Predicated region
              $region51: #{mlp_forward.4} parent=27 // pred_check
                _
              $region52: #{mlp_forward.4} parent=27 // pred_check_branch
                %343 = sbr.rel target = $region54
              $region53: #{mlp_forward.4} parent=27 // pred_region
                _
              $region54: #{mlp_forward.4} parent=27 // pred_fallthru
                _
            $region28: #{mlp_forward.4} parent=23 // pred_fallthru
              _
            // Predicated region
            $region29: #{mlp_forward.4} parent=23 // pred_check
              _
            $region30: #{mlp_forward.4} parent=23 // pred_check_branch
              %194 = sbr.rel target = $region32
            $region31: #{mlp_forward.4} parent=23 // pred_region
              loop: start=0, step=1, limit=1
              $region33: #{mlp_forward.4} parent=31 // loop_pre_header
                _
              $region34: #{mlp_forward.4} parent=31 // loop_header
                %s197 = sphi 0, %s201
                %p198 = scmp.ge.s32.totalorder %s197, 1
                %s202 = sphi %s188, %s188
                %s203 = sphi %s184, %s184
              $region35: #{mlp_forward.4} parent=31 // loop_header_branch
                %200 = sbr.rel (%p198) target = $region39
              $region36: #{mlp_forward.4} parent=31 // loop_body
                %v204 = vld [vmem:[%s202] sm:$0xff]
                %205 = vst [vmem:[%s203] sm:$0xff] %v204
                %v206 = vld [vmem:[%s202 + $0x10] sm:$0xff]
                %207 = vst [vmem:[%s203 + $0x8] sm:$0xff] %v206
                %v208 = vld [vmem:[%s202 + $0x20] sm:$0xff]
                %209 = vst [vmem:[%s203 + $0x10] sm:$0xff] %v208
                %v210 = vld [vmem:[%s202 + $0x30] sm:$0xff]
                %211 = vst [vmem:[%s203 + $0x18] sm:$0xff] %v210
                %v212 = vld [vmem:[%s202 + $0x40] sm:$0xff]
                %213 = vst [vmem:[%s203 + $0x20] sm:$0xff] %v212
                %v214 = vld [vmem:[%s202 + $0x50] sm:$0xff]
                %215 = vst [vmem:[%s203 + $0x28] sm:$0xff] %v214
                %v216 = vld [vmem:[%s202 + $0x60] sm:$0xff]
                %217 = vst [vmem:[%s203 + $0x30] sm:$0xff] %v216
                %v218 = vld [vmem:[%s202 + $0x70] sm:$0xff]
                %219 = vst [vmem:[%s203 + $0x38] sm:$0xff] %v218
                %v220 = vld [vmem:[%s202 + $0x80] sm:$0xff]
                %221 = vst [vmem:[%s203 + $0x40] sm:$0xff] %v220
                %v222 = vld [vmem:[%s202 + $0x90] sm:$0xff]
                %223 = vst [vmem:[%s203 + $0x48] sm:$0xff] %v222
                %v224 = vld [vmem:[%s202 + $0xa0] sm:$0xff]
                %225 = vst [vmem:[%s203 + $0x50] sm:$0xff] %v224
                %v226 = vld [vmem:[%s202 + $0xb0] sm:$0xff]
                %227 = vst [vmem:[%s203 + $0x58] sm:$0xff] %v226
                %v228 = vld [vmem:[%s202 + $0xc0] sm:$0xff]
                %229 = vst [vmem:[%s203 + $0x60] sm:$0xff] %v228
                %v230 = vld [vmem:[%s202 + $0xd0] sm:$0xff]
                %231 = vst [vmem:[%s203 + $0x68] sm:$0xff] %v230
                %v232 = vld [vmem:[%s202 + $0xe0] sm:$0xff]
                %233 = vst [vmem:[%s203 + $0x70] sm:$0xff] %v232
                %v234 = vld [vmem:[%s202 + $0xf0] sm:$0xff]
                %235 = vst [vmem:[%s203 + $0x78] sm:$0xff] %v234
                %v236 = vld [vmem:[%s202 + $0x100] sm:$0xff]
                %237 = vst [vmem:[%s203 + $0x80] sm:$0xff] %v236
                %v238 = vld [vmem:[%s202 + $0x110] sm:$0xff]
                %239 = vst [vmem:[%s203 + $0x88] sm:$0xff] %v238
                %v240 = vld [vmem:[%s202 + $0x120] sm:$0xff]
                %241 = vst [vmem:[%s203 + $0x90] sm:$0xff] %v240
                %v242 = vld [vmem:[%s202 + $0x130] sm:$0xff]
                %243 = vst [vmem:[%s203 + $0x98] sm:$0xff] %v242
                %v244 = vld [vmem:[%s202 + $0x140] sm:$0xff]
                %245 = vst [vmem:[%s203 + $0xa0] sm:$0xff] %v244
                %v246 = vld [vmem:[%s202 + $0x150] sm:$0xff]
                %247 = vst [vmem:[%s203 + $0xa8] sm:$0xff] %v246
                %v248 = vld [vmem:[%s202 + $0x160] sm:$0xff]
                %249 = vst [vmem:[%s203 + $0xb0] sm:$0xff] %v248
                %v250 = vld [vmem:[%s202 + $0x170] sm:$0xff]
                %251 = vst [vmem:[%s203 + $0xb8] sm:$0xff] %v250
                %v252 = vld [vmem:[%s202 + $0x180] sm:$0xff]
                %253 = vst [vmem:[%s203 + $0xc0] sm:$0xff] %v252
                %v254 = vld [vmem:[%s202 + $0x190] sm:$0xff]
                %255 = vst [vmem:[%s203 + $0xc8] sm:$0xff] %v254
                %v256 = vld [vmem:[%s202 + $0x1a0] sm:$0xff]
                %257 = vst [vmem:[%s203 + $0xd0] sm:$0xff] %v256
                %v258 = vld [vmem:[%s202 + $0x1b0] sm:$0xff]
                %259 = vst [vmem:[%s203 + $0xd8] sm:$0xff] %v258
                %v260 = vld [vmem:[%s202 + $0x1c0] sm:$0xff]
                %261 = vst [vmem:[%s203 + $0xe0] sm:$0xff] %v260
                %v262 = vld [vmem:[%s202 + $0x1d0] sm:$0xff]
                %263 = vst [vmem:[%s203 + $0xe8] sm:$0xff] %v262
                %v264 = vld [vmem:[%s202 + $0x1e0] sm:$0xff]
                %265 = vst [vmem:[%s203 + $0xf0] sm:$0xff] %v264
                %v266 = vld [vmem:[%s202 + $0x1f0] sm:$0xff]
                %267 = vst [vmem:[%s203 + $0xf8] sm:$0xff] %v266
              $region37: #{mlp_forward.4} parent=31 // loop_footer
                %s201 = sadd.s32 1, %s197
              $region38: #{mlp_forward.4} parent=31 // loop_footer_branch
                %196 = sbr.rel target = $region34
              $region39: #{mlp_forward.4} parent=31 // loop_exit
                _
            $region32: #{mlp_forward.4} parent=23 // pred_fallthru
              _
          $region24: #{mlp_forward.4} parent=19 // pred_fallthru
            _
          %344 = vnop
        $region20: #{mlp_forward.4} parent=15 // pred_fallthru
          _
        // Predicated region
        $region55: #{mlp_forward.4} parent=15 // pred_check
          %p345 = pneg %p71
        $region56: #{mlp_forward.4} parent=15 // pred_check_branch
          %347 = sbr.rel (%p345) target = $region58
        $region57: #{mlp_forward.4} parent=15 // pred_region
          %s348 = sand.u32 %s61, 1
          %s349 = sand.u32 %s61, 1
          %s350 = smul.addr %s349, 16
          %s351 = scalar_lea.vmem [#allocation4], %s350
          %s352 = smul.addr %s19, 8
          %s353 = scalar_lea.vmem %s1, %s352
          // Predicated region
          $region59: #{mlp_forward.4} parent=57 // pred_check
            _
          $region60: #{mlp_forward.4} parent=57 // pred_check_branch
            %355 = sbr.rel (0) target = $region62
          $region61: #{mlp_forward.4} parent=57 // pred_region
            // Predicated region
            $region63: #{mlp_forward.4} parent=61 // pred_check
              _
            $region64: #{mlp_forward.4} parent=61 // pred_check_branch
              %357 = sbr.rel (0) target = $region66
            $region65: #{mlp_forward.4} parent=61 // pred_region
              // Predicated region
              $region78: #{mlp_forward.4} parent=65 // pred_check
                _
              $region79: #{mlp_forward.4} parent=65 // pred_check_branch
                %374 = sbr.rel (0) target = $region81
              $region80: #{mlp_forward.4} parent=65 // pred_region
                loop: start=0, step=1, limit=1
                $region82: #{mlp_forward.4} parent=80 // loop_pre_header
                  _
                $region83: #{mlp_forward.4} parent=80 // loop_header
                  %s376 = sphi 0, %s380
                  %p377 = scmp.ge.s32.totalorder %s376, 1
                  %s381 = sphi %s353, %s353
                  %s382 = sphi %s351, %s351
                $region84: #{mlp_forward.4} parent=80 // loop_header_branch
                  %379 = sbr.rel (%p377) target = $region88
                $region85: #{mlp_forward.4} parent=80 // loop_body
                  %v383 = vld [vmem:[%s381] sm:$0xff]
                  %384 = vst [vmem:[%s382] sm:$0xff] %v383
                  %v385 = vld [vmem:[%s381 + $0x10] sm:$0xff]
                  %386 = vst [vmem:[%s382 + $0x8] sm:$0xff] %v385
                $region86: #{mlp_forward.4} parent=80 // loop_footer
                  %s380 = sadd.s32 1, %s376
                $region87: #{mlp_forward.4} parent=80 // loop_footer_branch
                  %375 = sbr.rel target = $region83
                $region88: #{mlp_forward.4} parent=80 // loop_exit
                  _
              $region81: #{mlp_forward.4} parent=65 // pred_fallthru
                _
              // Predicated region
              $region89: #{mlp_forward.4} parent=65 // pred_check
                _
              $region90: #{mlp_forward.4} parent=65 // pred_check_branch
                %388 = sbr.rel target = $region92
              $region91: #{mlp_forward.4} parent=65 // pred_region
                _
              $region92: #{mlp_forward.4} parent=65 // pred_fallthru
                _
            $region66: #{mlp_forward.4} parent=61 // pred_fallthru
              _
            // Predicated region
            $region67: #{mlp_forward.4} parent=61 // pred_check
              _
            $region68: #{mlp_forward.4} parent=61 // pred_check_branch
              %359 = sbr.rel target = $region70
            $region69: #{mlp_forward.4} parent=61 // pred_region
              loop: start=0, step=1, limit=1
              $region71: #{mlp_forward.4} parent=69 // loop_pre_header
                _
              $region72: #{mlp_forward.4} parent=69 // loop_header
                %s362 = sphi 0, %s366
                %p363 = scmp.ge.s32.totalorder %s362, 1
                %s367 = sphi %s353, %s353
                %s368 = sphi %s351, %s351
              $region73: #{mlp_forward.4} parent=69 // loop_header_branch
                %365 = sbr.rel (%p363) target = $region77
              $region74: #{mlp_forward.4} parent=69 // loop_body
                %v369 = vld [vmem:[%s367] sm:$0xff]
                %370 = vst [vmem:[%s368] sm:$0xff] %v369
                %v371 = vld [vmem:[%s367 + $0x10] sm:$0xff]
                %372 = vst [vmem:[%s368 + $0x8] sm:$0xff] %v371
              $region75: #{mlp_forward.4} parent=69 // loop_footer
                %s366 = sadd.s32 1, %s362
              $region76: #{mlp_forward.4} parent=69 // loop_footer_branch
                %361 = sbr.rel target = $region72
              $region77: #{mlp_forward.4} parent=69 // loop_exit
                _
            $region70: #{mlp_forward.4} parent=61 // pred_fallthru
              _
          $region62: #{mlp_forward.4} parent=57 // pred_fallthru
            _
          %389 = vnop
        $region58: #{mlp_forward.4} parent=15 // pred_fallthru
          _
        // Predicated region
        $region93: #{mlp_forward.4} parent=15 // pred_check
          %p390 = pneg %p97
        $region94: #{mlp_forward.4} parent=15 // pred_check_branch
          %392 = sbr.rel (%p390) target = $region96
        $region95: #{mlp_forward.4} parent=15 // pred_region
          %p393 = scmp.lt.s32.totalorder %s19, 1
          %s394 = scalar_select %p393, %s19, 1
          %s395 = scalar_lea.vmem %s2, %s394
        $region96: #{mlp_forward.4} parent=15 // pred_fallthru
          _
      $region16: #{mlp_forward.4} parent=5 // pred_fallthru
        _
      %p396 = scmp.le.s32.totalorder 1, %s11
      %p397 = scmp.lt.s32.totalorder %s11, 5
      %p398 = pnand %p396, %p397
      %p399 = pneg %p398
      // Predicated region
      $region97: #{mlp_forward.4} parent=5 // pred_check
        _
      $region98: #{mlp_forward.4} parent=5 // pred_check_branch
        %401 = sbr.rel (%p398) target = $region100
      $region99: #{mlp_forward.4} parent=5 // pred_region
        %s402 = ssub.s32 %s11, 1
        %s403 = sand.u32 %s38, 1
        %s404 = sand.u32 %s38, 1
        %s405 = smul.addr %s404, 256
        %s406 = scalar_lea.vmem [#allocation3], %s405
        // Predicated region
        $region101: #{mlp_forward.4} parent=99 // pred_check
          %p407 = pneg %p51
        $region102: #{mlp_forward.4} parent=99 // pred_check_branch
          %409 = sbr.rel (%p407) target = $region104
        $region103: #{mlp_forward.4} parent=99 // pred_region
          _
        $region104: #{mlp_forward.4} parent=99 // pred_fallthru
          _
        %s410 = sand.u32 %s64, 1
        %s411 = sand.u32 %s64, 1
        %s412 = smul.addr %s411, 16
        %s413 = scalar_lea.vmem [#allocation4], %s412
        // Predicated region
        $region105: #{mlp_forward.4} parent=99 // pred_check
          %p414 = pneg %p77
        $region106: #{mlp_forward.4} parent=99 // pred_check_branch
          %416 = sbr.rel (%p414) target = $region108
        $region107: #{mlp_forward.4} parent=99 // pred_region
          _
        $region108: #{mlp_forward.4} parent=99 // pred_fallthru
          _
        %s417 = sand.u32 %s38, 1
        %s418 = sand.u32 %s38, 1
        %s419 = smul.addr %s418, 256
        %s420 = scalar_lea.vmem [#allocation3], %s419
        %p421 = pneg %p51
        %p422 = pneg %p48
        %s423 = sand.u32 %s64, 1
        %s424 = sand.u32 %s64, 1
        %s425 = smul.addr %s424, 16
        %s426 = scalar_lea.vmem [#allocation4], %s425
        %p427 = pneg %p77
        %p428 = pneg %p74
        %p429 = scmp.lt.s32.totalorder %s21, 1
        %s430 = scalar_select %p429, %s21, 1
        %s431 = scalar_lea.vmem %s2, %s430
        %p432 = pneg %p103
        %p433 = pneg %p100
        %p434 = pneg %p131
        %p435 = pneg %p128
        %s436 = sand.u32 %s118, 1
        %s437 = sand.u32 %s118, 1
        %s438 = smul.addr %s437, 256
        %s439 = scalar_lea.vmem [#allocation5], %s438
        %p440 = pneg %p159
        %p441 = pneg %p156
        %p442 = scmp.lt.s32.totalorder %s20, 1
        %s443 = scalar_select %p442, %s20, 1
        %p444 = scmp.lt.s32.totalorder %s21, 1
        %s445 = scalar_select %p444, %s21, 1
        %s446 = smul.addr %s443, 2
        %s447 = sadd.s32 %s445, %s446
        %s448 = scalar_lea.vmem %s4, %s447
        %p449 = scmp.lt.s32.totalorder %s21, 1
        %s450 = scalar_select %p449, %s21, 1
        %s451 = scalar_lea.vmem %s2, %s450
        %p452 = scmp.lt.s32.totalorder %s20, 1
        %s453 = scalar_select %p452, %s20, 1
        %p454 = scmp.lt.s32.totalorder %s21, 1
        %s455 = scalar_select %p454, %s21, 1
        %s456 = smul.addr %s453, 2
        %s457 = sadd.s32 %s455, %s456
        %s458 = scalar_lea.vmem %s4, %s457
        %459 = vst [vmem:[#allocation2] sm:$0xff] 0.0
        %460 = vst [vmem:[#allocation2 + $0x8] sm:$0xff] 0.0
        %461 = vst [vmem:[#allocation2 + $0x10] sm:$0x3] 0.0
        %462 = vst [vmem:[#allocation2 + $0x18] sm:$0xff] 0.0
        %463 = vst [vmem:[#allocation2 + $0x20] sm:$0xff] 0.0
        %464 = vst [vmem:[#allocation2 + $0x28] sm:$0x3] 0.0
        %465 = vst [vmem:[#allocation2 + $0x30] sm:$0xff] 0.0
        %466 = vst [vmem:[#allocation2 + $0x38] sm:$0xff] 0.0
        %467 = vst [vmem:[#allocation2 + $0x40] sm:$0x3] 0.0
        %468 = vst [vmem:[#allocation2 + $0x48] sm:$0xff] 0.0
        %469 = vst [vmem:[#allocation2 + $0x50] sm:$0xff] 0.0
        %470 = vst [vmem:[#allocation2 + $0x58] sm:$0x3] 0.0
        %471 = vst [vmem:[#allocation2 + $0x60] sm:$0xff] 0.0
        %472 = vst [vmem:[#allocation2 + $0x68] sm:$0xff] 0.0
        %473 = vst [vmem:[#allocation2 + $0x70] sm:$0x3] 0.0
        %474 = vst [vmem:[#allocation2 + $0x78] sm:$0xff] 0.0
        %475 = vst [vmem:[#allocation2 + $0x80] sm:$0xff] 0.0
        %476 = vst [vmem:[#allocation2 + $0x88] sm:$0x3] 0.0
        %477 = vst [vmem:[#allocation2 + $0x90] sm:$0xff] 0.0
        %478 = vst [vmem:[#allocation2 + $0x98] sm:$0xff] 0.0
        %479 = vst [vmem:[#allocation2 + $0xa0] sm:$0x3] 0.0
        %480 = vst [vmem:[#allocation2 + $0xa8] sm:$0xff] 0.0
        %481 = vst [vmem:[#allocation2 + $0xb0] sm:$0xff] 0.0
        %482 = vst [vmem:[#allocation2 + $0xb8] sm:$0x3] 0.0
        %483 = vst [vmem:[#allocation2 + $0xc0] sm:$0xff] 0.0
        %484 = vst [vmem:[#allocation2 + $0xc8] sm:$0xff] 0.0
        %485 = vst [vmem:[#allocation2 + $0xd0] sm:$0x3] 0.0
        %486 = vst [vmem:[#allocation2 + $0xd8] sm:$0xff] 0.0
        %487 = vst [vmem:[#allocation2 + $0xe0] sm:$0xff] 0.0
        %488 = vst [vmem:[#allocation2 + $0xe8] sm:$0x3] 0.0
        %489 = vst [vmem:[#allocation2 + $0xf0] sm:$0xff] 0.0
        %490 = vst [vmem:[#allocation2 + $0xf8] sm:$0xff] 0.0
        %491 = vst [vmem:[#allocation2 + $0x100] sm:$0x3] 0.0
        %492 = vst [vmem:[#allocation2 + $0x108] sm:$0xff] 0.0
        %493 = vst [vmem:[#allocation2 + $0x110] sm:$0xff] 0.0
        %494 = vst [vmem:[#allocation2 + $0x118] sm:$0x3] 0.0
        %495 = vst [vmem:[#allocation2 + $0x120] sm:$0xff] 0.0
        %496 = vst [vmem:[#allocation2 + $0x128] sm:$0xff] 0.0
        %497 = vst [vmem:[#allocation2 + $0x130] sm:$0x3] 0.0
        %498 = vst [vmem:[#allocation2 + $0x138] sm:$0xff] 0.0
        %499 = vst [vmem:[#allocation2 + $0x140] sm:$0xff] 0.0
        %500 = vst [vmem:[#allocation2 + $0x148] sm:$0x3] 0.0
        %501 = vst [vmem:[#allocation2 + $0x150] sm:$0xff] 0.0
        %502 = vst [vmem:[#allocation2 + $0x158] sm:$0xff] 0.0
        %503 = vst [vmem:[#allocation2 + $0x160] sm:$0x3] 0.0
        %504 = vst [vmem:[#allocation2 + $0x168] sm:$0xff] 0.0
        %505 = vst [vmem:[#allocation2 + $0x170] sm:$0xff] 0.0
        %506 = vst [vmem:[#allocation2 + $0x178] sm:$0x3] 0.0
        %507 = vst [vmem:[#allocation2 + $0x180] sm:$0xff] 0.0
        %508 = vst [vmem:[#allocation2 + $0x188] sm:$0xff] 0.0
        %509 = vst [vmem:[#allocation2 + $0x190] sm:$0x3] 0.0
        %510 = vst [vmem:[#allocation2 + $0x198] sm:$0xff] 0.0
        %511 = vst [vmem:[#allocation2 + $0x1a0] sm:$0xff] 0.0
        %512 = vst [vmem:[#allocation2 + $0x1a8] sm:$0x3] 0.0
        %v513 = vld [vmem:[%s406] sm:$0xff]
        %v514 = vld [vmem:[%s406 + $0x8] sm:$0xff]
        %v515 = vld [vmem:[%s406 + $0x10] sm:$0xff]
        %v516 = vld [vmem:[%s406 + $0x18] sm:$0xff]
        %v517 = vld [vmem:[%s406 + $0x20] sm:$0xff]
        %v518 = vld [vmem:[%s406 + $0x28] sm:$0xff]
        %v519 = vld [vmem:[%s406 + $0x30] sm:$0xff]
        %v520 = vld [vmem:[%s406 + $0x38] sm:$0xff]
        %v521 = vld [vmem:[%s406 + $0x40] sm:$0xff]
        %v522 = vld [vmem:[%s406 + $0x48] sm:$0xff]
        %v523 = vld [vmem:[%s406 + $0x50] sm:$0xff]
        %v524 = vld [vmem:[%s406 + $0x58] sm:$0xff]
        %v525 = vld [vmem:[%s406 + $0x60] sm:$0xff]
        %v526 = vld [vmem:[%s406 + $0x68] sm:$0xff]
        %v527 = vld [vmem:[%s406 + $0x70] sm:$0xff]
        %v528 = vld [vmem:[%s406 + $0x78] sm:$0xff]
        %v529 = vld [vmem:[%s406 + $0x80] sm:$0xff]
        %v530 = vld [vmem:[%s406 + $0x88] sm:$0xff]
        %v531 = vld [vmem:[%s406 + $0x90] sm:$0xff]
        %v532 = vld [vmem:[%s406 + $0x98] sm:$0xff]
        %v533 = vld [vmem:[%s406 + $0xa0] sm:$0xff]
        %v534 = vld [vmem:[%s406 + $0xa8] sm:$0xff]
        %v535 = vld [vmem:[%s406 + $0xb0] sm:$0xff]
        %v536 = vld [vmem:[%s406 + $0xb8] sm:$0xff]
        %v537 = vld [vmem:[%s406 + $0xc0] sm:$0xff]
        %v538 = vld [vmem:[%s406 + $0xc8] sm:$0xff]
        %v539 = vld [vmem:[%s406 + $0xd0] sm:$0xff]
        %v540 = vld [vmem:[%s406 + $0xd8] sm:$0xff]
        %v541 = vld [vmem:[%s406 + $0xe0] sm:$0xff]
        %v542 = vld [vmem:[%s406 + $0xe8] sm:$0xff]
        %v543 = vld [vmem:[%s406 + $0xf0] sm:$0xff]
        %v544 = vld [vmem:[%s406 + $0xf8] sm:$0xff]
        %s545 = scalar_lea.vmem [#allocation2], 24
        %546 = vst [vmem:[%s545 + $0x1] sm:$0xff] %v513
        %547 = vst [vmem:[%s545 + $0x9] sm:$0xff] %v514
        %548 = vst [vmem:[%s545 + $0x19] sm:$0xff] %v515
        %549 = vst [vmem:[%s545 + $0x21] sm:$0xff] %v516
        %550 = vst [vmem:[%s545 + $0x31] sm:$0xff] %v517
        %551 = vst [vmem:[%s545 + $0x39] sm:$0xff] %v518
        %552 = vst [vmem:[%s545 + $0x49] sm:$0xff] %v519
        %553 = vst [vmem:[%s545 + $0x51] sm:$0xff] %v520
        %554 = vst [vmem:[%s545 + $0x61] sm:$0xff] %v521
        %555 = vst [vmem:[%s545 + $0x69] sm:$0xff] %v522
        %556 = vst [vmem:[%s545 + $0x79] sm:$0xff] %v523
        %557 = vst [vmem:[%s545 + $0x81] sm:$0xff] %v524
        %558 = vst [vmem:[%s545 + $0x91] sm:$0xff] %v525
        %559 = vst [vmem:[%s545 + $0x99] sm:$0xff] %v526
        %560 = vst [vmem:[%s545 + $0xa9] sm:$0xff] %v527
        %561 = vst [vmem:[%s545 + $0xb1] sm:$0xff] %v528
        %562 = vst [vmem:[%s545 + $0xc1] sm:$0xff] %v529
        %563 = vst [vmem:[%s545 + $0xc9] sm:$0xff] %v530
        %564 = vst [vmem:[%s545 + $0xd9] sm:$0xff] %v531
        %565 = vst [vmem:[%s545 + $0xe1] sm:$0xff] %v532
        %566 = vst [vmem:[%s545 + $0xf1] sm:$0xff] %v533
        %567 = vst [vmem:[%s545 + $0xf9] sm:$0xff] %v534
        %568 = vst [vmem:[%s545 + $0x109] sm:$0xff] %v535
        %569 = vst [vmem:[%s545 + $0x111] sm:$0xff] %v536
        %570 = vst [vmem:[%s545 + $0x121] sm:$0xff] %v537
        %571 = vst [vmem:[%s545 + $0x129] sm:$0xff] %v538
        %572 = vst [vmem:[%s545 + $0x139] sm:$0xff] %v539
        %573 = vst [vmem:[%s545 + $0x141] sm:$0xff] %v540
        %574 = vst [vmem:[%s545 + $0x151] sm:$0xff] %v541
        %575 = vst [vmem:[%s545 + $0x159] sm:$0xff] %v542
        %576 = vst [vmem:[%s545 + $0x169] sm:$0xff] %v543
        %577 = vst [vmem:[%s545 + $0x171] sm:$0xff] %v544
        %v578 = vld [vmem:[%s413] sm:$0x1]
        %v579 = vld [vmem:[#allocation2] sm:$0xff]
        %v580 = vld [vmem:[#allocation2 + $0x8] sm:$0xff]
        %v581 = vld [vmem:[#allocation2 + $0x18] sm:$0xff]
        %v582 = vld [vmem:[#allocation2 + $0x20] sm:$0xff]
        %v583 = vld [vmem:[#allocation2 + $0x30] sm:$0xff]
        %v584 = vld [vmem:[#allocation2 + $0x38] sm:$0xff]
        %v585 = vld [vmem:[#allocation2 + $0x48] sm:$0xff]
        %v586 = vld [vmem:[#allocation2 + $0x50] sm:$0xff]
        %v587 = vld [vmem:[#allocation2 + $0x60] sm:$0xff]
        %v588 = vld [vmem:[#allocation2 + $0x68] sm:$0xff]
        %v589 = vld [vmem:[#allocation2 + $0x78] sm:$0xff]
        %v590 = vld [vmem:[#allocation2 + $0x80] sm:$0xff]
        %v591 = vld [vmem:[#allocation2 + $0x90] sm:$0xff]
        %v592 = vld [vmem:[#allocation2 + $0x98] sm:$0xff]
        %v593 = vld [vmem:[#allocation2 + $0xa8] sm:$0xff]
        %v594 = vld [vmem:[#allocation2 + $0xb0] sm:$0xff]
        %v595 = vld [vmem:[#allocation2 + $0xc0] sm:$0xff]
        %v596 = vld [vmem:[#allocation2 + $0xc8] sm:$0xff]
        %v597 = vld [vmem:[#allocation2 + $0xd8] sm:$0xff]
        %v598 = vld [vmem:[#allocation2 + $0xe0] sm:$0xff]
        %v599 = vld [vmem:[#allocation2 + $0xf0] sm:$0xff]
        %v600 = vld [vmem:[#allocation2 + $0xf8] sm:$0xff]
        %v601 = vld [vmem:[#allocation2 + $0x108] sm:$0xff]
        %v602 = vld [vmem:[#allocation2 + $0x110] sm:$0xff]
        %v603 = vld [vmem:[#allocation2 + $0x120] sm:$0xff]
        %v604 = vld [vmem:[#allocation2 + $0x128] sm:$0xff]
        %v605 = vld [vmem:[#allocation2 + $0x138] sm:$0xff]
        %v606 = vld [vmem:[#allocation2 + $0x140] sm:$0xff]
        %v607 = vld [vmem:[#allocation2 + $0x150] sm:$0xff]
        %v608 = vld [vmem:[#allocation2 + $0x158] sm:$0xff]
        %v609 = vld [vmem:[#allocation2 + $0x168] sm:$0xff]
        %v610 = vld [vmem:[#allocation2 + $0x170] sm:$0xff]
        %v611 = vlaneseq
        %v612 = vshrl.u32 %v611, 7
        %v613 = vsub.s32 0, %v612
        %v614 = vrot.slane %v578, %v613
        %v615 = vmul.f32 %v579, %v614
        %v616 = vmul.f32 %v580, %v614
        %v617 = vmul.f32 %v581, %v614
        %v618 = vmul.f32 %v582, %v614
        %v619 = vmul.f32 %v583, %v614
        %v620 = vmul.f32 %v584, %v614
        %v621 = vmul.f32 %v585, %v614
        %v622 = vmul.f32 %v586, %v614
        %v623 = vmul.f32 %v587, %v614
        %v624 = vmul.f32 %v588, %v614
        %v625 = vmul.f32 %v589, %v614
        %v626 = vmul.f32 %v590, %v614
        %v627 = vmul.f32 %v591, %v614
        %v628 = vmul.f32 %v592, %v614
        %v629 = vmul.f32 %v593, %v614
        %v630 = vmul.f32 %v594, %v614
        %v631 = vmul.f32 %v595, %v614
        %v632 = vmul.f32 %v596, %v614
        %v633 = vmul.f32 %v597, %v614
        %v634 = vmul.f32 %v598, %v614
        %v635 = vmul.f32 %v599, %v614
        %v636 = vmul.f32 %v600, %v614
        %v637 = vmul.f32 %v601, %v614
        %v638 = vmul.f32 %v602, %v614
        %v639 = vmul.f32 %v603, %v614
        %v640 = vmul.f32 %v604, %v614
        %v641 = vmul.f32 %v605, %v614
        %v642 = vmul.f32 %v606, %v614
        %v643 = vmul.f32 %v607, %v614
        %v644 = vmul.f32 %v608, %v614
        %v645 = vmul.f32 %v609, %v614
        %v646 = vmul.f32 %v610, %v614
        %v647 = vadd.f32 %v615, 0.0
        %v648 = vadd.f32 %v616, 0.0
        %v649 = vadd.f32 %v617, 0.0
        %v650 = vadd.f32 %v618, 0.0
        %v651 = vadd.f32 %v619, 0.0
        %v652 = vadd.f32 %v620, 0.0
        %v653 = vadd.f32 %v621, 0.0
        %v654 = vadd.f32 %v622, 0.0
        %v655 = vadd.f32 %v623, 0.0
        %v656 = vadd.f32 %v624, 0.0
        %v657 = vadd.f32 %v625, 0.0
        %v658 = vadd.f32 %v626, 0.0
        %v659 = vadd.f32 %v627, 0.0
        %v660 = vadd.f32 %v628, 0.0
        %v661 = vadd.f32 %v629, 0.0
        %v662 = vadd.f32 %v630, 0.0
        %v663 = vadd.f32 %v631, 0.0
        %v664 = vadd.f32 %v632, 0.0
        %v665 = vadd.f32 %v633, 0.0
        %v666 = vadd.f32 %v634, 0.0
        %v667 = vadd.f32 %v635, 0.0
        %v668 = vadd.f32 %v636, 0.0
        %v669 = vadd.f32 %v637, 0.0
        %v670 = vadd.f32 %v638, 0.0
        %v671 = vadd.f32 %v639, 0.0
        %v672 = vadd.f32 %v640, 0.0
        %v673 = vadd.f32 %v641, 0.0
        %v674 = vadd.f32 %v642, 0.0
        %v675 = vadd.f32 %v643, 0.0
        %v676 = vadd.f32 %v644, 0.0
        %v677 = vadd.f32 %v645, 0.0
        %v678 = vadd.f32 %v646, 0.0
        %v679 = vld [vmem:[%s413 + $0x1] sm:$0x1]
        %v680 = vld [vmem:[#allocation2 + $0x1] sm:$0xff]
        %v681 = vld [vmem:[#allocation2 + $0x9] sm:$0xff]
        %v682 = vld [vmem:[#allocation2 + $0x19] sm:$0xff]
        %v683 = vld [vmem:[#allocation2 + $0x21] sm:$0xff]
        %v684 = vld [vmem:[#allocation2 + $0x31] sm:$0xff]
        %v685 = vld [vmem:[#allocation2 + $0x39] sm:$0xff]
        %v686 = vld [vmem:[#allocation2 + $0x49] sm:$0xff]
        %v687 = vld [vmem:[#allocation2 + $0x51] sm:$0xff]
        %v688 = vld [vmem:[#allocation2 + $0x61] sm:$0xff]
        %v689 = vld [vmem:[#allocation2 + $0x69] sm:$0xff]
        %v690 = vld [vmem:[#allocation2 + $0x79] sm:$0xff]
        %v691 = vld [vmem:[#allocation2 + $0x81] sm:$0xff]
        %v692 = vld [vmem:[#allocation2 + $0x91] sm:$0xff]
        %v693 = vld [vmem:[#allocation2 + $0x99] sm:$0xff]
        %v694 = vld [vmem:[#allocation2 + $0xa9] sm:$0xff]
        %v695 = vld [vmem:[#allocation2 + $0xb1] sm:$0xff]
        %v696 = vld [vmem:[#allocation2 + $0xc1] sm:$0xff]
        %v697 = vld [vmem:[#allocation2 + $0xc9] sm:$0xff]
        %v698 = vld [vmem:[#allocation2 + $0xd9] sm:$0xff]
        %v699 = vld [vmem:[#allocation2 + $0xe1] sm:$0xff]
        %v700 = vld [vmem:[#allocation2 + $0xf1] sm:$0xff]
        %v701 = vld [vmem:[#allocation2 + $0xf9] sm:$0xff]
        %v702 = vld [vmem:[#allocation2 + $0x109] sm:$0xff]
        %v703 = vld [vmem:[#allocation2 + $0x111] sm:$0xff]
        %v704 = vld [vmem:[#allocation2 + $0x121] sm:$0xff]
        %v705 = vld [vmem:[#allocation2 + $0x129] sm:$0xff]
        %v706 = vld [vmem:[#allocation2 + $0x139] sm:$0xff]
        %v707 = vld [vmem:[#allocation2 + $0x141] sm:$0xff]
        %v708 = vld [vmem:[#allocation2 + $0x151] sm:$0xff]
        %v709 = vld [vmem:[#allocation2 + $0x159] sm:$0xff]
        %v710 = vld [vmem:[#allocation2 + $0x169] sm:$0xff]
        %v711 = vld [vmem:[#allocation2 + $0x171] sm:$0xff]
        %v712 = vlaneseq
        %v713 = vshrl.u32 %v712, 7
        %v714 = vsub.s32 0, %v713
        %v715 = vrot.slane %v679, %v714
        %v716 = vmul.f32 %v680, %v715
        %v717 = vmul.f32 %v681, %v715
        %v718 = vmul.f32 %v682, %v715
        %v719 = vmul.f32 %v683, %v715
        %v720 = vmul.f32 %v684, %v715
        %v721 = vmul.f32 %v685, %v715
        %v722 = vmul.f32 %v686, %v715
        %v723 = vmul.f32 %v687, %v715
        %v724 = vmul.f32 %v688, %v715
        %v725 = vmul.f32 %v689, %v715
        %v726 = vmul.f32 %v690, %v715
        %v727 = vmul.f32 %v691, %v715
        %v728 = vmul.f32 %v692, %v715
        %v729 = vmul.f32 %v693, %v715
        %v730 = vmul.f32 %v694, %v715
        %v731 = vmul.f32 %v695, %v715
        %v732 = vmul.f32 %v696, %v715
        %v733 = vmul.f32 %v697, %v715
        %v734 = vmul.f32 %v698, %v715
        %v735 = vmul.f32 %v699, %v715
        %v736 = vmul.f32 %v700, %v715
        %v737 = vmul.f32 %v701, %v715
        %v738 = vmul.f32 %v702, %v715
        %v739 = vmul.f32 %v703, %v715
        %v740 = vmul.f32 %v704, %v715
        %v741 = vmul.f32 %v705, %v715
        %v742 = vmul.f32 %v706, %v715
        %v743 = vmul.f32 %v707, %v715
        %v744 = vmul.f32 %v708, %v715
        %v745 = vmul.f32 %v709, %v715
        %v746 = vmul.f32 %v710, %v715
        %v747 = vmul.f32 %v711, %v715
        %v748 = vadd.f32 %v647, %v716
        %v749 = vadd.f32 %v648, %v717
        %v750 = vadd.f32 %v649, %v718
        %v751 = vadd.f32 %v650, %v719
        %v752 = vadd.f32 %v651, %v720
        %v753 = vadd.f32 %v652, %v721
        %v754 = vadd.f32 %v653, %v722
        %v755 = vadd.f32 %v654, %v723
        %v756 = vadd.f32 %v655, %v724
        %v757 = vadd.f32 %v656, %v725
        %v758 = vadd.f32 %v657, %v726
        %v759 = vadd.f32 %v658, %v727
        %v760 = vadd.f32 %v659, %v728
        %v761 = vadd.f32 %v660, %v729
        %v762 = vadd.f32 %v661, %v730
        %v763 = vadd.f32 %v662, %v731
        %v764 = vadd.f32 %v663, %v732
        %v765 = vadd.f32 %v664, %v733
        %v766 = vadd.f32 %v665, %v734
        %v767 = vadd.f32 %v666, %v735
        %v768 = vadd.f32 %v667, %v736
        %v769 = vadd.f32 %v668, %v737
        %v770 = vadd.f32 %v669, %v738
        %v771 = vadd.f32 %v670, %v739
        %v772 = vadd.f32 %v671, %v740
        %v773 = vadd.f32 %v672, %v741
        %v774 = vadd.f32 %v673, %v742
        %v775 = vadd.f32 %v674, %v743
        %v776 = vadd.f32 %v675, %v744
        %v777 = vadd.f32 %v676, %v745
        %v778 = vadd.f32 %v677, %v746
        %v779 = vadd.f32 %v678, %v747
        %v780 = vld [vmem:[%s413 + $0x2] sm:$0x1]
        %v781 = vld [vmem:[#allocation2 + $0x2] sm:$0xff]
        %v782 = vld [vmem:[#allocation2 + $0xa] sm:$0xff]
        %v783 = vld [vmem:[#allocation2 + $0x1a] sm:$0xff]
        %v784 = vld [vmem:[#allocation2 + $0x22] sm:$0xff]
        %v785 = vld [vmem:[#allocation2 + $0x32] sm:$0xff]
        %v786 = vld [vmem:[#allocation2 + $0x3a] sm:$0xff]
        %v787 = vld [vmem:[#allocation2 + $0x4a] sm:$0xff]
        %v788 = vld [vmem:[#allocation2 + $0x52] sm:$0xff]
        %v789 = vld [vmem:[#allocation2 + $0x62] sm:$0xff]
        %v790 = vld [vmem:[#allocation2 + $0x6a] sm:$0xff]
        %v791 = vld [vmem:[#allocation2 + $0x7a] sm:$0xff]
        %v792 = vld [vmem:[#allocation2 + $0x82] sm:$0xff]
        %v793 = vld [vmem:[#allocation2 + $0x92] sm:$0xff]
        %v794 = vld [vmem:[#allocation2 + $0x9a] sm:$0xff]
        %v795 = vld [vmem:[#allocation2 + $0xaa] sm:$0xff]
        %v796 = vld [vmem:[#allocation2 + $0xb2] sm:$0xff]
        %v797 = vld [vmem:[#allocation2 + $0xc2] sm:$0xff]
        %v798 = vld [vmem:[#allocation2 + $0xca] sm:$0xff]
        %v799 = vld [vmem:[#allocation2 + $0xda] sm:$0xff]
        %v800 = vld [vmem:[#allocation2 + $0xe2] sm:$0xff]
        %v801 = vld [vmem:[#allocation2 + $0xf2] sm:$0xff]
        %v802 = vld [vmem:[#allocation2 + $0xfa] sm:$0xff]
        %v803 = vld [vmem:[#allocation2 + $0x10a] sm:$0xff]
        %v804 = vld [vmem:[#allocation2 + $0x112] sm:$0xff]
        %v805 = vld [vmem:[#allocation2 + $0x122] sm:$0xff]
        %v806 = vld [vmem:[#allocation2 + $0x12a] sm:$0xff]
        %v807 = vld [vmem:[#allocation2 + $0x13a] sm:$0xff]
        %v808 = vld [vmem:[#allocation2 + $0x142] sm:$0xff]
        %v809 = vld [vmem:[#allocation2 + $0x152] sm:$0xff]
        %v810 = vld [vmem:[#allocation2 + $0x15a] sm:$0xff]
        %v811 = vld [vmem:[#allocation2 + $0x16a] sm:$0xff]
        %v812 = vld [vmem:[#allocation2 + $0x172] sm:$0xff]
        %v813 = vlaneseq
        %v814 = vshrl.u32 %v813, 7
        %v815 = vsub.s32 0, %v814
        %v816 = vrot.slane %v780, %v815
        %v817 = vmul.f32 %v781, %v816
        %v818 = vmul.f32 %v782, %v816
        %v819 = vmul.f32 %v783, %v816
        %v820 = vmul.f32 %v784, %v816
        %v821 = vmul.f32 %v785, %v816
        %v822 = vmul.f32 %v786, %v816
        %v823 = vmul.f32 %v787, %v816
        %v824 = vmul.f32 %v788, %v816
        %v825 = vmul.f32 %v789, %v816
        %v826 = vmul.f32 %v790, %v816
        %v827 = vmul.f32 %v791, %v816
        %v828 = vmul.f32 %v792, %v816
        %v829 = vmul.f32 %v793, %v816
        %v830 = vmul.f32 %v794, %v816
        %v831 = vmul.f32 %v795, %v816
        %v832 = vmul.f32 %v796, %v816
        %v833 = vmul.f32 %v797, %v816
        %v834 = vmul.f32 %v798, %v816
        %v835 = vmul.f32 %v799, %v816
        %v836 = vmul.f32 %v800, %v816
        %v837 = vmul.f32 %v801, %v816
        %v838 = vmul.f32 %v802, %v816
        %v839 = vmul.f32 %v803, %v816
        %v840 = vmul.f32 %v804, %v816
        %v841 = vmul.f32 %v805, %v816
        %v842 = vmul.f32 %v806, %v816
        %v843 = vmul.f32 %v807, %v816
        %v844 = vmul.f32 %v808, %v816
        %v845 = vmul.f32 %v809, %v816
        %v846 = vmul.f32 %v810, %v816
        %v847 = vmul.f32 %v811, %v816
        %v848 = vmul.f32 %v812, %v816
        %v849 = vadd.f32 %v748, %v817
        %v850 = vadd.f32 %v749, %v818
        %v851 = vadd.f32 %v750, %v819
        %v852 = vadd.f32 %v751, %v820
        %v853 = vadd.f32 %v752, %v821
        %v854 = vadd.f32 %v753, %v822
        %v855 = vadd.f32 %v754, %v823
        %v856 = vadd.f32 %v755, %v824
        %v857 = vadd.f32 %v756, %v825
        %v858 = vadd.f32 %v757, %v826
        %v859 = vadd.f32 %v758, %v827
        %v860 = vadd.f32 %v759, %v828
        %v861 = vadd.f32 %v760, %v829
        %v862 = vadd.f32 %v761, %v830
        %v863 = vadd.f32 %v762, %v831
        %v864 = vadd.f32 %v763, %v832
        %v865 = vadd.f32 %v764, %v833
        %v866 = vadd.f32 %v765, %v834
        %v867 = vadd.f32 %v766, %v835
        %v868 = vadd.f32 %v767, %v836
        %v869 = vadd.f32 %v768, %v837
        %v870 = vadd.f32 %v769, %v838
        %v871 = vadd.f32 %v770, %v839
        %v872 = vadd.f32 %v771, %v840
        %v873 = vadd.f32 %v772, %v841
        %v874 = vadd.f32 %v773, %v842
        %v875 = vadd.f32 %v774, %v843
        %v876 = vadd.f32 %v775, %v844
        %v877 = vadd.f32 %v776, %v845
        %v878 = vadd.f32 %v777, %v846
        %v879 = vadd.f32 %v778, %v847
        %v880 = vadd.f32 %v779, %v848
        %v881 = vld [vmem:[%s413 + $0x3] sm:$0x1]
        %v882 = vld [vmem:[%s545] sm:$0xff]
        %v883 = vld [vmem:[%s545 + $0x8] sm:$0xff]
        %v884 = vld [vmem:[%s545 + $0x18] sm:$0xff]
        %v885 = vld [vmem:[%s545 + $0x20] sm:$0xff]
        %v886 = vld [vmem:[%s545 + $0x30] sm:$0xff]
        %v887 = vld [vmem:[%s545 + $0x38] sm:$0xff]
        %v888 = vld [vmem:[%s545 + $0x48] sm:$0xff]
        %v889 = vld [vmem:[%s545 + $0x50] sm:$0xff]
        %v890 = vld [vmem:[%s545 + $0x60] sm:$0xff]
        %v891 = vld [vmem:[%s545 + $0x68] sm:$0xff]
        %v892 = vld [vmem:[%s545 + $0x78] sm:$0xff]
        %v893 = vld [vmem:[%s545 + $0x80] sm:$0xff]
        %v894 = vld [vmem:[%s545 + $0x90] sm:$0xff]
        %v895 = vld [vmem:[%s545 + $0x98] sm:$0xff]
        %v896 = vld [vmem:[%s545 + $0xa8] sm:$0xff]
        %v897 = vld [vmem:[%s545 + $0xb0] sm:$0xff]
        %v898 = vld [vmem:[%s545 + $0xc0] sm:$0xff]
        %v899 = vld [vmem:[%s545 + $0xc8] sm:$0xff]
        %v900 = vld [vmem:[%s545 + $0xd8] sm:$0xff]
        %v901 = vld [vmem:[%s545 + $0xe0] sm:$0xff]
        %v902 = vld [vmem:[%s545 + $0xf0] sm:$0xff]
        %v903 = vld [vmem:[%s545 + $0xf8] sm:$0xff]
        %v904 = vld [vmem:[%s545 + $0x108] sm:$0xff]
        %v905 = vld [vmem:[%s545 + $0x110] sm:$0xff]
        %v906 = vld [vmem:[%s545 + $0x120] sm:$0xff]
        %v907 = vld [vmem:[%s545 + $0x128] sm:$0xff]
        %v908 = vld [vmem:[%s545 + $0x138] sm:$0xff]
        %v909 = vld [vmem:[%s545 + $0x140] sm:$0xff]
        %v910 = vld [vmem:[%s545 + $0x150] sm:$0xff]
        %v911 = vld [vmem:[%s545 + $0x158] sm:$0xff]
        %v912 = vld [vmem:[%s545 + $0x168] sm:$0xff]
        %v913 = vld [vmem:[%s545 + $0x170] sm:$0xff]
        %v914 = vlaneseq
        %v915 = vshrl.u32 %v914, 7
        %v916 = vsub.s32 0, %v915
        %v917 = vrot.slane %v881, %v916
        %v918 = vmul.f32 %v882, %v917
        %v919 = vmul.f32 %v883, %v917
        %v920 = vmul.f32 %v884, %v917
        %v921 = vmul.f32 %v885, %v917
        %v922 = vmul.f32 %v886, %v917
        %v923 = vmul.f32 %v887, %v917
        %v924 = vmul.f32 %v888, %v917
        %v925 = vmul.f32 %v889, %v917
        %v926 = vmul.f32 %v890, %v917
        %v927 = vmul.f32 %v891, %v917
        %v928 = vmul.f32 %v892, %v917
        %v929 = vmul.f32 %v893, %v917
        %v930 = vmul.f32 %v894, %v917
        %v931 = vmul.f32 %v895, %v917
        %v932 = vmul.f32 %v896, %v917
        %v933 = vmul.f32 %v897, %v917
        %v934 = vmul.f32 %v898, %v917
        %v935 = vmul.f32 %v899, %v917
        %v936 = vmul.f32 %v900, %v917
        %v937 = vmul.f32 %v901, %v917
        %v938 = vmul.f32 %v902, %v917
        %v939 = vmul.f32 %v903, %v917
        %v940 = vmul.f32 %v904, %v917
        %v941 = vmul.f32 %v905, %v917
        %v942 = vmul.f32 %v906, %v917
        %v943 = vmul.f32 %v907, %v917
        %v944 = vmul.f32 %v908, %v917
        %v945 = vmul.f32 %v909, %v917
        %v946 = vmul.f32 %v910, %v917
        %v947 = vmul.f32 %v911, %v917
        %v948 = vmul.f32 %v912, %v917
        %v949 = vmul.f32 %v913, %v917
        %v950 = vadd.f32 %v849, %v918
        %v951 = vadd.f32 %v850, %v919
        %v952 = vadd.f32 %v851, %v920
        %v953 = vadd.f32 %v852, %v921
        %v954 = vadd.f32 %v853, %v922
        %v955 = vadd.f32 %v854, %v923
        %v956 = vadd.f32 %v855, %v924
        %v957 = vadd.f32 %v856, %v925
        %v958 = vadd.f32 %v857, %v926
        %v959 = vadd.f32 %v858, %v927
        %v960 = vadd.f32 %v859, %v928
        %v961 = vadd.f32 %v860, %v929
        %v962 = vadd.f32 %v861, %v930
        %v963 = vadd.f32 %v862, %v931
        %v964 = vadd.f32 %v863, %v932
        %v965 = vadd.f32 %v864, %v933
        %v966 = vadd.f32 %v865, %v934
        %v967 = vadd.f32 %v866, %v935
        %v968 = vadd.f32 %v867, %v936
        %v969 = vadd.f32 %v868, %v937
        %v970 = vadd.f32 %v869, %v938
        %v971 = vadd.f32 %v870, %v939
        %v972 = vadd.f32 %v871, %v940
        %v973 = vadd.f32 %v872, %v941
        %v974 = vadd.f32 %v873, %v942
        %v975 = vadd.f32 %v874, %v943
        %v976 = vadd.f32 %v875, %v944
        %v977 = vadd.f32 %v876, %v945
        %v978 = vadd.f32 %v877, %v946
        %v979 = vadd.f32 %v878, %v947
        %v980 = vadd.f32 %v879, %v948
        %v981 = vadd.f32 %v880, %v949
        %v982 = vld [vmem:[%s413 + $0x4] sm:$0x1]
        %v983 = vld [vmem:[%s545 + $0x1] sm:$0xff]
        %v984 = vld [vmem:[%s545 + $0x9] sm:$0xff]
        %v985 = vld [vmem:[%s545 + $0x19] sm:$0xff]
        %v986 = vld [vmem:[%s545 + $0x21] sm:$0xff]
        %v987 = vld [vmem:[%s545 + $0x31] sm:$0xff]
        %v988 = vld [vmem:[%s545 + $0x39] sm:$0xff]
        %v989 = vld [vmem:[%s545 + $0x49] sm:$0xff]
        %v990 = vld [vmem:[%s545 + $0x51] sm:$0xff]
        %v991 = vld [vmem:[%s545 + $0x61] sm:$0xff]
        %v992 = vld [vmem:[%s545 + $0x69] sm:$0xff]
        %v993 = vld [vmem:[%s545 + $0x79] sm:$0xff]
        %v994 = vld [vmem:[%s545 + $0x81] sm:$0xff]
        %v995 = vld [vmem:[%s545 + $0x91] sm:$0xff]
        %v996 = vld [vmem:[%s545 + $0x99] sm:$0xff]
        %v997 = vld [vmem:[%s545 + $0xa9] sm:$0xff]
        %v998 = vld [vmem:[%s545 + $0xb1] sm:$0xff]
        %v999 = vld [vmem:[%s545 + $0xc1] sm:$0xff]
        %v1000 = vld [vmem:[%s545 + $0xc9] sm:$0xff]
        %v1001 = vld [vmem:[%s545 + $0xd9] sm:$0xff]
        %v1002 = vld [vmem:[%s545 + $0xe1] sm:$0xff]
        %v1003 = vld [vmem:[%s545 + $0xf1] sm:$0xff]
        %v1004 = vld [vmem:[%s545 + $0xf9] sm:$0xff]
        %v1005 = vld [vmem:[%s545 + $0x109] sm:$0xff]
        %v1006 = vld [vmem:[%s545 + $0x111] sm:$0xff]
        %v1007 = vld [vmem:[%s545 + $0x121] sm:$0xff]
        %v1008 = vld [vmem:[%s545 + $0x129] sm:$0xff]
        %v1009 = vld [vmem:[%s545 + $0x139] sm:$0xff]
        %v1010 = vld [vmem:[%s545 + $0x141] sm:$0xff]
        %v1011 = vld [vmem:[%s545 + $0x151] sm:$0xff]
        %v1012 = vld [vmem:[%s545 + $0x159] sm:$0xff]
        %v1013 = vld [vmem:[%s545 + $0x169] sm:$0xff]
        %v1014 = vld [vmem:[%s545 + $0x171] sm:$0xff]
        %v1015 = vlaneseq
        %v1016 = vshrl.u32 %v1015, 7
        %v1017 = vsub.s32 0, %v1016
        %v1018 = vrot.slane %v982, %v1017
        %v1019 = vmul.f32 %v983, %v1018
        %v1020 = vmul.f32 %v984, %v1018
        %v1021 = vmul.f32 %v985, %v1018
        %v1022 = vmul.f32 %v986, %v1018
        %v1023 = vmul.f32 %v987, %v1018
        %v1024 = vmul.f32 %v988, %v1018
        %v1025 = vmul.f32 %v989, %v1018
        %v1026 = vmul.f32 %v990, %v1018
        %v1027 = vmul.f32 %v991, %v1018
        %v1028 = vmul.f32 %v992, %v1018
        %v1029 = vmul.f32 %v993, %v1018
        %v1030 = vmul.f32 %v994, %v1018
        %v1031 = vmul.f32 %v995, %v1018
        %v1032 = vmul.f32 %v996, %v1018
        %v1033 = vmul.f32 %v997, %v1018
        %v1034 = vmul.f32 %v998, %v1018
        %v1035 = vmul.f32 %v999, %v1018
        %v1036 = vmul.f32 %v1000, %v1018
        %v1037 = vmul.f32 %v1001, %v1018
        %v1038 = vmul.f32 %v1002, %v1018
        %v1039 = vmul.f32 %v1003, %v1018
        %v1040 = vmul.f32 %v1004, %v1018
        %v1041 = vmul.f32 %v1005, %v1018
        %v1042 = vmul.f32 %v1006, %v1018
        %v1043 = vmul.f32 %v1007, %v1018
        %v1044 = vmul.f32 %v1008, %v1018
        %v1045 = vmul.f32 %v1009, %v1018
        %v1046 = vmul.f32 %v1010, %v1018
        %v1047 = vmul.f32 %v1011, %v1018
        %v1048 = vmul.f32 %v1012, %v1018
        %v1049 = vmul.f32 %v1013, %v1018
        %v1050 = vmul.f32 %v1014, %v1018
        %v1051 = vadd.f32 %v950, %v1019
        %v1052 = vadd.f32 %v951, %v1020
        %v1053 = vadd.f32 %v952, %v1021
        %v1054 = vadd.f32 %v953, %v1022
        %v1055 = vadd.f32 %v954, %v1023
        %v1056 = vadd.f32 %v955, %v1024
        %v1057 = vadd.f32 %v956, %v1025
        %v1058 = vadd.f32 %v957, %v1026
        %v1059 = vadd.f32 %v958, %v1027
        %v1060 = vadd.f32 %v959, %v1028
        %v1061 = vadd.f32 %v960, %v1029
        %v1062 = vadd.f32 %v961, %v1030
        %v1063 = vadd.f32 %v962, %v1031
        %v1064 = vadd.f32 %v963, %v1032
        %v1065 = vadd.f32 %v964, %v1033
        %v1066 = vadd.f32 %v965, %v1034
        %v1067 = vadd.f32 %v966, %v1035
        %v1068 = vadd.f32 %v967, %v1036
        %v1069 = vadd.f32 %v968, %v1037
        %v1070 = vadd.f32 %v969, %v1038
        %v1071 = vadd.f32 %v970, %v1039
        %v1072 = vadd.f32 %v971, %v1040
        %v1073 = vadd.f32 %v972, %v1041
        %v1074 = vadd.f32 %v973, %v1042
        %v1075 = vadd.f32 %v974, %v1043
        %v1076 = vadd.f32 %v975, %v1044
        %v1077 = vadd.f32 %v976, %v1045
        %v1078 = vadd.f32 %v977, %v1046
        %v1079 = vadd.f32 %v978, %v1047
        %v1080 = vadd.f32 %v979, %v1048
        %v1081 = vadd.f32 %v980, %v1049
        %v1082 = vadd.f32 %v981, %v1050
        %v1083 = vld [vmem:[%s413 + $0x5] sm:$0x1]
        %v1084 = vld [vmem:[%s545 + $0x2] sm:$0xff]
        %v1085 = vld [vmem:[%s545 + $0xa] sm:$0xff]
        %v1086 = vld [vmem:[%s545 + $0x1a] sm:$0xff]
        %v1087 = vld [vmem:[%s545 + $0x22] sm:$0xff]
        %v1088 = vld [vmem:[%s545 + $0x32] sm:$0xff]
        %v1089 = vld [vmem:[%s545 + $0x3a] sm:$0xff]
        %v1090 = vld [vmem:[%s545 + $0x4a] sm:$0xff]
        %v1091 = vld [vmem:[%s545 + $0x52] sm:$0xff]
        %v1092 = vld [vmem:[%s545 + $0x62] sm:$0xff]
        %v1093 = vld [vmem:[%s545 + $0x6a] sm:$0xff]
        %v1094 = vld [vmem:[%s545 + $0x7a] sm:$0xff]
        %v1095 = vld [vmem:[%s545 + $0x82] sm:$0xff]
        %v1096 = vld [vmem:[%s545 + $0x92] sm:$0xff]
        %v1097 = vld [vmem:[%s545 + $0x9a] sm:$0xff]
        %v1098 = vld [vmem:[%s545 + $0xaa] sm:$0xff]
        %v1099 = vld [vmem:[%s545 + $0xb2] sm:$0xff]
        %v1100 = vld [vmem:[%s545 + $0xc2] sm:$0xff]
        %v1101 = vld [vmem:[%s545 + $0xca] sm:$0xff]
        %v1102 = vld [vmem:[%s545 + $0xda] sm:$0xff]
        %v1103 = vld [vmem:[%s545 + $0xe2] sm:$0xff]
        %v1104 = vld [vmem:[%s545 + $0xf2] sm:$0xff]
        %v1105 = vld [vmem:[%s545 + $0xfa] sm:$0xff]
        %v1106 = vld [vmem:[%s545 + $0x10a] sm:$0xff]
        %v1107 = vld [vmem:[%s545 + $0x112] sm:$0xff]
        %v1108 = vld [vmem:[%s545 + $0x122] sm:$0xff]
        %v1109 = vld [vmem:[%s545 + $0x12a] sm:$0xff]
        %v1110 = vld [vmem:[%s545 + $0x13a] sm:$0xff]
        %v1111 = vld [vmem:[%s545 + $0x142] sm:$0xff]
        %v1112 = vld [vmem:[%s545 + $0x152] sm:$0xff]
        %v1113 = vld [vmem:[%s545 + $0x15a] sm:$0xff]
        %v1114 = vld [vmem:[%s545 + $0x16a] sm:$0xff]
        %v1115 = vld [vmem:[%s545 + $0x172] sm:$0xff]
        %v1116 = vlaneseq
        %v1117 = vshrl.u32 %v1116, 7
        %v1118 = vsub.s32 0, %v1117
        %v1119 = vrot.slane %v1083, %v1118
        %v1120 = vmul.f32 %v1084, %v1119
        %v1121 = vmul.f32 %v1085, %v1119
        %v1122 = vmul.f32 %v1086, %v1119
        %v1123 = vmul.f32 %v1087, %v1119
        %v1124 = vmul.f32 %v1088, %v1119
        %v1125 = vmul.f32 %v1089, %v1119
        %v1126 = vmul.f32 %v1090, %v1119
        %v1127 = vmul.f32 %v1091, %v1119
        %v1128 = vmul.f32 %v1092, %v1119
        %v1129 = vmul.f32 %v1093, %v1119
        %v1130 = vmul.f32 %v1094, %v1119
        %v1131 = vmul.f32 %v1095, %v1119
        %v1132 = vmul.f32 %v1096, %v1119
        %v1133 = vmul.f32 %v1097, %v1119
        %v1134 = vmul.f32 %v1098, %v1119
        %v1135 = vmul.f32 %v1099, %v1119
        %v1136 = vmul.f32 %v1100, %v1119
        %v1137 = vmul.f32 %v1101, %v1119
        %v1138 = vmul.f32 %v1102, %v1119
        %v1139 = vmul.f32 %v1103, %v1119
        %v1140 = vmul.f32 %v1104, %v1119
        %v1141 = vmul.f32 %v1105, %v1119
        %v1142 = vmul.f32 %v1106, %v1119
        %v1143 = vmul.f32 %v1107, %v1119
        %v1144 = vmul.f32 %v1108, %v1119
        %v1145 = vmul.f32 %v1109, %v1119
        %v1146 = vmul.f32 %v1110, %v1119
        %v1147 = vmul.f32 %v1111, %v1119
        %v1148 = vmul.f32 %v1112, %v1119
        %v1149 = vmul.f32 %v1113, %v1119
        %v1150 = vmul.f32 %v1114, %v1119
        %v1151 = vmul.f32 %v1115, %v1119
        %v1152 = vadd.f32 %v1051, %v1120
        %v1153 = vadd.f32 %v1052, %v1121
        %v1154 = vadd.f32 %v1053, %v1122
        %v1155 = vadd.f32 %v1054, %v1123
        %v1156 = vadd.f32 %v1055, %v1124
        %v1157 = vadd.f32 %v1056, %v1125
        %v1158 = vadd.f32 %v1057, %v1126
        %v1159 = vadd.f32 %v1058, %v1127
        %v1160 = vadd.f32 %v1059, %v1128
        %v1161 = vadd.f32 %v1060, %v1129
        %v1162 = vadd.f32 %v1061, %v1130
        %v1163 = vadd.f32 %v1062, %v1131
        %v1164 = vadd.f32 %v1063, %v1132
        %v1165 = vadd.f32 %v1064, %v1133
        %v1166 = vadd.f32 %v1065, %v1134
        %v1167 = vadd.f32 %v1066, %v1135
        %v1168 = vadd.f32 %v1067, %v1136
        %v1169 = vadd.f32 %v1068, %v1137
        %v1170 = vadd.f32 %v1069, %v1138
        %v1171 = vadd.f32 %v1070, %v1139
        %v1172 = vadd.f32 %v1071, %v1140
        %v1173 = vadd.f32 %v1072, %v1141
        %v1174 = vadd.f32 %v1073, %v1142
        %v1175 = vadd.f32 %v1074, %v1143
        %v1176 = vadd.f32 %v1075, %v1144
        %v1177 = vadd.f32 %v1076, %v1145
        %v1178 = vadd.f32 %v1077, %v1146
        %v1179 = vadd.f32 %v1078, %v1147
        %v1180 = vadd.f32 %v1079, %v1148
        %v1181 = vadd.f32 %v1080, %v1149
        %v1182 = vadd.f32 %v1081, %v1150
        %v1183 = vadd.f32 %v1082, %v1151
        %v1184 = vld [vmem:[%s413 + $0x6] sm:$0x1]
        %s1185 = scalar_lea.vmem [#allocation2], 48
        %v1186 = vld [vmem:[%s1185] sm:$0xff]
        %v1187 = vld [vmem:[%s1185 + $0x8] sm:$0xff]
        %v1188 = vld [vmem:[%s1185 + $0x18] sm:$0xff]
        %v1189 = vld [vmem:[%s1185 + $0x20] sm:$0xff]
        %v1190 = vld [vmem:[%s1185 + $0x30] sm:$0xff]
        %v1191 = vld [vmem:[%s1185 + $0x38] sm:$0xff]
        %v1192 = vld [vmem:[%s1185 + $0x48] sm:$0xff]
        %v1193 = vld [vmem:[%s1185 + $0x50] sm:$0xff]
        %v1194 = vld [vmem:[%s1185 + $0x60] sm:$0xff]
        %v1195 = vld [vmem:[%s1185 + $0x68] sm:$0xff]
        %v1196 = vld [vmem:[%s1185 + $0x78] sm:$0xff]
        %v1197 = vld [vmem:[%s1185 + $0x80] sm:$0xff]
        %v1198 = vld [vmem:[%s1185 + $0x90] sm:$0xff]
        %v1199 = vld [vmem:[%s1185 + $0x98] sm:$0xff]
        %v1200 = vld [vmem:[%s1185 + $0xa8] sm:$0xff]
        %v1201 = vld [vmem:[%s1185 + $0xb0] sm:$0xff]
        %v1202 = vld [vmem:[%s1185 + $0xc0] sm:$0xff]
        %v1203 = vld [vmem:[%s1185 + $0xc8] sm:$0xff]
        %v1204 = vld [vmem:[%s1185 + $0xd8] sm:$0xff]
        %v1205 = vld [vmem:[%s1185 + $0xe0] sm:$0xff]
        %v1206 = vld [vmem:[%s1185 + $0xf0] sm:$0xff]
        %v1207 = vld [vmem:[%s1185 + $0xf8] sm:$0xff]
        %v1208 = vld [vmem:[%s1185 + $0x108] sm:$0xff]
        %v1209 = vld [vmem:[%s1185 + $0x110] sm:$0xff]
        %v1210 = vld [vmem:[%s1185 + $0x120] sm:$0xff]
        %v1211 = vld [vmem:[%s1185 + $0x128] sm:$0xff]
        %v1212 = vld [vmem:[%s1185 + $0x138] sm:$0xff]
        %v1213 = vld [vmem:[%s1185 + $0x140] sm:$0xff]
        %v1214 = vld [vmem:[%s1185 + $0x150] sm:$0xff]
        %v1215 = vld [vmem:[%s1185 + $0x158] sm:$0xff]
        %v1216 = vld [vmem:[%s1185 + $0x168] sm:$0xff]
        %v1217 = vld [vmem:[%s1185 + $0x170] sm:$0xff]
        %v1218 = vlaneseq
        %v1219 = vshrl.u32 %v1218, 7
        %v1220 = vsub.s32 0, %v1219
        %v1221 = vrot.slane %v1184, %v1220
        %v1222 = vmul.f32 %v1186, %v1221
        %v1223 = vmul.f32 %v1187, %v1221
        %v1224 = vmul.f32 %v1188, %v1221
        %v1225 = vmul.f32 %v1189, %v1221
        %v1226 = vmul.f32 %v1190, %v1221
        %v1227 = vmul.f32 %v1191, %v1221
        %v1228 = vmul.f32 %v1192, %v1221
        %v1229 = vmul.f32 %v1193, %v1221
        %v1230 = vmul.f32 %v1194, %v1221
        %v1231 = vmul.f32 %v1195, %v1221
        %v1232 = vmul.f32 %v1196, %v1221
        %v1233 = vmul.f32 %v1197, %v1221
        %v1234 = vmul.f32 %v1198, %v1221
        %v1235 = vmul.f32 %v1199, %v1221
        %v1236 = vmul.f32 %v1200, %v1221
        %v1237 = vmul.f32 %v1201, %v1221
        %v1238 = vmul.f32 %v1202, %v1221
        %v1239 = vmul.f32 %v1203, %v1221
        %v1240 = vmul.f32 %v1204, %v1221
        %v1241 = vmul.f32 %v1205, %v1221
        %v1242 = vmul.f32 %v1206, %v1221
        %v1243 = vmul.f32 %v1207, %v1221
        %v1244 = vmul.f32 %v1208, %v1221
        %v1245 = vmul.f32 %v1209, %v1221
        %v1246 = vmul.f32 %v1210, %v1221
        %v1247 = vmul.f32 %v1211, %v1221
        %v1248 = vmul.f32 %v1212, %v1221
        %v1249 = vmul.f32 %v1213, %v1221
        %v1250 = vmul.f32 %v1214, %v1221
        %v1251 = vmul.f32 %v1215, %v1221
        %v1252 = vmul.f32 %v1216, %v1221
        %v1253 = vmul.f32 %v1217, %v1221
        %v1254 = vadd.f32 %v1152, %v1222
        %v1255 = vadd.f32 %v1153, %v1223
        %v1256 = vadd.f32 %v1154, %v1224
        %v1257 = vadd.f32 %v1155, %v1225
        %v1258 = vadd.f32 %v1156, %v1226
        %v1259 = vadd.f32 %v1157, %v1227
        %v1260 = vadd.f32 %v1158, %v1228
        %v1261 = vadd.f32 %v1159, %v1229
        %v1262 = vadd.f32 %v1160, %v1230
        %v1263 = vadd.f32 %v1161, %v1231
        %v1264 = vadd.f32 %v1162, %v1232
        %v1265 = vadd.f32 %v1163, %v1233
        %v1266 = vadd.f32 %v1164, %v1234
        %v1267 = vadd.f32 %v1165, %v1235
        %v1268 = vadd.f32 %v1166, %v1236
        %v1269 = vadd.f32 %v1167, %v1237
        %v1270 = vadd.f32 %v1168, %v1238
        %v1271 = vadd.f32 %v1169, %v1239
        %v1272 = vadd.f32 %v1170, %v1240
        %v1273 = vadd.f32 %v1171, %v1241
        %v1274 = vadd.f32 %v1172, %v1242
        %v1275 = vadd.f32 %v1173, %v1243
        %v1276 = vadd.f32 %v1174, %v1244
        %v1277 = vadd.f32 %v1175, %v1245
        %v1278 = vadd.f32 %v1176, %v1246
        %v1279 = vadd.f32 %v1177, %v1247
        %v1280 = vadd.f32 %v1178, %v1248
        %v1281 = vadd.f32 %v1179, %v1249
        %v1282 = vadd.f32 %v1180, %v1250
        %v1283 = vadd.f32 %v1181, %v1251
        %v1284 = vadd.f32 %v1182, %v1252
        %v1285 = vadd.f32 %v1183, %v1253
        %v1286 = vld [vmem:[%s413 + $0x7] sm:$0x1]
        %v1287 = vld [vmem:[%s1185 + $0x1] sm:$0xff]
        %v1288 = vld [vmem:[%s1185 + $0x9] sm:$0xff]
        %v1289 = vld [vmem:[%s1185 + $0x19] sm:$0xff]
        %v1290 = vld [vmem:[%s1185 + $0x21] sm:$0xff]
        %v1291 = vld [vmem:[%s1185 + $0x31] sm:$0xff]
        %v1292 = vld [vmem:[%s1185 + $0x39] sm:$0xff]
        %v1293 = vld [vmem:[%s1185 + $0x49] sm:$0xff]
        %v1294 = vld [vmem:[%s1185 + $0x51] sm:$0xff]
        %v1295 = vld [vmem:[%s1185 + $0x61] sm:$0xff]
        %v1296 = vld [vmem:[%s1185 + $0x69] sm:$0xff]
        %v1297 = vld [vmem:[%s1185 + $0x79] sm:$0xff]
        %v1298 = vld [vmem:[%s1185 + $0x81] sm:$0xff]
        %v1299 = vld [vmem:[%s1185 + $0x91] sm:$0xff]
        %v1300 = vld [vmem:[%s1185 + $0x99] sm:$0xff]
        %v1301 = vld [vmem:[%s1185 + $0xa9] sm:$0xff]
        %v1302 = vld [vmem:[%s1185 + $0xb1] sm:$0xff]
        %v1303 = vld [vmem:[%s1185 + $0xc1] sm:$0xff]
        %v1304 = vld [vmem:[%s1185 + $0xc9] sm:$0xff]
        %v1305 = vld [vmem:[%s1185 + $0xd9] sm:$0xff]
        %v1306 = vld [vmem:[%s1185 + $0xe1] sm:$0xff]
        %v1307 = vld [vmem:[%s1185 + $0xf1] sm:$0xff]
        %v1308 = vld [vmem:[%s1185 + $0xf9] sm:$0xff]
        %v1309 = vld [vmem:[%s1185 + $0x109] sm:$0xff]
        %v1310 = vld [vmem:[%s1185 + $0x111] sm:$0xff]
        %v1311 = vld [vmem:[%s1185 + $0x121] sm:$0xff]
        %v1312 = vld [vmem:[%s1185 + $0x129] sm:$0xff]
        %v1313 = vld [vmem:[%s1185 + $0x139] sm:$0xff]
        %v1314 = vld [vmem:[%s1185 + $0x141] sm:$0xff]
        %v1315 = vld [vmem:[%s1185 + $0x151] sm:$0xff]
        %v1316 = vld [vmem:[%s1185 + $0x159] sm:$0xff]
        %v1317 = vld [vmem:[%s1185 + $0x169] sm:$0xff]
        %v1318 = vld [vmem:[%s1185 + $0x171] sm:$0xff]
        %v1319 = vlaneseq
        %v1320 = vshrl.u32 %v1319, 7
        %v1321 = vsub.s32 0, %v1320
        %v1322 = vrot.slane %v1286, %v1321
        %v1323 = vmul.f32 %v1287, %v1322
        %v1324 = vmul.f32 %v1288, %v1322
        %v1325 = vmul.f32 %v1289, %v1322
        %v1326 = vmul.f32 %v1290, %v1322
        %v1327 = vmul.f32 %v1291, %v1322
        %v1328 = vmul.f32 %v1292, %v1322
        %v1329 = vmul.f32 %v1293, %v1322
        %v1330 = vmul.f32 %v1294, %v1322
        %v1331 = vmul.f32 %v1295, %v1322
        %v1332 = vmul.f32 %v1296, %v1322
        %v1333 = vmul.f32 %v1297, %v1322
        %v1334 = vmul.f32 %v1298, %v1322
        %v1335 = vmul.f32 %v1299, %v1322
        %v1336 = vmul.f32 %v1300, %v1322
        %v1337 = vmul.f32 %v1301, %v1322
        %v1338 = vmul.f32 %v1302, %v1322
        %v1339 = vmul.f32 %v1303, %v1322
        %v1340 = vmul.f32 %v1304, %v1322
        %v1341 = vmul.f32 %v1305, %v1322
        %v1342 = vmul.f32 %v1306, %v1322
        %v1343 = vmul.f32 %v1307, %v1322
        %v1344 = vmul.f32 %v1308, %v1322
        %v1345 = vmul.f32 %v1309, %v1322
        %v1346 = vmul.f32 %v1310, %v1322
        %v1347 = vmul.f32 %v1311, %v1322
        %v1348 = vmul.f32 %v1312, %v1322
        %v1349 = vmul.f32 %v1313, %v1322
        %v1350 = vmul.f32 %v1314, %v1322
        %v1351 = vmul.f32 %v1315, %v1322
        %v1352 = vmul.f32 %v1316, %v1322
        %v1353 = vmul.f32 %v1317, %v1322
        %v1354 = vmul.f32 %v1318, %v1322
        %v1355 = vadd.f32 %v1254, %v1323
        %v1356 = vadd.f32 %v1255, %v1324
        %v1357 = vadd.f32 %v1256, %v1325
        %v1358 = vadd.f32 %v1257, %v1326
        %v1359 = vadd.f32 %v1258, %v1327
        %v1360 = vadd.f32 %v1259, %v1328
        %v1361 = vadd.f32 %v1260, %v1329
        %v1362 = vadd.f32 %v1261, %v1330
        %v1363 = vadd.f32 %v1262, %v1331
        %v1364 = vadd.f32 %v1263, %v1332
        %v1365 = vadd.f32 %v1264, %v1333
        %v1366 = vadd.f32 %v1265, %v1334
        %v1367 = vadd.f32 %v1266, %v1335
        %v1368 = vadd.f32 %v1267, %v1336
        %v1369 = vadd.f32 %v1268, %v1337
        %v1370 = vadd.f32 %v1269, %v1338
        %v1371 = vadd.f32 %v1270, %v1339
        %v1372 = vadd.f32 %v1271, %v1340
        %v1373 = vadd.f32 %v1272, %v1341
        %v1374 = vadd.f32 %v1273, %v1342
        %v1375 = vadd.f32 %v1274, %v1343
        %v1376 = vadd.f32 %v1275, %v1344
        %v1377 = vadd.f32 %v1276, %v1345
        %v1378 = vadd.f32 %v1277, %v1346
        %v1379 = vadd.f32 %v1278, %v1347
        %v1380 = vadd.f32 %v1279, %v1348
        %v1381 = vadd.f32 %v1280, %v1349
        %v1382 = vadd.f32 %v1281, %v1350
        %v1383 = vadd.f32 %v1282, %v1351
        %v1384 = vadd.f32 %v1283, %v1352
        %v1385 = vadd.f32 %v1284, %v1353
        %v1386 = vadd.f32 %v1285, %v1354
        %v1387 = vld [vmem:[%s413 + $0x8] sm:$0x1]
        %v1388 = vld [vmem:[%s1185 + $0x2] sm:$0xff]
        %v1389 = vld [vmem:[%s1185 + $0xa] sm:$0xff]
        %v1390 = vld [vmem:[%s1185 + $0x1a] sm:$0xff]
        %v1391 = vld [vmem:[%s1185 + $0x22] sm:$0xff]
        %v1392 = vld [vmem:[%s1185 + $0x32] sm:$0xff]
        %v1393 = vld [vmem:[%s1185 + $0x3a] sm:$0xff]
        %v1394 = vld [vmem:[%s1185 + $0x4a] sm:$0xff]
        %v1395 = vld [vmem:[%s1185 + $0x52] sm:$0xff]
        %v1396 = vld [vmem:[%s1185 + $0x62] sm:$0xff]
        %v1397 = vld [vmem:[%s1185 + $0x6a] sm:$0xff]
        %v1398 = vld [vmem:[%s1185 + $0x7a] sm:$0xff]
        %v1399 = vld [vmem:[%s1185 + $0x82] sm:$0xff]
        %v1400 = vld [vmem:[%s1185 + $0x92] sm:$0xff]
        %v1401 = vld [vmem:[%s1185 + $0x9a] sm:$0xff]
        %v1402 = vld [vmem:[%s1185 + $0xaa] sm:$0xff]
        %v1403 = vld [vmem:[%s1185 + $0xb2] sm:$0xff]
        %v1404 = vld [vmem:[%s1185 + $0xc2] sm:$0xff]
        %v1405 = vld [vmem:[%s1185 + $0xca] sm:$0xff]
        %v1406 = vld [vmem:[%s1185 + $0xda] sm:$0xff]
        %v1407 = vld [vmem:[%s1185 + $0xe2] sm:$0xff]
        %v1408 = vld [vmem:[%s1185 + $0xf2] sm:$0xff]
        %v1409 = vld [vmem:[%s1185 + $0xfa] sm:$0xff]
        %v1410 = vld [vmem:[%s1185 + $0x10a] sm:$0xff]
        %v1411 = vld [vmem:[%s1185 + $0x112] sm:$0xff]
        %v1412 = vld [vmem:[%s1185 + $0x122] sm:$0xff]
        %v1413 = vld [vmem:[%s1185 + $0x12a] sm:$0xff]
        %v1414 = vld [vmem:[%s1185 + $0x13a] sm:$0xff]
        %v1415 = vld [vmem:[%s1185 + $0x142] sm:$0xff]
        %v1416 = vld [vmem:[%s1185 + $0x152] sm:$0xff]
        %v1417 = vld [vmem:[%s1185 + $0x15a] sm:$0xff]
        %v1418 = vld [vmem:[%s1185 + $0x16a] sm:$0xff]
        %v1419 = vld [vmem:[%s1185 + $0x172] sm:$0xff]
        %v1420 = vlaneseq
        %v1421 = vshrl.u32 %v1420, 7
        %v1422 = vsub.s32 0, %v1421
        %v1423 = vrot.slane %v1387, %v1422
        %v1424 = vmul.f32 %v1388, %v1423
        %v1425 = vmul.f32 %v1389, %v1423
        %v1426 = vmul.f32 %v1390, %v1423
        %v1427 = vmul.f32 %v1391, %v1423
        %v1428 = vmul.f32 %v1392, %v1423
        %v1429 = vmul.f32 %v1393, %v1423
        %v1430 = vmul.f32 %v1394, %v1423
        %v1431 = vmul.f32 %v1395, %v1423
        %v1432 = vmul.f32 %v1396, %v1423
        %v1433 = vmul.f32 %v1397, %v1423
        %v1434 = vmul.f32 %v1398, %v1423
        %v1435 = vmul.f32 %v1399, %v1423
        %v1436 = vmul.f32 %v1400, %v1423
        %v1437 = vmul.f32 %v1401, %v1423
        %v1438 = vmul.f32 %v1402, %v1423
        %v1439 = vmul.f32 %v1403, %v1423
        %v1440 = vmul.f32 %v1404, %v1423
        %v1441 = vmul.f32 %v1405, %v1423
        %v1442 = vmul.f32 %v1406, %v1423
        %v1443 = vmul.f32 %v1407, %v1423
        %v1444 = vmul.f32 %v1408, %v1423
        %v1445 = vmul.f32 %v1409, %v1423
        %v1446 = vmul.f32 %v1410, %v1423
        %v1447 = vmul.f32 %v1411, %v1423
        %v1448 = vmul.f32 %v1412, %v1423
        %v1449 = vmul.f32 %v1413, %v1423
        %v1450 = vmul.f32 %v1414, %v1423
        %v1451 = vmul.f32 %v1415, %v1423
        %v1452 = vmul.f32 %v1416, %v1423
        %v1453 = vmul.f32 %v1417, %v1423
        %v1454 = vmul.f32 %v1418, %v1423
        %v1455 = vmul.f32 %v1419, %v1423
        %v1456 = vadd.f32 %v1355, %v1424
        %v1457 = vadd.f32 %v1356, %v1425
        %v1458 = vadd.f32 %v1357, %v1426
        %v1459 = vadd.f32 %v1358, %v1427
        %v1460 = vadd.f32 %v1359, %v1428
        %v1461 = vadd.f32 %v1360, %v1429
        %v1462 = vadd.f32 %v1361, %v1430
        %v1463 = vadd.f32 %v1362, %v1431
        %v1464 = vadd.f32 %v1363, %v1432
        %v1465 = vadd.f32 %v1364, %v1433
        %v1466 = vadd.f32 %v1365, %v1434
        %v1467 = vadd.f32 %v1366, %v1435
        %v1468 = vadd.f32 %v1367, %v1436
        %v1469 = vadd.f32 %v1368, %v1437
        %v1470 = vadd.f32 %v1369, %v1438
        %v1471 = vadd.f32 %v1370, %v1439
        %v1472 = vadd.f32 %v1371, %v1440
        %v1473 = vadd.f32 %v1372, %v1441
        %v1474 = vadd.f32 %v1373, %v1442
        %v1475 = vadd.f32 %v1374, %v1443
        %v1476 = vadd.f32 %v1375, %v1444
        %v1477 = vadd.f32 %v1376, %v1445
        %v1478 = vadd.f32 %v1377, %v1446
        %v1479 = vadd.f32 %v1378, %v1447
        %v1480 = vadd.f32 %v1379, %v1448
        %v1481 = vadd.f32 %v1380, %v1449
        %v1482 = vadd.f32 %v1381, %v1450
        %v1483 = vadd.f32 %v1382, %v1451
        %v1484 = vadd.f32 %v1383, %v1452
        %v1485 = vadd.f32 %v1384, %v1453
        %v1486 = vadd.f32 %v1385, %v1454
        %v1487 = vadd.f32 %v1386, %v1455
        %v1488 = vld [vmem:[%s451] sm:$0x1]
        %v1490 = vlaneseq
        %v1491 = vshrl.u32 %v1490, 7
        %v1492 = vsub.s32 0, %v1491
        %v1493 = vrot.slane %v1488, %v1492
        %v1495 = vadd.f32 %v1456, %v1493
        %v1496 = vadd.f32 %v1457, %v1493
        %v1497 = vadd.f32 %v1458, %v1493
        %v1498 = vadd.f32 %v1459, %v1493
        %v1499 = vadd.f32 %v1460, %v1493
        %v1500 = vadd.f32 %v1461, %v1493
        %v1501 = vadd.f32 %v1462, %v1493
        %v1502 = vadd.f32 %v1463, %v1493
        %v1503 = vadd.f32 %v1464, %v1493
        %v1504 = vadd.f32 %v1465, %v1493
        %v1505 = vadd.f32 %v1466, %v1493
        %v1506 = vadd.f32 %v1467, %v1493
        %v1507 = vadd.f32 %v1468, %v1493
        %v1508 = vadd.f32 %v1469, %v1493
        %v1509 = vadd.f32 %v1470, %v1493
        %v1510 = vadd.f32 %v1471, %v1493
        %v1511 = vadd.f32 %v1472, %v1493
        %v1512 = vadd.f32 %v1473, %v1493
        %v1513 = vadd.f32 %v1474, %v1493
        %v1514 = vadd.f32 %v1475, %v1493
        %v1515 = vadd.f32 %v1476, %v1493
        %v1516 = vadd.f32 %v1477, %v1493
        %v1517 = vadd.f32 %v1478, %v1493
        %v1518 = vadd.f32 %v1479, %v1493
        %v1519 = vadd.f32 %v1480, %v1493
        %v1520 = vadd.f32 %v1481, %v1493
        %v1521 = vadd.f32 %v1482, %v1493
        %v1522 = vadd.f32 %v1483, %v1493
        %v1523 = vadd.f32 %v1484, %v1493
        %v1524 = vadd.f32 %v1485, %v1493
        %v1525 = vadd.f32 %v1486, %v1493
        %v1526 = vadd.f32 %v1487, %v1493
        %v1527 = vmul.f32 %v1495, 0.5
        %v1528 = vmul.f32 %v1496, 0.5
        %v1529 = vmul.f32 %v1497, 0.5
        %v1530 = vmul.f32 %v1498, 0.5
        %v1531 = vmul.f32 %v1499, 0.5
        %v1532 = vmul.f32 %v1500, 0.5
        %v1533 = vmul.f32 %v1501, 0.5
        %v1534 = vmul.f32 %v1502, 0.5
        %v1535 = vmul.f32 %v1503, 0.5
        %v1536 = vmul.f32 %v1504, 0.5
        %v1537 = vmul.f32 %v1505, 0.5
        %v1538 = vmul.f32 %v1506, 0.5
        %v1539 = vmul.f32 %v1507, 0.5
        %v1540 = vmul.f32 %v1508, 0.5
        %v1541 = vmul.f32 %v1509, 0.5
        %v1542 = vmul.f32 %v1510, 0.5
        %v1543 = vmul.f32 %v1511, 0.5
        %v1544 = vmul.f32 %v1512, 0.5
        %v1545 = vmul.f32 %v1513, 0.5
        %v1546 = vmul.f32 %v1514, 0.5
        %v1547 = vmul.f32 %v1515, 0.5
        %v1548 = vmul.f32 %v1516, 0.5
        %v1549 = vmul.f32 %v1517, 0.5
        %v1550 = vmul.f32 %v1518, 0.5
        %v1551 = vmul.f32 %v1519, 0.5
        %v1552 = vmul.f32 %v1520, 0.5
        %v1553 = vmul.f32 %v1521, 0.5
        %v1554 = vmul.f32 %v1522, 0.5
        %v1555 = vmul.f32 %v1523, 0.5
        %v1556 = vmul.f32 %v1524, 0.5
        %v1557 = vmul.f32 %v1525, 0.5
        %v1558 = vmul.f32 %v1526, 0.5
        %v1559 = vmul.f32 %v1495, 0.70710677
        %v1560 = vmul.f32 %v1496, 0.70710677
        %v1561 = vmul.f32 %v1497, 0.70710677
        %v1562 = vmul.f32 %v1498, 0.70710677
        %v1563 = vmul.f32 %v1499, 0.70710677
        %v1564 = vmul.f32 %v1500, 0.70710677
        %v1565 = vmul.f32 %v1501, 0.70710677
        %v1566 = vmul.f32 %v1502, 0.70710677
        %v1567 = vmul.f32 %v1503, 0.70710677
        %v1568 = vmul.f32 %v1504, 0.70710677
        %v1569 = vmul.f32 %v1505, 0.70710677
        %v1570 = vmul.f32 %v1506, 0.70710677
        %v1571 = vmul.f32 %v1507, 0.70710677
        %v1572 = vmul.f32 %v1508, 0.70710677
        %v1573 = vmul.f32 %v1509, 0.70710677
        %v1574 = vmul.f32 %v1510, 0.70710677
        %v1575 = vmul.f32 %v1511, 0.70710677
        %v1576 = vmul.f32 %v1512, 0.70710677
        %v1577 = vmul.f32 %v1513, 0.70710677
        %v1578 = vmul.f32 %v1514, 0.70710677
        %v1579 = vmul.f32 %v1515, 0.70710677
        %v1580 = vmul.f32 %v1516, 0.70710677
        %v1581 = vmul.f32 %v1517, 0.70710677
        %v1582 = vmul.f32 %v1518, 0.70710677
        %v1583 = vmul.f32 %v1519, 0.70710677
        %v1584 = vmul.f32 %v1520, 0.70710677
        %v1585 = vmul.f32 %v1521, 0.70710677
        %v1586 = vmul.f32 %v1522, 0.70710677
        %v1587 = vmul.f32 %v1523, 0.70710677
        %v1588 = vmul.f32 %v1524, 0.70710677
        %v1589 = vmul.f32 %v1525, 0.70710677
        %v1590 = vmul.f32 %v1526, 0.70710677
        %vm1591 = vcmp.lt.f32.partialorder %v1559, 0.0
        %vm1592 = vcmp.lt.f32.partialorder %v1560, 0.0
        %vm1593 = vcmp.lt.f32.partialorder %v1561, 0.0
        %vm1594 = vcmp.lt.f32.partialorder %v1562, 0.0
        %vm1595 = vcmp.lt.f32.partialorder %v1563, 0.0
        %vm1596 = vcmp.lt.f32.partialorder %v1564, 0.0
        %vm1597 = vcmp.lt.f32.partialorder %v1565, 0.0
        %vm1598 = vcmp.lt.f32.partialorder %v1566, 0.0
        %vm1599 = vcmp.lt.f32.partialorder %v1567, 0.0
        %vm1600 = vcmp.lt.f32.partialorder %v1568, 0.0
        %vm1601 = vcmp.lt.f32.partialorder %v1569, 0.0
        %vm1602 = vcmp.lt.f32.partialorder %v1570, 0.0
        %vm1603 = vcmp.lt.f32.partialorder %v1571, 0.0
        %vm1604 = vcmp.lt.f32.partialorder %v1572, 0.0
        %vm1605 = vcmp.lt.f32.partialorder %v1573, 0.0
        %vm1606 = vcmp.lt.f32.partialorder %v1574, 0.0
        %vm1607 = vcmp.lt.f32.partialorder %v1575, 0.0
        %vm1608 = vcmp.lt.f32.partialorder %v1576, 0.0
        %vm1609 = vcmp.lt.f32.partialorder %v1577, 0.0
        %vm1610 = vcmp.lt.f32.partialorder %v1578, 0.0
        %vm1611 = vcmp.lt.f32.partialorder %v1579, 0.0
        %vm1612 = vcmp.lt.f32.partialorder %v1580, 0.0
        %vm1613 = vcmp.lt.f32.partialorder %v1581, 0.0
        %vm1614 = vcmp.lt.f32.partialorder %v1582, 0.0
        %vm1615 = vcmp.lt.f32.partialorder %v1583, 0.0
        %vm1616 = vcmp.lt.f32.partialorder %v1584, 0.0
        %vm1617 = vcmp.lt.f32.partialorder %v1585, 0.0
        %vm1618 = vcmp.lt.f32.partialorder %v1586, 0.0
        %vm1619 = vcmp.lt.f32.partialorder %v1587, 0.0
        %vm1620 = vcmp.lt.f32.partialorder %v1588, 0.0
        %vm1621 = vcmp.lt.f32.partialorder %v1589, 0.0
        %vm1622 = vcmp.lt.f32.partialorder %v1590, 0.0
        %v1623 = vsel %vm1591, -1.0, 1.0
        %v1624 = vsel %vm1592, -1.0, 1.0
        %v1625 = vsel %vm1593, -1.0, 1.0
        %v1626 = vsel %vm1594, -1.0, 1.0
        %v1627 = vsel %vm1595, -1.0, 1.0
        %v1628 = vsel %vm1596, -1.0, 1.0
        %v1629 = vsel %vm1597, -1.0, 1.0
        %v1630 = vsel %vm1598, -1.0, 1.0
        %v1631 = vsel %vm1599, -1.0, 1.0
        %v1632 = vsel %vm1600, -1.0, 1.0
        %v1633 = vsel %vm1601, -1.0, 1.0
        %v1634 = vsel %vm1602, -1.0, 1.0
        %v1635 = vsel %vm1603, -1.0, 1.0
        %v1636 = vsel %vm1604, -1.0, 1.0
        %v1637 = vsel %vm1605, -1.0, 1.0
        %v1638 = vsel %vm1606, -1.0, 1.0
        %v1639 = vsel %vm1607, -1.0, 1.0
        %v1640 = vsel %vm1608, -1.0, 1.0
        %v1641 = vsel %vm1609, -1.0, 1.0
        %v1642 = vsel %vm1610, -1.0, 1.0
        %v1643 = vsel %vm1611, -1.0, 1.0
        %v1644 = vsel %vm1612, -1.0, 1.0
        %v1645 = vsel %vm1613, -1.0, 1.0
        %v1646 = vsel %vm1614, -1.0, 1.0
        %v1647 = vsel %vm1615, -1.0, 1.0
        %v1648 = vsel %vm1616, -1.0, 1.0
        %v1649 = vsel %vm1617, -1.0, 1.0
        %v1650 = vsel %vm1618, -1.0, 1.0
        %v1651 = vsel %vm1619, -1.0, 1.0
        %v1652 = vsel %vm1620, -1.0, 1.0
        %v1653 = vsel %vm1621, -1.0, 1.0
        %v1654 = vsel %vm1622, -1.0, 1.0
        %v1655 = vand.u32 2147483647, %v1559
        %v1656 = vand.u32 2147483647, %v1560
        %v1657 = vand.u32 2147483647, %v1561
        %v1658 = vand.u32 2147483647, %v1562
        %v1659 = vand.u32 2147483647, %v1563
        %v1660 = vand.u32 2147483647, %v1564
        %v1661 = vand.u32 2147483647, %v1565
        %v1662 = vand.u32 2147483647, %v1566
        %v1663 = vand.u32 2147483647, %v1567
        %v1664 = vand.u32 2147483647, %v1568
        %v1665 = vand.u32 2147483647, %v1569
        %v1666 = vand.u32 2147483647, %v1570
        %v1667 = vand.u32 2147483647, %v1571
        %v1668 = vand.u32 2147483647, %v1572
        %v1669 = vand.u32 2147483647, %v1573
        %v1670 = vand.u32 2147483647, %v1574
        %v1671 = vand.u32 2147483647, %v1575
        %v1672 = vand.u32 2147483647, %v1576
        %v1673 = vand.u32 2147483647, %v1577
        %v1674 = vand.u32 2147483647, %v1578
        %v1675 = vand.u32 2147483647, %v1579
        %v1676 = vand.u32 2147483647, %v1580
        %v1677 = vand.u32 2147483647, %v1581
        %v1678 = vand.u32 2147483647, %v1582
        %v1679 = vand.u32 2147483647, %v1583
        %v1680 = vand.u32 2147483647, %v1584
        %v1681 = vand.u32 2147483647, %v1585
        %v1682 = vand.u32 2147483647, %v1586
        %v1683 = vand.u32 2147483647, %v1587
        %v1684 = vand.u32 2147483647, %v1588
        %v1685 = vand.u32 2147483647, %v1589
        %v1686 = vand.u32 2147483647, %v1590
        %v1687 = vmul.f32 %v1655, 0.3275911
        %v1688 = vmul.f32 %v1656, 0.3275911
        %v1689 = vmul.f32 %v1657, 0.3275911
        %v1690 = vmul.f32 %v1658, 0.3275911
        %v1691 = vmul.f32 %v1659, 0.3275911
        %v1692 = vmul.f32 %v1660, 0.3275911
        %v1693 = vmul.f32 %v1661, 0.3275911
        %v1694 = vmul.f32 %v1662, 0.3275911
        %v1695 = vmul.f32 %v1663, 0.3275911
        %v1696 = vmul.f32 %v1664, 0.3275911
        %v1697 = vmul.f32 %v1665, 0.3275911
        %v1698 = vmul.f32 %v1666, 0.3275911
        %v1699 = vmul.f32 %v1667, 0.3275911
        %v1700 = vmul.f32 %v1668, 0.3275911
        %v1701 = vmul.f32 %v1669, 0.3275911
        %v1702 = vmul.f32 %v1670, 0.3275911
        %v1703 = vmul.f32 %v1671, 0.3275911
        %v1704 = vmul.f32 %v1672, 0.3275911
        %v1705 = vmul.f32 %v1673, 0.3275911
        %v1706 = vmul.f32 %v1674, 0.3275911
        %v1707 = vmul.f32 %v1675, 0.3275911
        %v1708 = vmul.f32 %v1676, 0.3275911
        %v1709 = vmul.f32 %v1677, 0.3275911
        %v1710 = vmul.f32 %v1678, 0.3275911
        %v1711 = vmul.f32 %v1679, 0.3275911
        %v1712 = vmul.f32 %v1680, 0.3275911
        %v1713 = vmul.f32 %v1681, 0.3275911
        %v1714 = vmul.f32 %v1682, 0.3275911
        %v1715 = vmul.f32 %v1683, 0.3275911
        %v1716 = vmul.f32 %v1684, 0.3275911
        %v1717 = vmul.f32 %v1685, 0.3275911
        %v1718 = vmul.f32 %v1686, 0.3275911
        %v1719 = vadd.f32 %v1687, 1.0
        %v1720 = vadd.f32 %v1688, 1.0
        %v1721 = vadd.f32 %v1689, 1.0
        %v1722 = vadd.f32 %v1690, 1.0
        %v1723 = vadd.f32 %v1691, 1.0
        %v1724 = vadd.f32 %v1692, 1.0
        %v1725 = vadd.f32 %v1693, 1.0
        %v1726 = vadd.f32 %v1694, 1.0
        %v1727 = vadd.f32 %v1695, 1.0
        %v1728 = vadd.f32 %v1696, 1.0
        %v1729 = vadd.f32 %v1697, 1.0
        %v1730 = vadd.f32 %v1698, 1.0
        %v1731 = vadd.f32 %v1699, 1.0
        %v1732 = vadd.f32 %v1700, 1.0
        %v1733 = vadd.f32 %v1701, 1.0
        %v1734 = vadd.f32 %v1702, 1.0
        %v1735 = vadd.f32 %v1703, 1.0
        %v1736 = vadd.f32 %v1704, 1.0
        %v1737 = vadd.f32 %v1705, 1.0
        %v1738 = vadd.f32 %v1706, 1.0
        %v1739 = vadd.f32 %v1707, 1.0
        %v1740 = vadd.f32 %v1708, 1.0
        %v1741 = vadd.f32 %v1709, 1.0
        %v1742 = vadd.f32 %v1710, 1.0
        %v1743 = vadd.f32 %v1711, 1.0
        %v1744 = vadd.f32 %v1712, 1.0
        %v1745 = vadd.f32 %v1713, 1.0
        %v1746 = vadd.f32 %v1714, 1.0
        %v1747 = vadd.f32 %v1715, 1.0
        %v1748 = vadd.f32 %v1716, 1.0
        %v1749 = vadd.f32 %v1717, 1.0
        %v1750 = vadd.f32 %v1718, 1.0
        %v1751 = vrcp.pop %v1719
        %v1752 = vrcp.pop %v1720
        %v1753 = vrcp.pop %v1721
        %v1754 = vrcp.pop %v1722
        %v1755 = vrcp.pop %v1723
        %v1756 = vrcp.pop %v1724
        %v1757 = vrcp.pop %v1725
        %v1758 = vrcp.pop %v1726
        %v1759 = vrcp.pop %v1727
        %v1760 = vrcp.pop %v1728
        %v1761 = vrcp.pop %v1729
        %v1762 = vrcp.pop %v1730
        %v1763 = vrcp.pop %v1731
        %v1764 = vrcp.pop %v1732
        %v1765 = vrcp.pop %v1733
        %v1766 = vrcp.pop %v1734
        %v1767 = vrcp.pop %v1735
        %v1768 = vrcp.pop %v1736
        %v1769 = vrcp.pop %v1737
        %v1770 = vrcp.pop %v1738
        %v1771 = vrcp.pop %v1739
        %v1772 = vrcp.pop %v1740
        %v1773 = vrcp.pop %v1741
        %v1774 = vrcp.pop %v1742
        %v1775 = vrcp.pop %v1743
        %v1776 = vrcp.pop %v1744
        %v1777 = vrcp.pop %v1745
        %v1778 = vrcp.pop %v1746
        %v1779 = vrcp.pop %v1747
        %v1780 = vrcp.pop %v1748
        %v1781 = vrcp.pop %v1749
        %v1782 = vrcp.pop %v1750
        %v1783 = vmul.f32 %v1719, %v1751
        %v1784 = vmul.f32 %v1720, %v1752
        %v1785 = vmul.f32 %v1721, %v1753
        %v1786 = vmul.f32 %v1722, %v1754
        %v1787 = vmul.f32 %v1723, %v1755
        %v1788 = vmul.f32 %v1724, %v1756
        %v1789 = vmul.f32 %v1725, %v1757
        %v1790 = vmul.f32 %v1726, %v1758
        %v1791 = vmul.f32 %v1727, %v1759
        %v1792 = vmul.f32 %v1728, %v1760
        %v1793 = vmul.f32 %v1729, %v1761
        %v1794 = vmul.f32 %v1730, %v1762
        %v1795 = vmul.f32 %v1731, %v1763
        %v1796 = vmul.f32 %v1732, %v1764
        %v1797 = vmul.f32 %v1733, %v1765
        %v1798 = vmul.f32 %v1734, %v1766
        %v1799 = vmul.f32 %v1735, %v1767
        %v1800 = vmul.f32 %v1736, %v1768
        %v1801 = vmul.f32 %v1737, %v1769
        %v1802 = vmul.f32 %v1738, %v1770
        %v1803 = vmul.f32 %v1739, %v1771
        %v1804 = vmul.f32 %v1740, %v1772
        %v1805 = vmul.f32 %v1741, %v1773
        %v1806 = vmul.f32 %v1742, %v1774
        %v1807 = vmul.f32 %v1743, %v1775
        %v1808 = vmul.f32 %v1744, %v1776
        %v1809 = vmul.f32 %v1745, %v1777
        %v1810 = vmul.f32 %v1746, %v1778
        %v1811 = vmul.f32 %v1747, %v1779
        %v1812 = vmul.f32 %v1748, %v1780
        %v1813 = vmul.f32 %v1749, %v1781
        %v1814 = vmul.f32 %v1750, %v1782
        %v1815 = vsub.f32 2.0, %v1783
        %v1816 = vsub.f32 2.0, %v1784
        %v1817 = vsub.f32 2.0, %v1785
        %v1818 = vsub.f32 2.0, %v1786
        %v1819 = vsub.f32 2.0, %v1787
        %v1820 = vsub.f32 2.0, %v1788
        %v1821 = vsub.f32 2.0, %v1789
        %v1822 = vsub.f32 2.0, %v1790
        %v1823 = vsub.f32 2.0, %v1791
        %v1824 = vsub.f32 2.0, %v1792
        %v1825 = vsub.f32 2.0, %v1793
        %v1826 = vsub.f32 2.0, %v1794
        %v1827 = vsub.f32 2.0, %v1795
        %v1828 = vsub.f32 2.0, %v1796
        %v1829 = vsub.f32 2.0, %v1797
        %v1830 = vsub.f32 2.0, %v1798
        %v1831 = vsub.f32 2.0, %v1799
        %v1832 = vsub.f32 2.0, %v1800
        %v1833 = vsub.f32 2.0, %v1801
        %v1834 = vsub.f32 2.0, %v1802
        %v1835 = vsub.f32 2.0, %v1803
        %v1836 = vsub.f32 2.0, %v1804
        %v1837 = vsub.f32 2.0, %v1805
        %v1838 = vsub.f32 2.0, %v1806
        %v1839 = vsub.f32 2.0, %v1807
        %v1840 = vsub.f32 2.0, %v1808
        %v1841 = vsub.f32 2.0, %v1809
        %v1842 = vsub.f32 2.0, %v1810
        %v1843 = vsub.f32 2.0, %v1811
        %v1844 = vsub.f32 2.0, %v1812
        %v1845 = vsub.f32 2.0, %v1813
        %v1846 = vsub.f32 2.0, %v1814
        %v1847 = vmul.f32 %v1751, %v1815
        %v1848 = vmul.f32 %v1752, %v1816
        %v1849 = vmul.f32 %v1753, %v1817
        %v1850 = vmul.f32 %v1754, %v1818
        %v1851 = vmul.f32 %v1755, %v1819
        %v1852 = vmul.f32 %v1756, %v1820
        %v1853 = vmul.f32 %v1757, %v1821
        %v1854 = vmul.f32 %v1758, %v1822
        %v1855 = vmul.f32 %v1759, %v1823
        %v1856 = vmul.f32 %v1760, %v1824
        %v1857 = vmul.f32 %v1761, %v1825
        %v1858 = vmul.f32 %v1762, %v1826
        %v1859 = vmul.f32 %v1763, %v1827
        %v1860 = vmul.f32 %v1764, %v1828
        %v1861 = vmul.f32 %v1765, %v1829
        %v1862 = vmul.f32 %v1766, %v1830
        %v1863 = vmul.f32 %v1767, %v1831
        %v1864 = vmul.f32 %v1768, %v1832
        %v1865 = vmul.f32 %v1769, %v1833
        %v1866 = vmul.f32 %v1770, %v1834
        %v1867 = vmul.f32 %v1771, %v1835
        %v1868 = vmul.f32 %v1772, %v1836
        %v1869 = vmul.f32 %v1773, %v1837
        %v1870 = vmul.f32 %v1774, %v1838
        %v1871 = vmul.f32 %v1775, %v1839
        %v1872 = vmul.f32 %v1776, %v1840
        %v1873 = vmul.f32 %v1777, %v1841
        %v1874 = vmul.f32 %v1778, %v1842
        %v1875 = vmul.f32 %v1779, %v1843
        %v1876 = vmul.f32 %v1780, %v1844
        %v1877 = vmul.f32 %v1781, %v1845
        %v1878 = vmul.f32 %v1782, %v1846
        %v1879 = vmul.f32 %v1847, 1.0614054
        %v1880 = vmul.f32 %v1848, 1.0614054
        %v1881 = vmul.f32 %v1849, 1.0614054
        %v1882 = vmul.f32 %v1850, 1.0614054
        %v1883 = vmul.f32 %v1851, 1.0614054
        %v1884 = vmul.f32 %v1852, 1.0614054
        %v1885 = vmul.f32 %v1853, 1.0614054
        %v1886 = vmul.f32 %v1854, 1.0614054
        %v1887 = vmul.f32 %v1855, 1.0614054
        %v1888 = vmul.f32 %v1856, 1.0614054
        %v1889 = vmul.f32 %v1857, 1.0614054
        %v1890 = vmul.f32 %v1858, 1.0614054
        %v1891 = vmul.f32 %v1859, 1.0614054
        %v1892 = vmul.f32 %v1860, 1.0614054
        %v1893 = vmul.f32 %v1861, 1.0614054
        %v1894 = vmul.f32 %v1862, 1.0614054
        %v1895 = vmul.f32 %v1863, 1.0614054
        %v1896 = vmul.f32 %v1864, 1.0614054
        %v1897 = vmul.f32 %v1865, 1.0614054
        %v1898 = vmul.f32 %v1866, 1.0614054
        %v1899 = vmul.f32 %v1867, 1.0614054
        %v1900 = vmul.f32 %v1868, 1.0614054
        %v1901 = vmul.f32 %v1869, 1.0614054
        %v1902 = vmul.f32 %v1870, 1.0614054
        %v1903 = vmul.f32 %v1871, 1.0614054
        %v1904 = vmul.f32 %v1872, 1.0614054
        %v1905 = vmul.f32 %v1873, 1.0614054
        %v1906 = vmul.f32 %v1874, 1.0614054
        %v1907 = vmul.f32 %v1875, 1.0614054
        %v1908 = vmul.f32 %v1876, 1.0614054
        %v1909 = vmul.f32 %v1877, 1.0614054
        %v1910 = vmul.f32 %v1878, 1.0614054
        %v1911 = vadd.f32 %v1879, -1.4531521
        %v1912 = vadd.f32 %v1880, -1.4531521
        %v1913 = vadd.f32 %v1881, -1.4531521
        %v1914 = vadd.f32 %v1882, -1.4531521
        %v1915 = vadd.f32 %v1883, -1.4531521
        %v1916 = vadd.f32 %v1884, -1.4531521
        %v1917 = vadd.f32 %v1885, -1.4531521
        %v1918 = vadd.f32 %v1886, -1.4531521
        %v1919 = vadd.f32 %v1887, -1.4531521
        %v1920 = vadd.f32 %v1888, -1.4531521
        %v1921 = vadd.f32 %v1889, -1.4531521
        %v1922 = vadd.f32 %v1890, -1.4531521
        %v1923 = vadd.f32 %v1891, -1.4531521
        %v1924 = vadd.f32 %v1892, -1.4531521
        %v1925 = vadd.f32 %v1893, -1.4531521
        %v1926 = vadd.f32 %v1894, -1.4531521
        %v1927 = vadd.f32 %v1895, -1.4531521
        %v1928 = vadd.f32 %v1896, -1.4531521
        %v1929 = vadd.f32 %v1897, -1.4531521
        %v1930 = vadd.f32 %v1898, -1.4531521
        %v1931 = vadd.f32 %v1899, -1.4531521
        %v1932 = vadd.f32 %v1900, -1.4531521
        %v1933 = vadd.f32 %v1901, -1.4531521
        %v1934 = vadd.f32 %v1902, -1.4531521
        %v1935 = vadd.f32 %v1903, -1.4531521
        %v1936 = vadd.f32 %v1904, -1.4531521
        %v1937 = vadd.f32 %v1905, -1.4531521
        %v1938 = vadd.f32 %v1906, -1.4531521
        %v1939 = vadd.f32 %v1907, -1.4531521
        %v1940 = vadd.f32 %v1908, -1.4531521
        %v1941 = vadd.f32 %v1909, -1.4531521
        %v1942 = vadd.f32 %v1910, -1.4531521
        %v1943 = vmul.f32 %v1911, %v1847
        %v1944 = vmul.f32 %v1912, %v1848
        %v1945 = vmul.f32 %v1913, %v1849
        %v1946 = vmul.f32 %v1914, %v1850
        %v1947 = vmul.f32 %v1915, %v1851
        %v1948 = vmul.f32 %v1916, %v1852
        %v1949 = vmul.f32 %v1917, %v1853
        %v1950 = vmul.f32 %v1918, %v1854
        %v1951 = vmul.f32 %v1919, %v1855
        %v1952 = vmul.f32 %v1920, %v1856
        %v1953 = vmul.f32 %v1921, %v1857
        %v1954 = vmul.f32 %v1922, %v1858
        %v1955 = vmul.f32 %v1923, %v1859
        %v1956 = vmul.f32 %v1924, %v1860
        %v1957 = vmul.f32 %v1925, %v1861
        %v1958 = vmul.f32 %v1926, %v1862
        %v1959 = vmul.f32 %v1927, %v1863
        %v1960 = vmul.f32 %v1928, %v1864
        %v1961 = vmul.f32 %v1929, %v1865
        %v1962 = vmul.f32 %v1930, %v1866
        %v1963 = vmul.f32 %v1931, %v1867
        %v1964 = vmul.f32 %v1932, %v1868
        %v1965 = vmul.f32 %v1933, %v1869
        %v1966 = vmul.f32 %v1934, %v1870
        %v1967 = vmul.f32 %v1935, %v1871
        %v1968 = vmul.f32 %v1936, %v1872
        %v1969 = vmul.f32 %v1937, %v1873
        %v1970 = vmul.f32 %v1938, %v1874
        %v1971 = vmul.f32 %v1939, %v1875
        %v1972 = vmul.f32 %v1940, %v1876
        %v1973 = vmul.f32 %v1941, %v1877
        %v1974 = vmul.f32 %v1942, %v1878
        %v1975 = vadd.f32 %v1943, 1.4214138
        %v1976 = vadd.f32 %v1944, 1.4214138
        %v1977 = vadd.f32 %v1945, 1.4214138
        %v1978 = vadd.f32 %v1946, 1.4214138
        %v1979 = vadd.f32 %v1947, 1.4214138
        %v1980 = vadd.f32 %v1948, 1.4214138
        %v1981 = vadd.f32 %v1949, 1.4214138
        %v1982 = vadd.f32 %v1950, 1.4214138
        %v1983 = vadd.f32 %v1951, 1.4214138
        %v1984 = vadd.f32 %v1952, 1.4214138
        %v1985 = vadd.f32 %v1953, 1.4214138
        %v1986 = vadd.f32 %v1954, 1.4214138
        %v1987 = vadd.f32 %v1955, 1.4214138
        %v1988 = vadd.f32 %v1956, 1.4214138
        %v1989 = vadd.f32 %v1957, 1.4214138
        %v1990 = vadd.f32 %v1958, 1.4214138
        %v1991 = vadd.f32 %v1959, 1.4214138
        %v1992 = vadd.f32 %v1960, 1.4214138
        %v1993 = vadd.f32 %v1961, 1.4214138
        %v1994 = vadd.f32 %v1962, 1.4214138
        %v1995 = vadd.f32 %v1963, 1.4214138
        %v1996 = vadd.f32 %v1964, 1.4214138
        %v1997 = vadd.f32 %v1965, 1.4214138
        %v1998 = vadd.f32 %v1966, 1.4214138
        %v1999 = vadd.f32 %v1967, 1.4214138
        %v2000 = vadd.f32 %v1968, 1.4214138
        %v2001 = vadd.f32 %v1969, 1.4214138
        %v2002 = vadd.f32 %v1970, 1.4214138
        %v2003 = vadd.f32 %v1971, 1.4214138
        %v2004 = vadd.f32 %v1972, 1.4214138
        %v2005 = vadd.f32 %v1973, 1.4214138
        %v2006 = vadd.f32 %v1974, 1.4214138
        %v2007 = vmul.f32 %v1975, %v1847
        %v2008 = vmul.f32 %v1976, %v1848
        %v2009 = vmul.f32 %v1977, %v1849
        %v2010 = vmul.f32 %v1978, %v1850
        %v2011 = vmul.f32 %v1979, %v1851
        %v2012 = vmul.f32 %v1980, %v1852
        %v2013 = vmul.f32 %v1981, %v1853
        %v2014 = vmul.f32 %v1982, %v1854
        %v2015 = vmul.f32 %v1983, %v1855
        %v2016 = vmul.f32 %v1984, %v1856
        %v2017 = vmul.f32 %v1985, %v1857
        %v2018 = vmul.f32 %v1986, %v1858
        %v2019 = vmul.f32 %v1987, %v1859
        %v2020 = vmul.f32 %v1988, %v1860
        %v2021 = vmul.f32 %v1989, %v1861
        %v2022 = vmul.f32 %v1990, %v1862
        %v2023 = vmul.f32 %v1991, %v1863
        %v2024 = vmul.f32 %v1992, %v1864
        %v2025 = vmul.f32 %v1993, %v1865
        %v2026 = vmul.f32 %v1994, %v1866
        %v2027 = vmul.f32 %v1995, %v1867
        %v2028 = vmul.f32 %v1996, %v1868
        %v2029 = vmul.f32 %v1997, %v1869
        %v2030 = vmul.f32 %v1998, %v1870
        %v2031 = vmul.f32 %v1999, %v1871
        %v2032 = vmul.f32 %v2000, %v1872
        %v2033 = vmul.f32 %v2001, %v1873
        %v2034 = vmul.f32 %v2002, %v1874
        %v2035 = vmul.f32 %v2003, %v1875
        %v2036 = vmul.f32 %v2004, %v1876
        %v2037 = vmul.f32 %v2005, %v1877
        %v2038 = vmul.f32 %v2006, %v1878
        %v2039 = vadd.f32 %v2007, -0.28449672
        %v2040 = vadd.f32 %v2008, -0.28449672
        %v2041 = vadd.f32 %v2009, -0.28449672
        %v2042 = vadd.f32 %v2010, -0.28449672
        %v2043 = vadd.f32 %v2011, -0.28449672
        %v2044 = vadd.f32 %v2012, -0.28449672
        %v2045 = vadd.f32 %v2013, -0.28449672
        %v2046 = vadd.f32 %v2014, -0.28449672
        %v2047 = vadd.f32 %v2015, -0.28449672
        %v2048 = vadd.f32 %v2016, -0.28449672
        %v2049 = vadd.f32 %v2017, -0.28449672
        %v2050 = vadd.f32 %v2018, -0.28449672
        %v2051 = vadd.f32 %v2019, -0.28449672
        %v2052 = vadd.f32 %v2020, -0.28449672
        %v2053 = vadd.f32 %v2021, -0.28449672
        %v2054 = vadd.f32 %v2022, -0.28449672
        %v2055 = vadd.f32 %v2023, -0.28449672
        %v2056 = vadd.f32 %v2024, -0.28449672
        %v2057 = vadd.f32 %v2025, -0.28449672
        %v2058 = vadd.f32 %v2026, -0.28449672
        %v2059 = vadd.f32 %v2027, -0.28449672
        %v2060 = vadd.f32 %v2028, -0.28449672
        %v2061 = vadd.f32 %v2029, -0.28449672
        %v2062 = vadd.f32 %v2030, -0.28449672
        %v2063 = vadd.f32 %v2031, -0.28449672
        %v2064 = vadd.f32 %v2032, -0.28449672
        %v2065 = vadd.f32 %v2033, -0.28449672
        %v2066 = vadd.f32 %v2034, -0.28449672
        %v2067 = vadd.f32 %v2035, -0.28449672
        %v2068 = vadd.f32 %v2036, -0.28449672
        %v2069 = vadd.f32 %v2037, -0.28449672
        %v2070 = vadd.f32 %v2038, -0.28449672
        %v2071 = vmul.f32 %v2039, %v1847
        %v2072 = vmul.f32 %v2040, %v1848
        %v2073 = vmul.f32 %v2041, %v1849
        %v2074 = vmul.f32 %v2042, %v1850
        %v2075 = vmul.f32 %v2043, %v1851
        %v2076 = vmul.f32 %v2044, %v1852
        %v2077 = vmul.f32 %v2045, %v1853
        %v2078 = vmul.f32 %v2046, %v1854
        %v2079 = vmul.f32 %v2047, %v1855
        %v2080 = vmul.f32 %v2048, %v1856
        %v2081 = vmul.f32 %v2049, %v1857
        %v2082 = vmul.f32 %v2050, %v1858
        %v2083 = vmul.f32 %v2051, %v1859
        %v2084 = vmul.f32 %v2052, %v1860
        %v2085 = vmul.f32 %v2053, %v1861
        %v2086 = vmul.f32 %v2054, %v1862
        %v2087 = vmul.f32 %v2055, %v1863
        %v2088 = vmul.f32 %v2056, %v1864
        %v2089 = vmul.f32 %v2057, %v1865
        %v2090 = vmul.f32 %v2058, %v1866
        %v2091 = vmul.f32 %v2059, %v1867
        %v2092 = vmul.f32 %v2060, %v1868
        %v2093 = vmul.f32 %v2061, %v1869
        %v2094 = vmul.f32 %v2062, %v1870
        %v2095 = vmul.f32 %v2063, %v1871
        %v2096 = vmul.f32 %v2064, %v1872
        %v2097 = vmul.f32 %v2065, %v1873
        %v2098 = vmul.f32 %v2066, %v1874
        %v2099 = vmul.f32 %v2067, %v1875
        %v2100 = vmul.f32 %v2068, %v1876
        %v2101 = vmul.f32 %v2069, %v1877
        %v2102 = vmul.f32 %v2070, %v1878
        %v2103 = vadd.f32 %v2071, 0.2548296
        %v2104 = vadd.f32 %v2072, 0.2548296
        %v2105 = vadd.f32 %v2073, 0.2548296
        %v2106 = vadd.f32 %v2074, 0.2548296
        %v2107 = vadd.f32 %v2075, 0.2548296
        %v2108 = vadd.f32 %v2076, 0.2548296
        %v2109 = vadd.f32 %v2077, 0.2548296
        %v2110 = vadd.f32 %v2078, 0.2548296
        %v2111 = vadd.f32 %v2079, 0.2548296
        %v2112 = vadd.f32 %v2080, 0.2548296
        %v2113 = vadd.f32 %v2081, 0.2548296
        %v2114 = vadd.f32 %v2082, 0.2548296
        %v2115 = vadd.f32 %v2083, 0.2548296
        %v2116 = vadd.f32 %v2084, 0.2548296
        %v2117 = vadd.f32 %v2085, 0.2548296
        %v2118 = vadd.f32 %v2086, 0.2548296
        %v2119 = vadd.f32 %v2087, 0.2548296
        %v2120 = vadd.f32 %v2088, 0.2548296
        %v2121 = vadd.f32 %v2089, 0.2548296
        %v2122 = vadd.f32 %v2090, 0.2548296
        %v2123 = vadd.f32 %v2091, 0.2548296
        %v2124 = vadd.f32 %v2092, 0.2548296
        %v2125 = vadd.f32 %v2093, 0.2548296
        %v2126 = vadd.f32 %v2094, 0.2548296
        %v2127 = vadd.f32 %v2095, 0.2548296
        %v2128 = vadd.f32 %v2096, 0.2548296
        %v2129 = vadd.f32 %v2097, 0.2548296
        %v2130 = vadd.f32 %v2098, 0.2548296
        %v2131 = vadd.f32 %v2099, 0.2548296
        %v2132 = vadd.f32 %v2100, 0.2548296
        %v2133 = vadd.f32 %v2101, 0.2548296
        %v2134 = vadd.f32 %v2102, 0.2548296
        %v2135 = vmul.f32 %v2103, %v1847
        %v2136 = vmul.f32 %v2104, %v1848
        %v2137 = vmul.f32 %v2105, %v1849
        %v2138 = vmul.f32 %v2106, %v1850
        %v2139 = vmul.f32 %v2107, %v1851
        %v2140 = vmul.f32 %v2108, %v1852
        %v2141 = vmul.f32 %v2109, %v1853
        %v2142 = vmul.f32 %v2110, %v1854
        %v2143 = vmul.f32 %v2111, %v1855
        %v2144 = vmul.f32 %v2112, %v1856
        %v2145 = vmul.f32 %v2113, %v1857
        %v2146 = vmul.f32 %v2114, %v1858
        %v2147 = vmul.f32 %v2115, %v1859
        %v2148 = vmul.f32 %v2116, %v1860
        %v2149 = vmul.f32 %v2117, %v1861
        %v2150 = vmul.f32 %v2118, %v1862
        %v2151 = vmul.f32 %v2119, %v1863
        %v2152 = vmul.f32 %v2120, %v1864
        %v2153 = vmul.f32 %v2121, %v1865
        %v2154 = vmul.f32 %v2122, %v1866
        %v2155 = vmul.f32 %v2123, %v1867
        %v2156 = vmul.f32 %v2124, %v1868
        %v2157 = vmul.f32 %v2125, %v1869
        %v2158 = vmul.f32 %v2126, %v1870
        %v2159 = vmul.f32 %v2127, %v1871
        %v2160 = vmul.f32 %v2128, %v1872
        %v2161 = vmul.f32 %v2129, %v1873
        %v2162 = vmul.f32 %v2130, %v1874
        %v2163 = vmul.f32 %v2131, %v1875
        %v2164 = vmul.f32 %v2132, %v1876
        %v2165 = vmul.f32 %v2133, %v1877
        %v2166 = vmul.f32 %v2134, %v1878
        %v2167 = vsub.f32 0.0, %v1655
        %v2168 = vsub.f32 0.0, %v1656
        %v2169 = vsub.f32 0.0, %v1657
        %v2170 = vsub.f32 0.0, %v1658
        %v2171 = vsub.f32 0.0, %v1659
        %v2172 = vsub.f32 0.0, %v1660
        %v2173 = vsub.f32 0.0, %v1661
        %v2174 = vsub.f32 0.0, %v1662
        %v2175 = vsub.f32 0.0, %v1663
        %v2176 = vsub.f32 0.0, %v1664
        %v2177 = vsub.f32 0.0, %v1665
        %v2178 = vsub.f32 0.0, %v1666
        %v2179 = vsub.f32 0.0, %v1667
        %v2180 = vsub.f32 0.0, %v1668
        %v2181 = vsub.f32 0.0, %v1669
        %v2182 = vsub.f32 0.0, %v1670
        %v2183 = vsub.f32 0.0, %v1671
        %v2184 = vsub.f32 0.0, %v1672
        %v2185 = vsub.f32 0.0, %v1673
        %v2186 = vsub.f32 0.0, %v1674
        %v2187 = vsub.f32 0.0, %v1675
        %v2188 = vsub.f32 0.0, %v1676
        %v2189 = vsub.f32 0.0, %v1677
        %v2190 = vsub.f32 0.0, %v1678
        %v2191 = vsub.f32 0.0, %v1679
        %v2192 = vsub.f32 0.0, %v1680
        %v2193 = vsub.f32 0.0, %v1681
        %v2194 = vsub.f32 0.0, %v1682
        %v2195 = vsub.f32 0.0, %v1683
        %v2196 = vsub.f32 0.0, %v1684
        %v2197 = vsub.f32 0.0, %v1685
        %v2198 = vsub.f32 0.0, %v1686
        %v2199 = vmul.f32 %v2167, %v1655
        %v2200 = vmul.f32 %v2168, %v1656
        %v2201 = vmul.f32 %v2169, %v1657
        %v2202 = vmul.f32 %v2170, %v1658
        %v2203 = vmul.f32 %v2171, %v1659
        %v2204 = vmul.f32 %v2172, %v1660
        %v2205 = vmul.f32 %v2173, %v1661
        %v2206 = vmul.f32 %v2174, %v1662
        %v2207 = vmul.f32 %v2175, %v1663
        %v2208 = vmul.f32 %v2176, %v1664
        %v2209 = vmul.f32 %v2177, %v1665
        %v2210 = vmul.f32 %v2178, %v1666
        %v2211 = vmul.f32 %v2179, %v1667
        %v2212 = vmul.f32 %v2180, %v1668
        %v2213 = vmul.f32 %v2181, %v1669
        %v2214 = vmul.f32 %v2182, %v1670
        %v2215 = vmul.f32 %v2183, %v1671
        %v2216 = vmul.f32 %v2184, %v1672
        %v2217 = vmul.f32 %v2185, %v1673
        %v2218 = vmul.f32 %v2186, %v1674
        %v2219 = vmul.f32 %v2187, %v1675
        %v2220 = vmul.f32 %v2188, %v1676
        %v2221 = vmul.f32 %v2189, %v1677
        %v2222 = vmul.f32 %v2190, %v1678
        %v2223 = vmul.f32 %v2191, %v1679
        %v2224 = vmul.f32 %v2192, %v1680
        %v2225 = vmul.f32 %v2193, %v1681
        %v2226 = vmul.f32 %v2194, %v1682
        %v2227 = vmul.f32 %v2195, %v1683
        %v2228 = vmul.f32 %v2196, %v1684
        %v2229 = vmul.f32 %v2197, %v1685
        %v2230 = vmul.f32 %v2198, %v1686
        %v2231 = vmul.f32 %v2199, 1.442695
        %v2232 = vpow.pop %v2231
        %v2233 = vmul.f32 %v2200, 1.442695
        %v2234 = vpow.pop %v2233
        %v2235 = vmul.f32 %v2201, 1.442695
        %v2236 = vpow.pop %v2235
        %v2237 = vmul.f32 %v2202, 1.442695
        %v2238 = vpow.pop %v2237
        %v2239 = vmul.f32 %v2203, 1.442695
        %v2240 = vpow.pop %v2239
        %v2241 = vmul.f32 %v2204, 1.442695
        %v2242 = vpow.pop %v2241
        %v2243 = vmul.f32 %v2205, 1.442695
        %v2244 = vpow.pop %v2243
        %v2245 = vmul.f32 %v2206, 1.442695
        %v2246 = vpow.pop %v2245
        %v2247 = vmul.f32 %v2207, 1.442695
        %v2248 = vpow.pop %v2247
        %v2249 = vmul.f32 %v2208, 1.442695
        %v2250 = vpow.pop %v2249
        %v2251 = vmul.f32 %v2209, 1.442695
        %v2252 = vpow.pop %v2251
        %v2253 = vmul.f32 %v2210, 1.442695
        %v2254 = vpow.pop %v2253
        %v2255 = vmul.f32 %v2211, 1.442695
        %v2256 = vpow.pop %v2255
        %v2257 = vmul.f32 %v2212, 1.442695
        %v2258 = vpow.pop %v2257
        %v2259 = vmul.f32 %v2213, 1.442695
        %v2260 = vpow.pop %v2259
        %v2261 = vmul.f32 %v2214, 1.442695
        %v2262 = vpow.pop %v2261
        %v2263 = vmul.f32 %v2215, 1.442695
        %v2264 = vpow.pop %v2263
        %v2265 = vmul.f32 %v2216, 1.442695
        %v2266 = vpow.pop %v2265
        %v2267 = vmul.f32 %v2217, 1.442695
        %v2268 = vpow.pop %v2267
        %v2269 = vmul.f32 %v2218, 1.442695
        %v2270 = vpow.pop %v2269
        %v2271 = vmul.f32 %v2219, 1.442695
        %v2272 = vpow.pop %v2271
        %v2273 = vmul.f32 %v2220, 1.442695
        %v2274 = vpow.pop %v2273
        %v2275 = vmul.f32 %v2221, 1.442695
        %v2276 = vpow.pop %v2275
        %v2277 = vmul.f32 %v2222, 1.442695
        %v2278 = vpow.pop %v2277
        %v2279 = vmul.f32 %v2223, 1.442695
        %v2280 = vpow.pop %v2279
        %v2281 = vmul.f32 %v2224, 1.442695
        %v2282 = vpow.pop %v2281
        %v2283 = vmul.f32 %v2225, 1.442695
        %v2284 = vpow.pop %v2283
        %v2285 = vmul.f32 %v2226, 1.442695
        %v2286 = vpow.pop %v2285
        %v2287 = vmul.f32 %v2227, 1.442695
        %v2288 = vpow.pop %v2287
        %v2289 = vmul.f32 %v2228, 1.442695
        %v2290 = vpow.pop %v2289
        %v2291 = vmul.f32 %v2229, 1.442695
        %v2292 = vpow.pop %v2291
        %v2293 = vmul.f32 %v2230, 1.442695
        %v2294 = vpow.pop %v2293
        %v2295 = vmul.f32 %v2135, %v2232
        %v2296 = vmul.f32 %v2136, %v2234
        %v2297 = vmul.f32 %v2137, %v2236
        %v2298 = vmul.f32 %v2138, %v2238
        %v2299 = vmul.f32 %v2139, %v2240
        %v2300 = vmul.f32 %v2140, %v2242
        %v2301 = vmul.f32 %v2141, %v2244
        %v2302 = vmul.f32 %v2142, %v2246
        %v2303 = vmul.f32 %v2143, %v2248
        %v2304 = vmul.f32 %v2144, %v2250
        %v2305 = vmul.f32 %v2145, %v2252
        %v2306 = vmul.f32 %v2146, %v2254
        %v2307 = vmul.f32 %v2147, %v2256
        %v2308 = vmul.f32 %v2148, %v2258
        %v2309 = vmul.f32 %v2149, %v2260
        %v2310 = vmul.f32 %v2150, %v2262
        %v2311 = vmul.f32 %v2151, %v2264
        %v2312 = vmul.f32 %v2152, %v2266
        %v2313 = vmul.f32 %v2153, %v2268
        %v2314 = vmul.f32 %v2154, %v2270
        %v2315 = vmul.f32 %v2155, %v2272
        %v2316 = vmul.f32 %v2156, %v2274
        %v2317 = vmul.f32 %v2157, %v2276
        %v2318 = vmul.f32 %v2158, %v2278
        %v2319 = vmul.f32 %v2159, %v2280
        %v2320 = vmul.f32 %v2160, %v2282
        %v2321 = vmul.f32 %v2161, %v2284
        %v2322 = vmul.f32 %v2162, %v2286
        %v2323 = vmul.f32 %v2163, %v2288
        %v2324 = vmul.f32 %v2164, %v2290
        %v2325 = vmul.f32 %v2165, %v2292
        %v2326 = vmul.f32 %v2166, %v2294
        %v2327 = vsub.f32 1.0, %v2295
        %v2328 = vsub.f32 1.0, %v2296
        %v2329 = vsub.f32 1.0, %v2297
        %v2330 = vsub.f32 1.0, %v2298
        %v2331 = vsub.f32 1.0, %v2299
        %v2332 = vsub.f32 1.0, %v2300
        %v2333 = vsub.f32 1.0, %v2301
        %v2334 = vsub.f32 1.0, %v2302
        %v2335 = vsub.f32 1.0, %v2303
        %v2336 = vsub.f32 1.0, %v2304
        %v2337 = vsub.f32 1.0, %v2305
        %v2338 = vsub.f32 1.0, %v2306
        %v2339 = vsub.f32 1.0, %v2307
        %v2340 = vsub.f32 1.0, %v2308
        %v2341 = vsub.f32 1.0, %v2309
        %v2342 = vsub.f32 1.0, %v2310
        %v2343 = vsub.f32 1.0, %v2311
        %v2344 = vsub.f32 1.0, %v2312
        %v2345 = vsub.f32 1.0, %v2313
        %v2346 = vsub.f32 1.0, %v2314
        %v2347 = vsub.f32 1.0, %v2315
        %v2348 = vsub.f32 1.0, %v2316
        %v2349 = vsub.f32 1.0, %v2317
        %v2350 = vsub.f32 1.0, %v2318
        %v2351 = vsub.f32 1.0, %v2319
        %v2352 = vsub.f32 1.0, %v2320
        %v2353 = vsub.f32 1.0, %v2321
        %v2354 = vsub.f32 1.0, %v2322
        %v2355 = vsub.f32 1.0, %v2323
        %v2356 = vsub.f32 1.0, %v2324
        %v2357 = vsub.f32 1.0, %v2325
        %v2358 = vsub.f32 1.0, %v2326
        %v2359 = vmul.f32 %v1623, %v2327
        %v2360 = vmul.f32 %v1624, %v2328
        %v2361 = vmul.f32 %v1625, %v2329
        %v2362 = vmul.f32 %v1626, %v2330
        %v2363 = vmul.f32 %v1627, %v2331
        %v2364 = vmul.f32 %v1628, %v2332
        %v2365 = vmul.f32 %v1629, %v2333
        %v2366 = vmul.f32 %v1630, %v2334
        %v2367 = vmul.f32 %v1631, %v2335
        %v2368 = vmul.f32 %v1632, %v2336
        %v2369 = vmul.f32 %v1633, %v2337
        %v2370 = vmul.f32 %v1634, %v2338
        %v2371 = vmul.f32 %v1635, %v2339
        %v2372 = vmul.f32 %v1636, %v2340
        %v2373 = vmul.f32 %v1637, %v2341
        %v2374 = vmul.f32 %v1638, %v2342
        %v2375 = vmul.f32 %v1639, %v2343
        %v2376 = vmul.f32 %v1640, %v2344
        %v2377 = vmul.f32 %v1641, %v2345
        %v2378 = vmul.f32 %v1642, %v2346
        %v2379 = vmul.f32 %v1643, %v2347
        %v2380 = vmul.f32 %v1644, %v2348
        %v2381 = vmul.f32 %v1645, %v2349
        %v2382 = vmul.f32 %v1646, %v2350
        %v2383 = vmul.f32 %v1647, %v2351
        %v2384 = vmul.f32 %v1648, %v2352
        %v2385 = vmul.f32 %v1649, %v2353
        %v2386 = vmul.f32 %v1650, %v2354
        %v2387 = vmul.f32 %v1651, %v2355
        %v2388 = vmul.f32 %v1652, %v2356
        %v2389 = vmul.f32 %v1653, %v2357
        %v2390 = vmul.f32 %v1654, %v2358
        %v2391 = vadd.f32 %v2359, 1.0
        %v2392 = vadd.f32 %v2360, 1.0
        %v2393 = vadd.f32 %v2361, 1.0
        %v2394 = vadd.f32 %v2362, 1.0
        %v2395 = vadd.f32 %v2363, 1.0
        %v2396 = vadd.f32 %v2364, 1.0
        %v2397 = vadd.f32 %v2365, 1.0
        %v2398 = vadd.f32 %v2366, 1.0
        %v2399 = vadd.f32 %v2367, 1.0
        %v2400 = vadd.f32 %v2368, 1.0
        %v2401 = vadd.f32 %v2369, 1.0
        %v2402 = vadd.f32 %v2370, 1.0
        %v2403 = vadd.f32 %v2371, 1.0
        %v2404 = vadd.f32 %v2372, 1.0
        %v2405 = vadd.f32 %v2373, 1.0
        %v2406 = vadd.f32 %v2374, 1.0
        %v2407 = vadd.f32 %v2375, 1.0
        %v2408 = vadd.f32 %v2376, 1.0
        %v2409 = vadd.f32 %v2377, 1.0
        %v2410 = vadd.f32 %v2378, 1.0
        %v2411 = vadd.f32 %v2379, 1.0
        %v2412 = vadd.f32 %v2380, 1.0
        %v2413 = vadd.f32 %v2381, 1.0
        %v2414 = vadd.f32 %v2382, 1.0
        %v2415 = vadd.f32 %v2383, 1.0
        %v2416 = vadd.f32 %v2384, 1.0
        %v2417 = vadd.f32 %v2385, 1.0
        %v2418 = vadd.f32 %v2386, 1.0
        %v2419 = vadd.f32 %v2387, 1.0
        %v2420 = vadd.f32 %v2388, 1.0
        %v2421 = vadd.f32 %v2389, 1.0
        %v2422 = vadd.f32 %v2390, 1.0
        %v2423 = vmul.f32 %v1527, %v2391
        %v2424 = vmul.f32 %v1528, %v2392
        %v2425 = vmul.f32 %v1529, %v2393
        %v2426 = vmul.f32 %v1530, %v2394
        %v2427 = vmul.f32 %v1531, %v2395
        %v2428 = vmul.f32 %v1532, %v2396
        %v2429 = vmul.f32 %v1533, %v2397
        %v2430 = vmul.f32 %v1534, %v2398
        %v2431 = vmul.f32 %v1535, %v2399
        %v2432 = vmul.f32 %v1536, %v2400
        %v2433 = vmul.f32 %v1537, %v2401
        %v2434 = vmul.f32 %v1538, %v2402
        %v2435 = vmul.f32 %v1539, %v2403
        %v2436 = vmul.f32 %v1540, %v2404
        %v2437 = vmul.f32 %v1541, %v2405
        %v2438 = vmul.f32 %v1542, %v2406
        %v2439 = vmul.f32 %v1543, %v2407
        %v2440 = vmul.f32 %v1544, %v2408
        %v2441 = vmul.f32 %v1545, %v2409
        %v2442 = vmul.f32 %v1546, %v2410
        %v2443 = vmul.f32 %v1547, %v2411
        %v2444 = vmul.f32 %v1548, %v2412
        %v2445 = vmul.f32 %v1549, %v2413
        %v2446 = vmul.f32 %v1550, %v2414
        %v2447 = vmul.f32 %v1551, %v2415
        %v2448 = vmul.f32 %v1552, %v2416
        %v2449 = vmul.f32 %v1553, %v2417
        %v2450 = vmul.f32 %v1554, %v2418
        %v2451 = vmul.f32 %v1555, %v2419
        %v2452 = vmul.f32 %v1556, %v2420
        %v2453 = vmul.f32 %v1557, %v2421
        %v2454 = vmul.f32 %v1558, %v2422
        %2455 = vst [vmem:[%s439] sm:$0xff] %v2423
        %2456 = vst [vmem:[%s439 + $0x8] sm:$0xff] %v2424
        %2457 = vst [vmem:[%s439 + $0x10] sm:$0xff] %v2425
        %2458 = vst [vmem:[%s439 + $0x18] sm:$0xff] %v2426
        %2459 = vst [vmem:[%s439 + $0x20] sm:$0xff] %v2427
        %2460 = vst [vmem:[%s439 + $0x28] sm:$0xff] %v2428
        %2461 = vst [vmem:[%s439 + $0x30] sm:$0xff] %v2429
        %2462 = vst [vmem:[%s439 + $0x38] sm:$0xff] %v2430
        %2463 = vst [vmem:[%s439 + $0x40] sm:$0xff] %v2431
        %2464 = vst [vmem:[%s439 + $0x48] sm:$0xff] %v2432
        %2465 = vst [vmem:[%s439 + $0x50] sm:$0xff] %v2433
        %2466 = vst [vmem:[%s439 + $0x58] sm:$0xff] %v2434
        %2467 = vst [vmem:[%s439 + $0x60] sm:$0xff] %v2435
        %2468 = vst [vmem:[%s439 + $0x68] sm:$0xff] %v2436
        %2469 = vst [vmem:[%s439 + $0x70] sm:$0xff] %v2437
        %2470 = vst [vmem:[%s439 + $0x78] sm:$0xff] %v2438
        %2471 = vst [vmem:[%s439 + $0x80] sm:$0xff] %v2439
        %2472 = vst [vmem:[%s439 + $0x88] sm:$0xff] %v2440
        %2473 = vst [vmem:[%s439 + $0x90] sm:$0xff] %v2441
        %2474 = vst [vmem:[%s439 + $0x98] sm:$0xff] %v2442
        %2475 = vst [vmem:[%s439 + $0xa0] sm:$0xff] %v2443
        %2476 = vst [vmem:[%s439 + $0xa8] sm:$0xff] %v2444
        %2477 = vst [vmem:[%s439 + $0xb0] sm:$0xff] %v2445
        %2478 = vst [vmem:[%s439 + $0xb8] sm:$0xff] %v2446
        %2479 = vst [vmem:[%s439 + $0xc0] sm:$0xff] %v2447
        %2480 = vst [vmem:[%s439 + $0xc8] sm:$0xff] %v2448
        %2481 = vst [vmem:[%s439 + $0xd0] sm:$0xff] %v2449
        %2482 = vst [vmem:[%s439 + $0xd8] sm:$0xff] %v2450
        %2483 = vst [vmem:[%s439 + $0xe0] sm:$0xff] %v2451
        %2484 = vst [vmem:[%s439 + $0xe8] sm:$0xff] %v2452
        %2485 = vst [vmem:[%s439 + $0xf0] sm:$0xff] %v2453
        %2486 = vst [vmem:[%s439 + $0xf8] sm:$0xff] %v2454
        %vm2519 = vcmp.ge.s32.totalorder %v2423, 0
        %vm2520 = vcmp.ge.s32.totalorder %v2424, 0
        %vm2521 = vcmp.ge.s32.totalorder %v2425, 0
        %vm2522 = vcmp.ge.s32.totalorder %v2426, 0
        %vm2523 = vcmp.ge.s32.totalorder %v2427, 0
        %vm2524 = vcmp.ge.s32.totalorder %v2428, 0
        %vm2525 = vcmp.ge.s32.totalorder %v2429, 0
        %vm2526 = vcmp.ge.s32.totalorder %v2430, 0
        %vm2527 = vcmp.ge.s32.totalorder %v2431, 0
        %vm2528 = vcmp.ge.s32.totalorder %v2432, 0
        %vm2529 = vcmp.ge.s32.totalorder %v2433, 0
        %vm2530 = vcmp.ge.s32.totalorder %v2434, 0
        %vm2531 = vcmp.ge.s32.totalorder %v2435, 0
        %vm2532 = vcmp.ge.s32.totalorder %v2436, 0
        %vm2533 = vcmp.ge.s32.totalorder %v2437, 0
        %vm2534 = vcmp.ge.s32.totalorder %v2438, 0
        %vm2535 = vcmp.ge.s32.totalorder %v2439, 0
        %vm2536 = vcmp.ge.s32.totalorder %v2440, 0
        %vm2537 = vcmp.ge.s32.totalorder %v2441, 0
        %vm2538 = vcmp.ge.s32.totalorder %v2442, 0
        %vm2539 = vcmp.ge.s32.totalorder %v2443, 0
        %vm2540 = vcmp.ge.s32.totalorder %v2444, 0
        %vm2541 = vcmp.ge.s32.totalorder %v2445, 0
        %vm2542 = vcmp.ge.s32.totalorder %v2446, 0
        %vm2543 = vcmp.ge.s32.totalorder %v2447, 0
        %vm2544 = vcmp.ge.s32.totalorder %v2448, 0
        %vm2545 = vcmp.ge.s32.totalorder %v2449, 0
        %vm2546 = vcmp.ge.s32.totalorder %v2450, 0
        %vm2547 = vcmp.ge.s32.totalorder %v2451, 0
        %vm2548 = vcmp.ge.s32.totalorder %v2452, 0
        %vm2549 = vcmp.ge.s32.totalorder %v2453, 0
        %vm2550 = vcmp.ge.s32.totalorder %v2454, 0
        %v2551 = vxor.u32 %v2423, 4294967295
        %v2552 = vxor.u32 %v2424, 4294967295
        %v2553 = vxor.u32 %v2425, 4294967295
        %v2554 = vxor.u32 %v2426, 4294967295
        %v2555 = vxor.u32 %v2427, 4294967295
        %v2556 = vxor.u32 %v2428, 4294967295
        %v2557 = vxor.u32 %v2429, 4294967295
        %v2558 = vxor.u32 %v2430, 4294967295
        %v2559 = vxor.u32 %v2431, 4294967295
        %v2560 = vxor.u32 %v2432, 4294967295
        %v2561 = vxor.u32 %v2433, 4294967295
        %v2562 = vxor.u32 %v2434, 4294967295
        %v2563 = vxor.u32 %v2435, 4294967295
        %v2564 = vxor.u32 %v2436, 4294967295
        %v2565 = vxor.u32 %v2437, 4294967295
        %v2566 = vxor.u32 %v2438, 4294967295
        %v2567 = vxor.u32 %v2439, 4294967295
        %v2568 = vxor.u32 %v2440, 4294967295
        %v2569 = vxor.u32 %v2441, 4294967295
        %v2570 = vxor.u32 %v2442, 4294967295
        %v2571 = vxor.u32 %v2443, 4294967295
        %v2572 = vxor.u32 %v2444, 4294967295
        %v2573 = vxor.u32 %v2445, 4294967295
        %v2574 = vxor.u32 %v2446, 4294967295
        %v2575 = vxor.u32 %v2447, 4294967295
        %v2576 = vxor.u32 %v2448, 4294967295
        %v2577 = vxor.u32 %v2449, 4294967295
        %v2578 = vxor.u32 %v2450, 4294967295
        %v2579 = vxor.u32 %v2451, 4294967295
        %v2580 = vxor.u32 %v2452, 4294967295
        %v2581 = vxor.u32 %v2453, 4294967295
        %v2582 = vxor.u32 %v2454, 4294967295
        %v2583 = vxor.u32 %v2551, 2147483648
        %v2584 = vxor.u32 %v2552, 2147483648
        %v2585 = vxor.u32 %v2553, 2147483648
        %v2586 = vxor.u32 %v2554, 2147483648
        %v2587 = vxor.u32 %v2555, 2147483648
        %v2588 = vxor.u32 %v2556, 2147483648
        %v2589 = vxor.u32 %v2557, 2147483648
        %v2590 = vxor.u32 %v2558, 2147483648
        %v2591 = vxor.u32 %v2559, 2147483648
        %v2592 = vxor.u32 %v2560, 2147483648
        %v2593 = vxor.u32 %v2561, 2147483648
        %v2594 = vxor.u32 %v2562, 2147483648
        %v2595 = vxor.u32 %v2563, 2147483648
        %v2596 = vxor.u32 %v2564, 2147483648
        %v2597 = vxor.u32 %v2565, 2147483648
        %v2598 = vxor.u32 %v2566, 2147483648
        %v2599 = vxor.u32 %v2567, 2147483648
        %v2600 = vxor.u32 %v2568, 2147483648
        %v2601 = vxor.u32 %v2569, 2147483648
        %v2602 = vxor.u32 %v2570, 2147483648
        %v2603 = vxor.u32 %v2571, 2147483648
        %v2604 = vxor.u32 %v2572, 2147483648
        %v2605 = vxor.u32 %v2573, 2147483648
        %v2606 = vxor.u32 %v2574, 2147483648
        %v2607 = vxor.u32 %v2575, 2147483648
        %v2608 = vxor.u32 %v2576, 2147483648
        %v2609 = vxor.u32 %v2577, 2147483648
        %v2610 = vxor.u32 %v2578, 2147483648
        %v2611 = vxor.u32 %v2579, 2147483648
        %v2612 = vxor.u32 %v2580, 2147483648
        %v2613 = vxor.u32 %v2581, 2147483648
        %v2614 = vxor.u32 %v2582, 2147483648
        %v2615 = vsel %vm2519, %v2423, %v2583
        %v2616 = vsel %vm2520, %v2424, %v2584
        %v2617 = vsel %vm2521, %v2425, %v2585
        %v2618 = vsel %vm2522, %v2426, %v2586
        %v2619 = vsel %vm2523, %v2427, %v2587
        %v2620 = vsel %vm2524, %v2428, %v2588
        %v2621 = vsel %vm2525, %v2429, %v2589
        %v2622 = vsel %vm2526, %v2430, %v2590
        %v2623 = vsel %vm2527, %v2431, %v2591
        %v2624 = vsel %vm2528, %v2432, %v2592
        %v2625 = vsel %vm2529, %v2433, %v2593
        %v2626 = vsel %vm2530, %v2434, %v2594
        %v2627 = vsel %vm2531, %v2435, %v2595
        %v2628 = vsel %vm2532, %v2436, %v2596
        %v2629 = vsel %vm2533, %v2437, %v2597
        %v2630 = vsel %vm2534, %v2438, %v2598
        %v2631 = vsel %vm2535, %v2439, %v2599
        %v2632 = vsel %vm2536, %v2440, %v2600
        %v2633 = vsel %vm2537, %v2441, %v2601
        %v2634 = vsel %vm2538, %v2442, %v2602
        %v2635 = vsel %vm2539, %v2443, %v2603
        %v2636 = vsel %vm2540, %v2444, %v2604
        %v2637 = vsel %vm2541, %v2445, %v2605
        %v2638 = vsel %vm2542, %v2446, %v2606
        %v2639 = vsel %vm2543, %v2447, %v2607
        %v2640 = vsel %vm2544, %v2448, %v2608
        %v2641 = vsel %vm2545, %v2449, %v2609
        %v2642 = vsel %vm2546, %v2450, %v2610
        %v2643 = vsel %vm2547, %v2451, %v2611
        %v2644 = vsel %vm2548, %v2452, %v2612
        %v2645 = vsel %vm2549, %v2453, %v2613
        %v2646 = vsel %vm2550, %v2454, %v2614
        %vm2647 = vcmp.lt.s32.totalorder %v2615, %v2619
        %v2648 = vsel %vm2647, %v2615, %v2619
        %vm2649 = vcmp.lt.s32.totalorder %v2617, %v2621
        %v2650 = vsel %vm2649, %v2617, %v2621
        %vm2651 = vcmp.lt.s32.totalorder %v2648, %v2623
        %v2652 = vsel %vm2651, %v2648, %v2623
        %vm2653 = vcmp.lt.s32.totalorder %v2650, %v2625
        %v2654 = vsel %vm2653, %v2650, %v2625
        %vm2655 = vcmp.lt.s32.totalorder %v2652, %v2627
        %v2656 = vsel %vm2655, %v2652, %v2627
        %vm2657 = vcmp.lt.s32.totalorder %v2654, %v2629
        %v2658 = vsel %vm2657, %v2654, %v2629
        %vm2659 = vcmp.lt.s32.totalorder %v2656, %v2631
        %v2660 = vsel %vm2659, %v2656, %v2631
        %vm2661 = vcmp.lt.s32.totalorder %v2658, %v2633
        %v2662 = vsel %vm2661, %v2658, %v2633
        %vm2663 = vcmp.lt.s32.totalorder %v2660, %v2635
        %v2664 = vsel %vm2663, %v2660, %v2635
        %vm2665 = vcmp.lt.s32.totalorder %v2662, %v2637
        %v2666 = vsel %vm2665, %v2662, %v2637
        %vm2667 = vcmp.lt.s32.totalorder %v2664, %v2639
        %v2668 = vsel %vm2667, %v2664, %v2639
        %vm2669 = vcmp.lt.s32.totalorder %v2666, %v2641
        %v2670 = vsel %vm2669, %v2666, %v2641
        %vm2671 = vcmp.lt.s32.totalorder %v2668, %v2643
        %v2672 = vsel %vm2671, %v2668, %v2643
        %vm2673 = vcmp.lt.s32.totalorder %v2670, %v2645
        %v2674 = vsel %vm2673, %v2670, %v2645
        %vm2675 = vcmp.lt.s32.totalorder %v2672, %v2674
        %v2676 = vsel %vm2675, %v2672, %v2674
        %vm2677 = vcmp.lt.s32.totalorder %v2616, %v2620
        %v2678 = vsel %vm2677, %v2616, %v2620
        %vm2679 = vcmp.lt.s32.totalorder %v2618, %v2622
        %v2680 = vsel %vm2679, %v2618, %v2622
        %vm2681 = vcmp.lt.s32.totalorder %v2678, %v2624
        %v2682 = vsel %vm2681, %v2678, %v2624
        %vm2683 = vcmp.lt.s32.totalorder %v2680, %v2626
        %v2684 = vsel %vm2683, %v2680, %v2626
        %vm2685 = vcmp.lt.s32.totalorder %v2682, %v2628
        %v2686 = vsel %vm2685, %v2682, %v2628
        %vm2687 = vcmp.lt.s32.totalorder %v2684, %v2630
        %v2688 = vsel %vm2687, %v2684, %v2630
        %vm2689 = vcmp.lt.s32.totalorder %v2686, %v2632
        %v2690 = vsel %vm2689, %v2686, %v2632
        %vm2691 = vcmp.lt.s32.totalorder %v2688, %v2634
        %v2692 = vsel %vm2691, %v2688, %v2634
        %vm2693 = vcmp.lt.s32.totalorder %v2690, %v2636
        %v2694 = vsel %vm2693, %v2690, %v2636
        %vm2695 = vcmp.lt.s32.totalorder %v2692, %v2638
        %v2696 = vsel %vm2695, %v2692, %v2638
        %vm2697 = vcmp.lt.s32.totalorder %v2694, %v2640
        %v2698 = vsel %vm2697, %v2694, %v2640
        %vm2699 = vcmp.lt.s32.totalorder %v2696, %v2642
        %v2700 = vsel %vm2699, %v2696, %v2642
        %vm2701 = vcmp.lt.s32.totalorder %v2698, %v2644
        %v2702 = vsel %vm2701, %v2698, %v2644
        %vm2703 = vcmp.lt.s32.totalorder %v2700, %v2646
        %v2704 = vsel %vm2703, %v2700, %v2646
        %vm2705 = vcmp.lt.s32.totalorder %v2702, %v2704
        %v2706 = vsel %vm2705, %v2702, %v2704
        %vm2707 = vcmp.lt.s32.totalorder %v2676, %v2706
        %v2708 = vsel %vm2707, %v2676, %v2706
        %v2709 = vrot.slane %v2708, 4
        %vm2710 = vcmp.lt.s32.totalorder %v2708, %v2709
        %v2711 = vsel %vm2710, %v2708, %v2709
        %v2712 = vrot.slane %v2711, 2
        %vm2713 = vcmp.lt.s32.totalorder %v2711, %v2712
        %v2714 = vsel %vm2713, %v2711, %v2712
        %v2715 = vrot.slane %v2714, 1
        %vm2716 = vcmp.lt.s32.totalorder %v2714, %v2715
        %v2717 = vsel %vm2716, %v2714, %v2715
        %vm2718 = vcmp.gt.s32.totalorder %v2615, %v2619
        %v2719 = vsel %vm2718, %v2615, %v2619
        %vm2720 = vcmp.gt.s32.totalorder %v2617, %v2621
        %v2721 = vsel %vm2720, %v2617, %v2621
        %vm2722 = vcmp.gt.s32.totalorder %v2719, %v2623
        %v2723 = vsel %vm2722, %v2719, %v2623
        %vm2724 = vcmp.gt.s32.totalorder %v2721, %v2625
        %v2725 = vsel %vm2724, %v2721, %v2625
        %vm2726 = vcmp.gt.s32.totalorder %v2723, %v2627
        %v2727 = vsel %vm2726, %v2723, %v2627
        %vm2728 = vcmp.gt.s32.totalorder %v2725, %v2629
        %v2729 = vsel %vm2728, %v2725, %v2629
        %vm2730 = vcmp.gt.s32.totalorder %v2727, %v2631
        %v2731 = vsel %vm2730, %v2727, %v2631
        %vm2732 = vcmp.gt.s32.totalorder %v2729, %v2633
        %v2733 = vsel %vm2732, %v2729, %v2633
        %vm2734 = vcmp.gt.s32.totalorder %v2731, %v2635
        %v2735 = vsel %vm2734, %v2731, %v2635
        %vm2736 = vcmp.gt.s32.totalorder %v2733, %v2637
        %v2737 = vsel %vm2736, %v2733, %v2637
        %vm2738 = vcmp.gt.s32.totalorder %v2735, %v2639
        %v2739 = vsel %vm2738, %v2735, %v2639
        %vm2740 = vcmp.gt.s32.totalorder %v2737, %v2641
        %v2741 = vsel %vm2740, %v2737, %v2641
        %vm2742 = vcmp.gt.s32.totalorder %v2739, %v2643
        %v2743 = vsel %vm2742, %v2739, %v2643
        %vm2744 = vcmp.gt.s32.totalorder %v2741, %v2645
        %v2745 = vsel %vm2744, %v2741, %v2645
        %vm2746 = vcmp.gt.s32.totalorder %v2743, %v2745
        %v2747 = vsel %vm2746, %v2743, %v2745
        %vm2748 = vcmp.gt.s32.totalorder %v2616, %v2620
        %v2749 = vsel %vm2748, %v2616, %v2620
        %vm2750 = vcmp.gt.s32.totalorder %v2618, %v2622
        %v2751 = vsel %vm2750, %v2618, %v2622
        %vm2752 = vcmp.gt.s32.totalorder %v2749, %v2624
        %v2753 = vsel %vm2752, %v2749, %v2624
        %vm2754 = vcmp.gt.s32.totalorder %v2751, %v2626
        %v2755 = vsel %vm2754, %v2751, %v2626
        %vm2756 = vcmp.gt.s32.totalorder %v2753, %v2628
        %v2757 = vsel %vm2756, %v2753, %v2628
        %vm2758 = vcmp.gt.s32.totalorder %v2755, %v2630
        %v2759 = vsel %vm2758, %v2755, %v2630
        %vm2760 = vcmp.gt.s32.totalorder %v2757, %v2632
        %v2761 = vsel %vm2760, %v2757, %v2632
        %vm2762 = vcmp.gt.s32.totalorder %v2759, %v2634
        %v2763 = vsel %vm2762, %v2759, %v2634
        %vm2764 = vcmp.gt.s32.totalorder %v2761, %v2636
        %v2765 = vsel %vm2764, %v2761, %v2636
        %vm2766 = vcmp.gt.s32.totalorder %v2763, %v2638
        %v2767 = vsel %vm2766, %v2763, %v2638
        %vm2768 = vcmp.gt.s32.totalorder %v2765, %v2640
        %v2769 = vsel %vm2768, %v2765, %v2640
        %vm2770 = vcmp.gt.s32.totalorder %v2767, %v2642
        %v2771 = vsel %vm2770, %v2767, %v2642
        %vm2772 = vcmp.gt.s32.totalorder %v2769, %v2644
        %v2773 = vsel %vm2772, %v2769, %v2644
        %vm2774 = vcmp.gt.s32.totalorder %v2771, %v2646
        %v2775 = vsel %vm2774, %v2771, %v2646
        %vm2776 = vcmp.gt.s32.totalorder %v2773, %v2775
        %v2777 = vsel %vm2776, %v2773, %v2775
        %vm2778 = vcmp.gt.s32.totalorder %v2747, %v2777
        %v2779 = vsel %vm2778, %v2747, %v2777
        %v2780 = vrot.slane %v2779, 4
        %vm2781 = vcmp.gt.s32.totalorder %v2779, %v2780
        %v2782 = vsel %vm2781, %v2779, %v2780
        %v2783 = vrot.slane %v2782, 2
        %vm2784 = vcmp.gt.s32.totalorder %v2782, %v2783
        %v2785 = vsel %vm2784, %v2782, %v2783
        %v2786 = vrot.slane %v2785, 1
        %vm2787 = vcmp.gt.s32.totalorder %v2785, %v2786
        %v2788 = vsel %vm2787, %v2785, %v2786
        loop: start=0, step=1, limit=32
        $region109: #{mlp_forward.4} parent=99 // loop_pre_header
          _
        $region110: #{mlp_forward.4} parent=99 // loop_header
          %s2790 = sphi 0, %s2794
          %p2791 = scmp.ge.s32.totalorder %s2790, 32
          %v2795 = vphi %v2717, %v2904
          %v2796 = vphi %v2788, %v2905
        $region111: #{mlp_forward.4} parent=99 // loop_header_branch
          %2793 = sbr.rel (%p2791) target = $region115
        $region112: #{mlp_forward.4} parent=99 // loop_body
          %v2797 = vand.u32 %v2795, %v2796
          %v2798 = vxor.u32 %v2795, %v2796
          %v2799 = vshra.s32 %v2798, 1
          %v2800 = vadd.s32 %v2797, %v2799
          %vm2801 = vcmp.le.s32.totalorder %v2615, %v2800
          %vm2802 = vcmp.le.s32.totalorder %v2616, %v2800
          %vm2803 = vcmp.le.s32.totalorder %v2617, %v2800
          %vm2804 = vcmp.le.s32.totalorder %v2618, %v2800
          %vm2805 = vcmp.le.s32.totalorder %v2619, %v2800
          %vm2806 = vcmp.le.s32.totalorder %v2620, %v2800
          %vm2807 = vcmp.le.s32.totalorder %v2621, %v2800
          %vm2808 = vcmp.le.s32.totalorder %v2622, %v2800
          %vm2809 = vcmp.le.s32.totalorder %v2623, %v2800
          %vm2810 = vcmp.le.s32.totalorder %v2624, %v2800
          %vm2811 = vcmp.le.s32.totalorder %v2625, %v2800
          %vm2812 = vcmp.le.s32.totalorder %v2626, %v2800
          %vm2813 = vcmp.le.s32.totalorder %v2627, %v2800
          %vm2814 = vcmp.le.s32.totalorder %v2628, %v2800
          %vm2815 = vcmp.le.s32.totalorder %v2629, %v2800
          %vm2816 = vcmp.le.s32.totalorder %v2630, %v2800
          %vm2817 = vcmp.le.s32.totalorder %v2631, %v2800
          %vm2818 = vcmp.le.s32.totalorder %v2632, %v2800
          %vm2819 = vcmp.le.s32.totalorder %v2633, %v2800
          %vm2820 = vcmp.le.s32.totalorder %v2634, %v2800
          %vm2821 = vcmp.le.s32.totalorder %v2635, %v2800
          %vm2822 = vcmp.le.s32.totalorder %v2636, %v2800
          %vm2823 = vcmp.le.s32.totalorder %v2637, %v2800
          %vm2824 = vcmp.le.s32.totalorder %v2638, %v2800
          %vm2825 = vcmp.le.s32.totalorder %v2639, %v2800
          %vm2826 = vcmp.le.s32.totalorder %v2640, %v2800
          %vm2827 = vcmp.le.s32.totalorder %v2641, %v2800
          %vm2828 = vcmp.le.s32.totalorder %v2642, %v2800
          %vm2829 = vcmp.le.s32.totalorder %v2643, %v2800
          %vm2830 = vcmp.le.s32.totalorder %v2644, %v2800
          %vm2831 = vcmp.le.s32.totalorder %v2645, %v2800
          %vm2832 = vcmp.le.s32.totalorder %v2646, %v2800
          %v2833 = vsel %vm2801, 1, 0
          %v2834 = vsel %vm2802, 1, 0
          %v2835 = vsel %vm2803, 1, 0
          %v2836 = vsel %vm2804, 1, 0
          %v2837 = vsel %vm2805, 1, 0
          %v2838 = vsel %vm2806, 1, 0
          %v2839 = vsel %vm2807, 1, 0
          %v2840 = vsel %vm2808, 1, 0
          %v2841 = vsel %vm2809, 1, 0
          %v2842 = vsel %vm2810, 1, 0
          %v2843 = vsel %vm2811, 1, 0
          %v2844 = vsel %vm2812, 1, 0
          %v2845 = vsel %vm2813, 1, 0
          %v2846 = vsel %vm2814, 1, 0
          %v2847 = vsel %vm2815, 1, 0
          %v2848 = vsel %vm2816, 1, 0
          %v2849 = vsel %vm2817, 1, 0
          %v2850 = vsel %vm2818, 1, 0
          %v2851 = vsel %vm2819, 1, 0
          %v2852 = vsel %vm2820, 1, 0
          %v2853 = vsel %vm2821, 1, 0
          %v2854 = vsel %vm2822, 1, 0
          %v2855 = vsel %vm2823, 1, 0
          %v2856 = vsel %vm2824, 1, 0
          %v2857 = vsel %vm2825, 1, 0
          %v2858 = vsel %vm2826, 1, 0
          %v2859 = vsel %vm2827, 1, 0
          %v2860 = vsel %vm2828, 1, 0
          %v2861 = vsel %vm2829, 1, 0
          %v2862 = vsel %vm2830, 1, 0
          %v2863 = vsel %vm2831, 1, 0
          %v2864 = vsel %vm2832, 1, 0
          %v2865 = vadd.s32 %v2833, %v2837
          %v2866 = vadd.s32 %v2835, %v2839
          %v2867 = vadd.s32 %v2865, %v2841
          %v2868 = vadd.s32 %v2866, %v2843
          %v2869 = vadd.s32 %v2867, %v2845
          %v2870 = vadd.s32 %v2868, %v2847
          %v2871 = vadd.s32 %v2869, %v2849
          %v2872 = vadd.s32 %v2870, %v2851
          %v2873 = vadd.s32 %v2871, %v2853
          %v2874 = vadd.s32 %v2872, %v2855
          %v2875 = vadd.s32 %v2873, %v2857
          %v2876 = vadd.s32 %v2874, %v2859
          %v2877 = vadd.s32 %v2875, %v2861
          %v2878 = vadd.s32 %v2876, %v2863
          %v2879 = vadd.s32 %v2877, %v2878
          %v2880 = vadd.s32 %v2834, %v2838
          %v2881 = vadd.s32 %v2836, %v2840
          %v2882 = vadd.s32 %v2880, %v2842
          %v2883 = vadd.s32 %v2881, %v2844
          %v2884 = vadd.s32 %v2882, %v2846
          %v2885 = vadd.s32 %v2883, %v2848
          %v2886 = vadd.s32 %v2884, %v2850
          %v2887 = vadd.s32 %v2885, %v2852
          %v2888 = vadd.s32 %v2886, %v2854
          %v2889 = vadd.s32 %v2887, %v2856
          %v2890 = vadd.s32 %v2888, %v2858
          %v2891 = vadd.s32 %v2889, %v2860
          %v2892 = vadd.s32 %v2890, %v2862
          %v2893 = vadd.s32 %v2891, %v2864
          %v2894 = vadd.s32 %v2892, %v2893
          %v2895 = vadd.s32 %v2879, %v2894
          %v2896 = vrot.slane %v2895, 4
          %v2897 = vadd.s32 %v2895, %v2896
          %v2898 = vrot.slane %v2897, 2
          %v2899 = vadd.s32 %v2897, %v2898
          %v2900 = vrot.slane %v2899, 1
          %v2901 = vadd.s32 %v2899, %v2900
          %vm2902 = vcmp.ge.s32.totalorder %v2901, 128
          %v2903 = vadd.s32 %v2800, 1
          %v2904 = vsel %vm2902, %v2795, %v2903
          %v2905 = vsel %vm2902, %v2800, %v2796
        $region113: #{mlp_forward.4} parent=99 // loop_footer
          %s2794 = sadd.s32 1, %s2790
        $region114: #{mlp_forward.4} parent=99 // loop_footer_branch
          %2789 = sbr.rel target = $region110
        $region115: #{mlp_forward.4} parent=99 // loop_exit
          _
        %vm2906 = vcmp.le.s32.totalorder %v2615, %v2796
        %vm2907 = vcmp.le.s32.totalorder %v2616, %v2796
        %vm2908 = vcmp.le.s32.totalorder %v2617, %v2796
        %vm2909 = vcmp.le.s32.totalorder %v2618, %v2796
        %vm2910 = vcmp.le.s32.totalorder %v2619, %v2796
        %vm2911 = vcmp.le.s32.totalorder %v2620, %v2796
        %vm2912 = vcmp.le.s32.totalorder %v2621, %v2796
        %vm2913 = vcmp.le.s32.totalorder %v2622, %v2796
        %vm2914 = vcmp.le.s32.totalorder %v2623, %v2796
        %vm2915 = vcmp.le.s32.totalorder %v2624, %v2796
        %vm2916 = vcmp.le.s32.totalorder %v2625, %v2796
        %vm2917 = vcmp.le.s32.totalorder %v2626, %v2796
        %vm2918 = vcmp.le.s32.totalorder %v2627, %v2796
        %vm2919 = vcmp.le.s32.totalorder %v2628, %v2796
        %vm2920 = vcmp.le.s32.totalorder %v2629, %v2796
        %vm2921 = vcmp.le.s32.totalorder %v2630, %v2796
        %vm2922 = vcmp.le.s32.totalorder %v2631, %v2796
        %vm2923 = vcmp.le.s32.totalorder %v2632, %v2796
        %vm2924 = vcmp.le.s32.totalorder %v2633, %v2796
        %vm2925 = vcmp.le.s32.totalorder %v2634, %v2796
        %vm2926 = vcmp.le.s32.totalorder %v2635, %v2796
        %vm2927 = vcmp.le.s32.totalorder %v2636, %v2796
        %vm2928 = vcmp.le.s32.totalorder %v2637, %v2796
        %vm2929 = vcmp.le.s32.totalorder %v2638, %v2796
        %vm2930 = vcmp.le.s32.totalorder %v2639, %v2796
        %vm2931 = vcmp.le.s32.totalorder %v2640, %v2796
        %vm2932 = vcmp.le.s32.totalorder %v2641, %v2796
        %vm2933 = vcmp.le.s32.totalorder %v2642, %v2796
        %vm2934 = vcmp.le.s32.totalorder %v2643, %v2796
        %vm2935 = vcmp.le.s32.totalorder %v2644, %v2796
        %vm2936 = vcmp.le.s32.totalorder %v2645, %v2796
        %vm2937 = vcmp.le.s32.totalorder %v2646, %v2796
        %v2938 = vsel %vm2906, %v2423, -inf
        %v2939 = vsel %vm2907, %v2424, -inf
        %v2940 = vsel %vm2908, %v2425, -inf
        %v2941 = vsel %vm2909, %v2426, -inf
        %v2942 = vsel %vm2910, %v2427, -inf
        %v2943 = vsel %vm2911, %v2428, -inf
        %v2944 = vsel %vm2912, %v2429, -inf
        %v2945 = vsel %vm2913, %v2430, -inf
        %v2946 = vsel %vm2914, %v2431, -inf
        %v2947 = vsel %vm2915, %v2432, -inf
        %v2948 = vsel %vm2916, %v2433, -inf
        %v2949 = vsel %vm2917, %v2434, -inf
        %v2950 = vsel %vm2918, %v2435, -inf
        %v2951 = vsel %vm2919, %v2436, -inf
        %v2952 = vsel %vm2920, %v2437, -inf
        %v2953 = vsel %vm2921, %v2438, -inf
        %v2954 = vsel %vm2922, %v2439, -inf
        %v2955 = vsel %vm2923, %v2440, -inf
        %v2956 = vsel %vm2924, %v2441, -inf
        %v2957 = vsel %vm2925, %v2442, -inf
        %v2958 = vsel %vm2926, %v2443, -inf
        %v2959 = vsel %vm2927, %v2444, -inf
        %v2960 = vsel %vm2928, %v2445, -inf
        %v2961 = vsel %vm2929, %v2446, -inf
        %v2962 = vsel %vm2930, %v2447, -inf
        %v2963 = vsel %vm2931, %v2448, -inf
        %v2964 = vsel %vm2932, %v2449, -inf
        %v2965 = vsel %vm2933, %v2450, -inf
        %v2966 = vsel %vm2934, %v2451, -inf
        %v2967 = vsel %vm2935, %v2452, -inf
        %v2968 = vsel %vm2936, %v2453, -inf
        %v2969 = vsel %vm2937, %v2454, -inf
        %v2970 = vmax.f32 %v2938, %v2942
        %v2971 = vmax.f32 %v2940, %v2944
        %v2972 = vmax.f32 %v2970, %v2946
        %v2973 = vmax.f32 %v2971, %v2948
        %v2974 = vmax.f32 %v2972, %v2950
        %v2975 = vmax.f32 %v2973, %v2952
        %v2976 = vmax.f32 %v2974, %v2954
        %v2977 = vmax.f32 %v2975, %v2956
        %v2978 = vmax.f32 %v2976, %v2958
        %v2979 = vmax.f32 %v2977, %v2960
        %v2980 = vmax.f32 %v2978, %v2962
        %v2981 = vmax.f32 %v2979, %v2964
        %v2982 = vmax.f32 %v2980, %v2966
        %v2983 = vmax.f32 %v2981, %v2968
        %v2984 = vmax.f32 %v2982, %v2983
        %v2985 = vmax.f32 %v2939, %v2943
        %v2986 = vmax.f32 %v2941, %v2945
        %v2987 = vmax.f32 %v2985, %v2947
        %v2988 = vmax.f32 %v2986, %v2949
        %v2989 = vmax.f32 %v2987, %v2951
        %v2990 = vmax.f32 %v2988, %v2953
        %v2991 = vmax.f32 %v2989, %v2955
        %v2992 = vmax.f32 %v2990, %v2957
        %v2993 = vmax.f32 %v2991, %v2959
        %v2994 = vmax.f32 %v2992, %v2961
        %v2995 = vmax.f32 %v2993, %v2963
        %v2996 = vmax.f32 %v2994, %v2965
        %v2997 = vmax.f32 %v2995, %v2967
        %v2998 = vmax.f32 %v2996, %v2969
        %v2999 = vmax.f32 %v2997, %v2998
        %v3000 = vmax.f32 %v2984, %v2999
        %v3001 = vrot.slane %v3000, 4
        %v3002 = vmax.f32 %v3000, %v3001
        %v3003 = vrot.slane %v3002, 2
        %v3004 = vmax.f32 %v3002, %v3003
        %v3005 = vrot.slane %v3004, 1
        %v3006 = vmax.f32 %v3004, %v3005
        %3007 = vst [vmem:[%s458] sm:$0x1] %v3006
        %s3008 = sand.u32 %s118, 1
        %s3009 = sand.u32 %s118, 1
        %s3010 = smul.addr %s3009, 256
        %s3011 = scalar_lea.vmem [#allocation5], %s3010
        %p3012 = scmp.lt.s32.totalorder %s20, 1
        %s3013 = scalar_select %p3012, %s20, 1
        %p3014 = scmp.lt.s32.totalorder %s21, 1
        %s3015 = scalar_select %p3014, %s21, 1
        %s3016 = smul.addr %s3013, 2
        %s3017 = sadd.s32 %s3015, %s3016
        %s3018 = scalar_lea.vmem %s4, %s3017
        // Predicated region
        $region116: #{mlp_forward.4} parent=99 // pred_check
          %p3019 = pneg %p128
        $region117: #{mlp_forward.4} parent=99 // pred_check_branch
          %3021 = sbr.rel (%p3019) target = $region119
        $region118: #{mlp_forward.4} parent=99 // pred_region
          %s3022 = smul.addr %s20, 64
          %s3023 = sadd.s32 %s21, %s3022
          %s3024 = smul.addr %s3023, 8
          %s3025 = scalar_lea.vmem %s3, %s3024
          // Predicated region
          $region120: #{mlp_forward.4} parent=118 // pred_check
            _
          $region121: #{mlp_forward.4} parent=118 // pred_check_branch
            %3027 = sbr.rel (0) target = $region123
          $region122: #{mlp_forward.4} parent=118 // pred_region
            // Predicated region
            $region124: #{mlp_forward.4} parent=122 // pred_check
              _
            $region125: #{mlp_forward.4} parent=122 // pred_check_branch
              %3029 = sbr.rel (0) target = $region127
            $region126: #{mlp_forward.4} parent=122 // pred_region
              // Predicated region
              $region139: #{mlp_forward.4} parent=126 // pred_check
                _
              $region140: #{mlp_forward.4} parent=126 // pred_check_branch
                %3106 = sbr.rel (0) target = $region142
              $region141: #{mlp_forward.4} parent=126 // pred_region
                loop: start=0, step=1, limit=1
                $region143: #{mlp_forward.4} parent=141 // loop_pre_header
                  _
                $region144: #{mlp_forward.4} parent=141 // loop_header
                  %s3108 = sphi 0, %s3112
                  %p3109 = scmp.ge.s32.totalorder %s3108, 1
                  %s3113 = sphi %s3011, %s3011
                  %s3114 = sphi %s3025, %s3025
                $region145: #{mlp_forward.4} parent=141 // loop_header_branch
                  %3111 = sbr.rel (%p3109) target = $region149
                $region146: #{mlp_forward.4} parent=141 // loop_body
                  %v3115 = vld [vmem:[%s3113] sm:$0xff]
                  %3116 = vst [vmem:[%s3114] sm:$0xff] %v3115
                  %v3117 = vld [vmem:[%s3113 + $0x8] sm:$0xff]
                  %3118 = vst [vmem:[%s3114 + $0x10] sm:$0xff] %v3117
                  %v3119 = vld [vmem:[%s3113 + $0x10] sm:$0xff]
                  %3120 = vst [vmem:[%s3114 + $0x20] sm:$0xff] %v3119
                  %v3121 = vld [vmem:[%s3113 + $0x18] sm:$0xff]
                  %3122 = vst [vmem:[%s3114 + $0x30] sm:$0xff] %v3121
                  %v3123 = vld [vmem:[%s3113 + $0x20] sm:$0xff]
                  %3124 = vst [vmem:[%s3114 + $0x40] sm:$0xff] %v3123
                  %v3125 = vld [vmem:[%s3113 + $0x28] sm:$0xff]
                  %3126 = vst [vmem:[%s3114 + $0x50] sm:$0xff] %v3125
                  %v3127 = vld [vmem:[%s3113 + $0x30] sm:$0xff]
                  %3128 = vst [vmem:[%s3114 + $0x60] sm:$0xff] %v3127
                  %v3129 = vld [vmem:[%s3113 + $0x38] sm:$0xff]
                  %3130 = vst [vmem:[%s3114 + $0x70] sm:$0xff] %v3129
                  %v3131 = vld [vmem:[%s3113 + $0x40] sm:$0xff]
                  %3132 = vst [vmem:[%s3114 + $0x80] sm:$0xff] %v3131
                  %v3133 = vld [vmem:[%s3113 + $0x48] sm:$0xff]
                  %3134 = vst [vmem:[%s3114 + $0x90] sm:$0xff] %v3133
                  %v3135 = vld [vmem:[%s3113 + $0x50] sm:$0xff]
                  %3136 = vst [vmem:[%s3114 + $0xa0] sm:$0xff] %v3135
                  %v3137 = vld [vmem:[%s3113 + $0x58] sm:$0xff]
                  %3138 = vst [vmem:[%s3114 + $0xb0] sm:$0xff] %v3137
                  %v3139 = vld [vmem:[%s3113 + $0x60] sm:$0xff]
                  %3140 = vst [vmem:[%s3114 + $0xc0] sm:$0xff] %v3139
                  %v3141 = vld [vmem:[%s3113 + $0x68] sm:$0xff]
                  %3142 = vst [vmem:[%s3114 + $0xd0] sm:$0xff] %v3141
                  %v3143 = vld [vmem:[%s3113 + $0x70] sm:$0xff]
                  %3144 = vst [vmem:[%s3114 + $0xe0] sm:$0xff] %v3143
                  %v3145 = vld [vmem:[%s3113 + $0x78] sm:$0xff]
                  %3146 = vst [vmem:[%s3114 + $0xf0] sm:$0xff] %v3145
                  %v3147 = vld [vmem:[%s3113 + $0x80] sm:$0xff]
                  %3148 = vst [vmem:[%s3114 + $0x100] sm:$0xff] %v3147
                  %v3149 = vld [vmem:[%s3113 + $0x88] sm:$0xff]
                  %3150 = vst [vmem:[%s3114 + $0x110] sm:$0xff] %v3149
                  %v3151 = vld [vmem:[%s3113 + $0x90] sm:$0xff]
                  %3152 = vst [vmem:[%s3114 + $0x120] sm:$0xff] %v3151
                  %v3153 = vld [vmem:[%s3113 + $0x98] sm:$0xff]
                  %3154 = vst [vmem:[%s3114 + $0x130] sm:$0xff] %v3153
                  %v3155 = vld [vmem:[%s3113 + $0xa0] sm:$0xff]
                  %3156 = vst [vmem:[%s3114 + $0x140] sm:$0xff] %v3155
                  %v3157 = vld [vmem:[%s3113 + $0xa8] sm:$0xff]
                  %3158 = vst [vmem:[%s3114 + $0x150] sm:$0xff] %v3157
                  %v3159 = vld [vmem:[%s3113 + $0xb0] sm:$0xff]
                  %3160 = vst [vmem:[%s3114 + $0x160] sm:$0xff] %v3159
                  %v3161 = vld [vmem:[%s3113 + $0xb8] sm:$0xff]
                  %3162 = vst [vmem:[%s3114 + $0x170] sm:$0xff] %v3161
                  %v3163 = vld [vmem:[%s3113 + $0xc0] sm:$0xff]
                  %3164 = vst [vmem:[%s3114 + $0x180] sm:$0xff] %v3163
                  %v3165 = vld [vmem:[%s3113 + $0xc8] sm:$0xff]
                  %3166 = vst [vmem:[%s3114 + $0x190] sm:$0xff] %v3165
                  %v3167 = vld [vmem:[%s3113 + $0xd0] sm:$0xff]
                  %3168 = vst [vmem:[%s3114 + $0x1a0] sm:$0xff] %v3167
                  %v3169 = vld [vmem:[%s3113 + $0xd8] sm:$0xff]
                  %3170 = vst [vmem:[%s3114 + $0x1b0] sm:$0xff] %v3169
                  %v3171 = vld [vmem:[%s3113 + $0xe0] sm:$0xff]
                  %3172 = vst [vmem:[%s3114 + $0x1c0] sm:$0xff] %v3171
                  %v3173 = vld [vmem:[%s3113 + $0xe8] sm:$0xff]
                  %3174 = vst [vmem:[%s3114 + $0x1d0] sm:$0xff] %v3173
                  %v3175 = vld [vmem:[%s3113 + $0xf0] sm:$0xff]
                  %3176 = vst [vmem:[%s3114 + $0x1e0] sm:$0xff] %v3175
                  %v3177 = vld [vmem:[%s3113 + $0xf8] sm:$0xff]
                  %3178 = vst [vmem:[%s3114 + $0x1f0] sm:$0xff] %v3177
                $region147: #{mlp_forward.4} parent=141 // loop_footer
                  %s3112 = sadd.s32 1, %s3108
                $region148: #{mlp_forward.4} parent=141 // loop_footer_branch
                  %3107 = sbr.rel target = $region144
                $region149: #{mlp_forward.4} parent=141 // loop_exit
                  _
              $region142: #{mlp_forward.4} parent=126 // pred_fallthru
                _
              // Predicated region
              $region150: #{mlp_forward.4} parent=126 // pred_check
                _
              $region151: #{mlp_forward.4} parent=126 // pred_check_branch
                %3180 = sbr.rel target = $region153
              $region152: #{mlp_forward.4} parent=126 // pred_region
                _
              $region153: #{mlp_forward.4} parent=126 // pred_fallthru
                _
            $region127: #{mlp_forward.4} parent=122 // pred_fallthru
              _
            // Predicated region
            $region128: #{mlp_forward.4} parent=122 // pred_check
              _
            $region129: #{mlp_forward.4} parent=122 // pred_check_branch
              %3031 = sbr.rel target = $region131
            $region130: #{mlp_forward.4} parent=122 // pred_region
              loop: start=0, step=1, limit=1
              $region132: #{mlp_forward.4} parent=130 // loop_pre_header
                _
              $region133: #{mlp_forward.4} parent=130 // loop_header
                %s3034 = sphi 0, %s3038
                %p3035 = scmp.ge.s32.totalorder %s3034, 1
                %s3039 = sphi %s3011, %s3011
                %s3040 = sphi %s3025, %s3025
              $region134: #{mlp_forward.4} parent=130 // loop_header_branch
                %3037 = sbr.rel (%p3035) target = $region138
              $region135: #{mlp_forward.4} parent=130 // loop_body
                %v3041 = vld [vmem:[%s3039] sm:$0xff]
                %3042 = vst [vmem:[%s3040] sm:$0xff] %v3041
                %v3043 = vld [vmem:[%s3039 + $0x8] sm:$0xff]
                %3044 = vst [vmem:[%s3040 + $0x10] sm:$0xff] %v3043
                %v3045 = vld [vmem:[%s3039 + $0x10] sm:$0xff]
                %3046 = vst [vmem:[%s3040 + $0x20] sm:$0xff] %v3045
                %v3047 = vld [vmem:[%s3039 + $0x18] sm:$0xff]
                %3048 = vst [vmem:[%s3040 + $0x30] sm:$0xff] %v3047
                %v3049 = vld [vmem:[%s3039 + $0x20] sm:$0xff]
                %3050 = vst [vmem:[%s3040 + $0x40] sm:$0xff] %v3049
                %v3051 = vld [vmem:[%s3039 + $0x28] sm:$0xff]
                %3052 = vst [vmem:[%s3040 + $0x50] sm:$0xff] %v3051
                %v3053 = vld [vmem:[%s3039 + $0x30] sm:$0xff]
                %3054 = vst [vmem:[%s3040 + $0x60] sm:$0xff] %v3053
                %v3055 = vld [vmem:[%s3039 + $0x38] sm:$0xff]
                %3056 = vst [vmem:[%s3040 + $0x70] sm:$0xff] %v3055
                %v3057 = vld [vmem:[%s3039 + $0x40] sm:$0xff]
                %3058 = vst [vmem:[%s3040 + $0x80] sm:$0xff] %v3057
                %v3059 = vld [vmem:[%s3039 + $0x48] sm:$0xff]
                %3060 = vst [vmem:[%s3040 + $0x90] sm:$0xff] %v3059
                %v3061 = vld [vmem:[%s3039 + $0x50] sm:$0xff]
                %3062 = vst [vmem:[%s3040 + $0xa0] sm:$0xff] %v3061
                %v3063 = vld [vmem:[%s3039 + $0x58] sm:$0xff]
                %3064 = vst [vmem:[%s3040 + $0xb0] sm:$0xff] %v3063
                %v3065 = vld [vmem:[%s3039 + $0x60] sm:$0xff]
                %3066 = vst [vmem:[%s3040 + $0xc0] sm:$0xff] %v3065
                %v3067 = vld [vmem:[%s3039 + $0x68] sm:$0xff]
                %3068 = vst [vmem:[%s3040 + $0xd0] sm:$0xff] %v3067
                %v3069 = vld [vmem:[%s3039 + $0x70] sm:$0xff]
                %3070 = vst [vmem:[%s3040 + $0xe0] sm:$0xff] %v3069
                %v3071 = vld [vmem:[%s3039 + $0x78] sm:$0xff]
                %3072 = vst [vmem:[%s3040 + $0xf0] sm:$0xff] %v3071
                %v3073 = vld [vmem:[%s3039 + $0x80] sm:$0xff]
                %3074 = vst [vmem:[%s3040 + $0x100] sm:$0xff] %v3073
                %v3075 = vld [vmem:[%s3039 + $0x88] sm:$0xff]
                %3076 = vst [vmem:[%s3040 + $0x110] sm:$0xff] %v3075
                %v3077 = vld [vmem:[%s3039 + $0x90] sm:$0xff]
                %3078 = vst [vmem:[%s3040 + $0x120] sm:$0xff] %v3077
                %v3079 = vld [vmem:[%s3039 + $0x98] sm:$0xff]
                %3080 = vst [vmem:[%s3040 + $0x130] sm:$0xff] %v3079
                %v3081 = vld [vmem:[%s3039 + $0xa0] sm:$0xff]
                %3082 = vst [vmem:[%s3040 + $0x140] sm:$0xff] %v3081
                %v3083 = vld [vmem:[%s3039 + $0xa8] sm:$0xff]
                %3084 = vst [vmem:[%s3040 + $0x150] sm:$0xff] %v3083
                %v3085 = vld [vmem:[%s3039 + $0xb0] sm:$0xff]
                %3086 = vst [vmem:[%s3040 + $0x160] sm:$0xff] %v3085
                %v3087 = vld [vmem:[%s3039 + $0xb8] sm:$0xff]
                %3088 = vst [vmem:[%s3040 + $0x170] sm:$0xff] %v3087
                %v3089 = vld [vmem:[%s3039 + $0xc0] sm:$0xff]
                %3090 = vst [vmem:[%s3040 + $0x180] sm:$0xff] %v3089
                %v3091 = vld [vmem:[%s3039 + $0xc8] sm:$0xff]
                %3092 = vst [vmem:[%s3040 + $0x190] sm:$0xff] %v3091
                %v3093 = vld [vmem:[%s3039 + $0xd0] sm:$0xff]
                %3094 = vst [vmem:[%s3040 + $0x1a0] sm:$0xff] %v3093
                %v3095 = vld [vmem:[%s3039 + $0xd8] sm:$0xff]
                %3096 = vst [vmem:[%s3040 + $0x1b0] sm:$0xff] %v3095
                %v3097 = vld [vmem:[%s3039 + $0xe0] sm:$0xff]
                %3098 = vst [vmem:[%s3040 + $0x1c0] sm:$0xff] %v3097
                %v3099 = vld [vmem:[%s3039 + $0xe8] sm:$0xff]
                %3100 = vst [vmem:[%s3040 + $0x1d0] sm:$0xff] %v3099
                %v3101 = vld [vmem:[%s3039 + $0xf0] sm:$0xff]
                %3102 = vst [vmem:[%s3040 + $0x1e0] sm:$0xff] %v3101
                %v3103 = vld [vmem:[%s3039 + $0xf8] sm:$0xff]
                %3104 = vst [vmem:[%s3040 + $0x1f0] sm:$0xff] %v3103
              $region136: #{mlp_forward.4} parent=130 // loop_footer
                %s3038 = sadd.s32 1, %s3034
              $region137: #{mlp_forward.4} parent=130 // loop_footer_branch
                %3033 = sbr.rel target = $region133
              $region138: #{mlp_forward.4} parent=130 // loop_exit
                _
            $region131: #{mlp_forward.4} parent=122 // pred_fallthru
              _
          $region123: #{mlp_forward.4} parent=118 // pred_fallthru
            _
          %3181 = vnop
        $region119: #{mlp_forward.4} parent=99 // pred_fallthru
          _
        // Predicated region
        $region154: #{mlp_forward.4} parent=99 // pred_check
          %p3182 = pneg %p156
        $region155: #{mlp_forward.4} parent=99 // pred_check_branch
          %3184 = sbr.rel (%p3182) target = $region157
        $region156: #{mlp_forward.4} parent=99 // pred_region
          _
        $region157: #{mlp_forward.4} parent=99 // pred_fallthru
          _
      $region100: #{mlp_forward.4} parent=5 // pred_fallthru
        _
      %p3185 = scmp.le.s32.totalorder 2, %s11
      // Predicated region
      $region158: #{mlp_forward.4} parent=5 // pred_check
        %p3186 = pneg %p3185
      $region159: #{mlp_forward.4} parent=5 // pred_check_branch
        %3188 = sbr.rel (%p3186) target = $region161
      $region160: #{mlp_forward.4} parent=5 // pred_region
        %s3189 = ssub.s32 %s11, 2
        // Predicated region
        $region162: #{mlp_forward.4} parent=160 // pred_check
          %p3190 = pneg %p134
        $region163: #{mlp_forward.4} parent=160 // pred_check_branch
          %3192 = sbr.rel (%p3190) target = $region165
        $region164: #{mlp_forward.4} parent=160 // pred_region
          %s3193 = sand.u32 %s119, 1
          %s3194 = sand.u32 %s119, 1
          %s3195 = smul.addr %s3194, 256
          %s3196 = scalar_lea.vmem [#allocation5], %s3195
        $region165: #{mlp_forward.4} parent=160 // pred_fallthru
          _
        // Predicated region
        $region166: #{mlp_forward.4} parent=160 // pred_check
          %p3197 = pneg %p162
        $region167: #{mlp_forward.4} parent=160 // pred_check_branch
          %3199 = sbr.rel (%p3197) target = $region169
        $region168: #{mlp_forward.4} parent=160 // pred_region
          %p3200 = scmp.lt.s32.totalorder %s22, 1
          %s3201 = scalar_select %p3200, %s22, 1
          %p3202 = scmp.lt.s32.totalorder %s23, 1
          %s3203 = scalar_select %p3202, %s23, 1
          %s3204 = smul.addr %s3201, 2
          %s3205 = sadd.s32 %s3203, %s3204
          %s3206 = scalar_lea.vmem %s4, %s3205
        $region169: #{mlp_forward.4} parent=160 // pred_fallthru
          _
      $region161: #{mlp_forward.4} parent=5 // pred_fallthru
        _
    $region6: #{mlp_forward.4} parent=1 // loop_footer
      %s15 = sadd.s32 1, %s11
    $region7: #{mlp_forward.4} parent=1 // loop_footer_branch
      %10 = sbr.rel target = $region3
    $region8: #{mlp_forward.4} parent=1 // loop_exit
      _

</llo_original>
